<compile_context>
chip_gen: v6e
topology: v6e:2x2x1
jax: 0.10.0
libtpu: 0.0.40
codegen_flags: <defaults>
</compile_context>

<pallas_src>
import functools

import jax
import jax.numpy as jnp
from jax import lax
from jax.experimental import pallas as pl
from jax.experimental.pallas import tpu as pltpu  # noqa: F401  (VMEM scratch / CompilerParams on the scale-up path)

LN_EPS = 1e-6      # UER-style WordEmbedding LayerNorm eps (nn.LayerNorm default is 1e-5)
NT_PAD = 8         # tag dim padded to 8 inside the kernel (7 real tags)
NEG = -1e30        # finite "minus infinity" for padded tags (avoids inf-inf NaNs)


# ----------------------------------------------------------------------------
# Single fused Pallas kernel:
#   LayerNorm -> fused BiLSTM (fwd+bwd) -> tag projection -> CRF loss + Viterbi
# ----------------------------------------------------------------------------
def _lstm_crf_kernel(x_ref, ln_g_ref, ln_b_ref, wih_ref, bih_ref, gmask_ref,
                     whh_ref, wout_ref, bout_ref, tags_oh_ref, start_ref,
                     end_ref, trans_ref, loss_ref, pred_ref):
    """
    x_ref      : (T*B, H)       f32   time-major word+position embeddings
    ln_g/ln_b  : (1, H)         f32   LayerNorm gamma / beta
    wih_ref    : (H, 8*Hd)      bf16  fused input weights, gate-lane layout
                                       [i_f, i_b, f_f, f_b, o_f, o_b, g_f, g_b]
    bih_ref    : (1, 8*Hd)      f32   combined b_ih + b_hh (same layout)
    gmask_ref  : (1, 8*Hd)      f32   1.0 on fwd-direction gate lanes, 0.0 on bwd
    whh_ref    : (2*Hd, 8*Hd)   f32   block-structured recurrent weights
    wout_ref   : (2*Hd, NT_PAD) bf16  tag projection (zero-padded columns)
    bout_ref   : (1, NT_PAD)    f32
    tags_oh_ref: (T, B, NT_PAD) f32   one-hot gold tags
    start/end  : (1, NT_PAD)    f32   CRF start/end scores, NEG on padded lanes
    trans_ref  : (NT_PAD, NT_PAD) f32 CRF transitions, NEG on padded rows/cols
    loss_ref   : (1, 1)  f32          -log_likelihood / B     (output)
    pred_ref   : (B, T) int32         Viterbi-decoded tags    (output)
    """
    T, B, NTP = tags_oh_ref.shape
    Hd2, _ = whh_ref.shape
    Hd = Hd2 // 2

    # ---------------- Stage 1: LayerNorm + fused input projection (one slab) --
    x = x_ref[...]                                                     # (T*B, H)
    mean = jnp.mean(x, axis=-1, keepdims=True)
    var = jnp.mean(jnp.square(x - mean), axis=-1, keepdims=True)
    xn = (x - mean) * lax.rsqrt(var + LN_EPS) * ln_g_ref[...] + ln_b_ref[...]
    xg = jnp.dot(xn.astype(jnp.bfloat16), wih_ref[...],
                 preferred_element_type=jnp.float32) + bih_ref[...]    # (T*B, 8*Hd)

    # Per-step pre-activations: fwd-gate lanes come from time s, bwd-gate lanes
    # from time T-1-s (time reversal is a lane select, no data movement).
    is_fwd_lane = gmask_ref[...] > 0.5                                 # (1, 8*Hd)
    gx = [jnp.where(is_fwd_lane,
                    xg[s * B:(s + 1) * B, :],
                    xg[(T - 1 - s) * B:(T - s) * B, :]) for s in range(T)]

    # ---------------- Stage 2: fused fwd+bwd LSTM recurrence -------------------
    whh = whh_ref[...]
    h = jnp.zeros((B, Hd2), jnp.float32)       # [h_fwd | h_bwd]
    c = jnp.zeros((B, Hd2), jnp.float32)
    hf_hist, hb_hist = [], []
    for s in range(T):
        gates = gx[s] + jnp.dot(h, whh, preferred_element_type=jnp.float32)
        sig = jax.nn.sigmoid(gates[:, 0:6 * Hd])       # i, f, o of both directions
        g = jnp.tanh(gates[:, 6 * Hd:8 * Hd])          # g of both directions
        i = sig[:, 0:2 * Hd]
        f = sig[:, 2 * Hd:4 * Hd]
        o = sig[:, 4 * Hd:6 * Hd]
        c = f * c + i * g
        h = o * jnp.tanh(c)
        hf_hist.append(h[:, 0:Hd])                     # h_fwd at time s
        hb_hist.append(h[:, Hd:Hd2])                   # h_bwd at time T-1-s

    # ---------------- Stage 3: one tag projection for the whole sequence ------
    feats = [jnp.concatenate([hf_hist[t], hb_hist[T - 1 - t]], axis=1)
             for t in range(T)]
    h_slab = jnp.concatenate(feats, axis=0)                            # (T*B, 2*Hd)
    emis = jnp.dot(h_slab.astype(jnp.bfloat16), wout_ref[...],
                   preferred_element_type=jnp.float32) + bout_ref[...]  # (T*B, NTP)

    def emis_t(t):
        return emis[t * B:(t + 1) * B, :]                              # (B, NTP)

    start = start_ref[...]
    end = end_ref[...]
    trans = trans_ref[...]

    # ---------------- Stage 4a: CRF gold-path score (numerator) ----------------
    oh_prev = tags_oh_ref[0]                                           # (B, NTP)
    num = jnp.sum((start + emis_t(0)) * oh_prev, axis=-1, keepdims=True)
    for t in range(1, T):
        oh = tags_oh_ref[t]
        # trans[tag_{t-1}, :] per batch row, via a tiny one-hot matmul
        tr_row = jnp.dot(oh_prev, trans, preferred_element_type=jnp.float32)
        num = (num
               + jnp.sum(tr_row * oh, axis=-1, keepdims=True)
               + jnp.sum(emis_t(t) * oh, axis=-1, keepdims=True))
        oh_prev = oh
    num = num + jnp.sum(end * oh_prev, axis=-1, keepdims=True)         # (B, 1)

    # ---------------- Stage 4b: CRF log-partition (forward algorithm) ----------
    # logsumexp_j(alpha_j + trans_jk) == m + log( exp(alpha - m) @ exp(trans) ):
    # keeps everything 2D with lane reductions + one tiny MXU dot per step.
    et = jnp.exp(trans)                       # padded rows/cols underflow to 0
    alpha = start + emis_t(0)                                          # (B, NTP)
    for t in range(1, T):
        m = jnp.max(alpha, axis=-1, keepdims=True)
        p = jnp.exp(jnp.maximum(alpha - m, -80.0))
        ssum = jnp.maximum(
            jnp.dot(p, et, preferred_element_type=jnp.float32), 1e-30)
        alpha = m + jnp.log(ssum) + emis_t(t)
    v = alpha + end
    m2 = jnp.max(v, axis=-1, keepdims=True)
    logz = m2 + jnp.log(
        jnp.sum(jnp.exp(jnp.maximum(v - m2, -80.0)), axis=-1, keepdims=True))

    # loss = -llh / B  with llh = sum_b (num_b - logz_b)   (reduction='sum')
    loss_ref[...] = jnp.sum(logz - num, axis=0, keepdims=True) * (1.0 / B)

    # ---------------- Stage 4c: Viterbi decode ---------------------------------
    score = start + emis_t(0)
    hist = []
    for t in range(1, T):
        best = score[:, 0:1] + trans[0:1, :]
        bestj = jnp.zeros((B, NTP), jnp.int32)
        for j in range(1, NTP):
            cand = score[:, j:j + 1] + trans[j:j + 1, :]
            better = cand > best
            best = jnp.where(better, cand, best)
            bestj = jnp.where(better, j, bestj)
        hist.append(bestj)
        score = best + emis_t(t)
    final = score + end

    bval = final[:, 0:1]
    btag = jnp.zeros((B, 1), jnp.int32)
    for k in range(1, NTP):
        vk = final[:, k:k + 1]
        better = vk > bval
        bval = jnp.where(better, vk, bval)
        btag = jnp.where(better, k, btag)

    lane = lax.broadcasted_iota(jnp.int32, (B, NTP), 1)
    preds = [None] * T
    preds[T - 1] = btag
    tag = btag
    for t in range(T - 2, -1, -1):
        sel = lane == tag                                   # one-hot of current tag
        tag = jnp.sum(jnp.where(sel, hist[t], 0), axis=-1, keepdims=True)
        preds[t] = tag
    pred_ref[...] = jnp.concatenate(preds, axis=1)          # (B, T)


def run_lstm_crf_kernel(packed, x, tags_oh):
    T, B, _ = tags_oh.shape
    # No grid / BlockSpecs: the whole working set (< ~100 KB) lives as one
    # VMEM-resident block on every generation.  Scale-up path (bigger B/T/H):
    # add a batch-parallel leading grid axis with
    # compiler_params=pltpu.CompilerParams(dimension_semantics=("parallel",...))
    # to use v7x's 2nd TensorCore, and (8,128)-tiled BlockSpecs re-derived
    # against v7x's 64 MiB VMEM (with double-buffering headroom).
    return pl.pallas_call(
        _lstm_crf_kernel,
        out_shape=(jax.ShapeDtypeStruct((1, 1), jnp.float32),
                   jax.ShapeDtypeStruct((B, T), jnp.int32)),
    )(x, packed["ln_g"], packed["ln_b"], packed["wih"], packed["bih"],
      packed["gmask"], packed["whh"], packed["wout"], packed["bout"],
      tags_oh, packed["crf_start"], packed["crf_end"], packed["crf_trans"])


# ----------------------------------------------------------------------------
# One-time weight packing (constant folding outside the per-call forward)
# ----------------------------------------------------------------------------
def pack_params(p):
    H = p["word_emb"].shape[1]
    Hd = H // 2
    NT = p["out_w"].shape[0]

    def gate(w, name):                      # one gate's rows of a (4*Hd, ...) stack
        k = {"i": 0, "f": 1, "g": 2, "o": 3}[name]
        return w[k * Hd:(k + 1) * Hd]

    order = ["i", "f", "o", "g"]            # sigmoid gates first, tanh (g) last
    dirs = ("fwd_", "bwd_")

    # Fused input projection, gate-lane layout [i_f,i_b,f_f,f_b,o_f,o_b,g_f,g_b]
    wih = jnp.concatenate([gate(p[d + "w_ih"], g) for g in order for d in dirs],
                          axis=0).T                                    # (H, 8*Hd)
    bih = jnp.concatenate([gate(p[d + "b_ih"] + p[d + "b_hh"], g)
                           for g in order for d in dirs])[None, :]     # (1, 8*Hd)
    gmask = jnp.concatenate(
        [jnp.full((Hd,), 1.0 if d == "fwd_" else 0.0, jnp.float32)
         for g in order for d in dirs])[None, :]                       # (1, 8*Hd)

    # Block-structured recurrent weights: [h_fwd | h_bwd] @ whh -> all 8 gates.
    zero = jnp.zeros((Hd, Hd), jnp.float32)
    cols = []
    for g in order:
        cols.append(jnp.concatenate([gate(p["fwd_w_hh"], g).T, zero], axis=0))
        cols.append(jnp.concatenate([zero, gate(p["bwd_w_hh"], g).T], axis=0))
    whh = jnp.concatenate(cols, axis=1)                                # (2*Hd, 8*Hd)

    wout = jnp.zeros((H, NT_PAD), jnp.float32).at[:, :NT].set(p["out_w"].T)
    bout = jnp.zeros((1, NT_PAD), jnp.float32).at[0, :NT].set(p["out_b"])

    start = jnp.full((1, NT_PAD), NEG, jnp.float32).at[0, :NT].set(p["crf_start"])
    end = jnp.full((1, NT_PAD), NEG, jnp.float32).at[0, :NT].set(p["crf_end"])
    trans = jnp.full((NT_PAD, NT_PAD), NEG,
                     jnp.float32).at[:NT, :NT].set(p["crf_trans"])

    return {
        "word_emb": p["word_emb"], "pos_emb": p["pos_emb"],
        "ln_g": p["ln_g"][None, :], "ln_b": p["ln_b"][None, :],
        "wih": wih.astype(jnp.bfloat16), "bih": bih, "gmask": gmask,
        "whh": whh,
        "wout": wout.astype(jnp.bfloat16), "bout": bout,
        "crf_start": start, "crf_end": end, "crf_trans": trans,
    }


# ----------------------------------------------------------------------------
# Full forward pass (mirrors lstmCrf.forward with padding_mask=None)
# ----------------------------------------------------------------------------
def lstm_crf_forward(packed, src, label):
    B, T = src.shape
    H = packed["word_emb"].shape[1]
    assert T <= packed["pos_emb"].shape[0], "sequence longer than position table"

    # WordEmbedding: word + position embedding, time-major (dropout = identity).
    x = packed["word_emb"][src.T] + packed["pos_emb"][:T][:, None, :]  # (T, B, H)
    x = x.reshape(T * B, H)
    tags_oh = jax.nn.one_hot(label.T, NT_PAD, dtype=jnp.float32)       # (T, B, 8)

    loss2d, predict = run_lstm_crf_kernel(packed, x, tags_oh)
    loss = loss2d[0, 0]

    label_flat = label.reshape(-1)
    predict_flat = predict.reshape(-1)
    label_mask = (label_flat > 0).astype(jnp.int32)
    predict_flat = predict_flat * label_mask
    correct = jnp.sum((predict_flat == label_flat).astype(jnp.float32))
    return loss, correct, predict_flat, label_flat


# ----------------------------------------------------------------------------
# Deterministic parameter initialization (shapes implied by the module)
# ----------------------------------------------------------------------------
def init_params(key, vocab=50, hidden=32, tagset=7, max_pos=64):
    ks = jax.random.split(key, 10)
    Hd = hidden // 2
    s = 0.1
    p = {
        "word_emb": jax.random.normal(ks[0], (vocab, hidden), jnp.float32) * s,
        "pos_emb": jax.random.normal(ks[1], (max_pos, hidden), jnp.float32) * s,
        "ln_g": jnp.ones((hidden,), jnp.float32),
        "ln_b": jnp.zeros((hidden,), jnp.float32),
        "out_w": jax.random.normal(ks[2], (tagset, hidden), jnp.float32) * s,
        "out_b": jax.random.normal(ks[3], (tagset,), jnp.float32) * s,
        "crf_start": jax.random.normal(ks[4], (tagset,), jnp.float32) * s,
        "crf_end": jax.random.normal(ks[5], (tagset,), jnp.float32) * s,
        "crf_trans": jax.random.normal(ks[6], (tagset, tagset), jnp.float32) * s,
    }
    for d, prefix in enumerate(["fwd_", "bwd_"]):
        kk = jax.random.split(ks[7 + d], 4)
        p[prefix + "w_ih"] = jax.random.normal(kk[0], (4 * Hd, hidden), jnp.float32) * s
        p[prefix + "w_hh"] = jax.random.normal(kk[1], (4 * Hd, Hd), jnp.float32) * s
        p[prefix + "b_ih"] = jax.random.normal(kk[2], (4 * Hd,), jnp.float32) * s
        p[prefix + "b_hh"] = jax.random.normal(kk[3], (4 * Hd,), jnp.float32) * s
    return p


if __name__ == "__main__":
    key = jax.random.PRNGKey(0)
    pk, sk, lk = jax.random.split(key, 3)

    B, T, H, V, NT = 2, 8, 32, 50, 7
    params = init_params(pk, vocab=V, hidden=H, tagset=NT)
    packed = pack_params(params)          # one-time layout packing (inference)

    src = jax.random.randint(sk, (B, T), 1, V, dtype=jnp.int32)
    label = jax.random.randint(lk, (B, T), 0, NT, dtype=jnp.int32)

    fwd = jax.jit(functools.partial(lstm_crf_forward, packed))
    loss, correct, predict, label_flat = fwd(src, label)
    jax.block_until_ready((loss, correct, predict, label_flat))
    print("KERNEL_OK")
</pallas_src>

<mosaic_0001>
module attributes {stable_mosaic.version = 11 : i64} {
  func.func @_lstm_crf_kernel(%arg0: memref<16x32xf32, #tpu.memory_space<vmem>>, %arg1: memref<1x32xf32, #tpu.memory_space<vmem>>, %arg2: memref<1x32xf32, #tpu.memory_space<vmem>>, %arg3: memref<32x128xbf16, #tpu.memory_space<vmem>>, %arg4: memref<1x128xf32, #tpu.memory_space<vmem>>, %arg5: memref<1x128xf32, #tpu.memory_space<vmem>>, %arg6: memref<32x128xf32, #tpu.memory_space<vmem>>, %arg7: memref<32x8xbf16, #tpu.memory_space<vmem>>, %arg8: memref<1x8xf32, #tpu.memory_space<vmem>>, %arg9: memref<8x2x8xf32, #tpu.memory_space<vmem>>, %arg10: memref<1x8xf32, #tpu.memory_space<vmem>>, %arg11: memref<1x8xf32, #tpu.memory_space<vmem>>, %arg12: memref<8x8xf32, #tpu.memory_space<vmem>>, %arg13: memref<1x1xf32, #tpu.memory_space<vmem>>, %arg14: memref<2x8xi32, #tpu.memory_space<vmem>>) attributes {dimension_semantics = [], scalar_prefetch = 0 : i64, scratch_operands = 0 : i64, tpu.core_type = #tpu.core_type<tc>} {
    %c0 = arith.constant 0 : index
    %c0_0 = arith.constant 0 : index
    %0 = vector.load %arg0[%c0, %c0_0] : memref<16x32xf32, #tpu.memory_space<vmem>>, vector<16x32xf32>
    %cst = arith.constant dense<0.000000e+00> : vector<16xf32>
    %1 = vector.multi_reduction <add>, %0, %cst [1] : vector<16x32xf32> to vector<16xf32>
    %2 = vector.shape_cast %1 : vector<16xf32> to vector<16x1xf32>
    %cst_1 = arith.constant 3.200000e+01 : f32
    %3 = vector.broadcast %cst_1 : f32 to vector<16x1xf32>
    %4 = arith.divf %2, %3 : vector<16x1xf32>
    %5 = vector.broadcast %4 : vector<16x1xf32> to vector<16x32xf32>
    %6 = arith.subf %0, %5 : vector<16x32xf32>
    %7 = arith.mulf %6, %6 : vector<16x32xf32>
    %cst_2 = arith.constant dense<0.000000e+00> : vector<16xf32>
    %8 = vector.multi_reduction <add>, %7, %cst_2 [1] : vector<16x32xf32> to vector<16xf32>
    %9 = vector.shape_cast %8 : vector<16xf32> to vector<16x1xf32>
    %cst_3 = arith.constant 3.200000e+01 : f32
    %10 = vector.broadcast %cst_3 : f32 to vector<16x1xf32>
    %11 = arith.divf %9, %10 : vector<16x1xf32>
    %12 = vector.broadcast %4 : vector<16x1xf32> to vector<16x32xf32>
    %13 = arith.subf %0, %12 : vector<16x32xf32>
    %cst_4 = arith.constant 9.99999997E-7 : f32
    %14 = vector.broadcast %cst_4 : f32 to vector<16x1xf32>
    %15 = arith.addf %11, %14 : vector<16x1xf32>
    %16 = math.rsqrt %15 : vector<16x1xf32>
    %17 = vector.broadcast %16 : vector<16x1xf32> to vector<16x32xf32>
    %18 = arith.mulf %13, %17 : vector<16x32xf32>
    %c0_5 = arith.constant 0 : index
    %c0_6 = arith.constant 0 : index
    %19 = vector.load %arg1[%c0_5, %c0_6] : memref<1x32xf32, #tpu.memory_space<vmem>>, vector<1x32xf32>
    %20 = vector.broadcast %19 : vector<1x32xf32> to vector<16x32xf32>
    %21 = arith.mulf %18, %20 : vector<16x32xf32>
    %c0_7 = arith.constant 0 : index
    %c0_8 = arith.constant 0 : index
    %22 = vector.load %arg2[%c0_7, %c0_8] : memref<1x32xf32, #tpu.memory_space<vmem>>, vector<1x32xf32>
    %23 = vector.broadcast %22 : vector<1x32xf32> to vector<16x32xf32>
    %24 = arith.addf %21, %23 : vector<16x32xf32>
    %25 = arith.truncf %24 : vector<16x32xf32> to vector<16x32xbf16>
    %c0_9 = arith.constant 0 : index
    %c0_10 = arith.constant 0 : index
    %26 = vector.load %arg3[%c0_9, %c0_10] : memref<32x128xbf16, #tpu.memory_space<vmem>>, vector<32x128xbf16>
    %cst_11 = arith.constant dense<0.000000e+00> : vector<16x128xf32>
    %27 = tpu.matmul %25, %26, %cst_11 {dimension_numbers = #tpu.dot_dimension_numbers<[1], [0], [0], [1], [0, 0, 1, 1], [], []>} : vector<16x32xbf16>, vector<32x128xbf16>, vector<16x128xf32> -> vector<16x128xf32>
    %c0_12 = arith.constant 0 : index
    %c0_13 = arith.constant 0 : index
    %28 = vector.load %arg4[%c0_12, %c0_13] : memref<1x128xf32, #tpu.memory_space<vmem>>, vector<1x128xf32>
    %29 = vector.broadcast %28 : vector<1x128xf32> to vector<16x128xf32>
    %30 = arith.addf %27, %29 : vector<16x128xf32>
    %c0_14 = arith.constant 0 : index
    %c0_15 = arith.constant 0 : index
    %31 = vector.load %arg5[%c0_14, %c0_15] : memref<1x128xf32, #tpu.memory_space<vmem>>, vector<1x128xf32>
    %cst_16 = arith.constant 5.000000e-01 : f32
    %32 = vector.broadcast %cst_16 : f32 to vector<1x128xf32>
    %33 = arith.cmpf ogt, %31, %32 : vector<1x128xf32>
    %34 = vector.extract_strided_slice %30 {offsets = [0, 0], sizes = [2, 128], strides = [1, 1]} : vector<16x128xf32> to vector<2x128xf32>
    %35 = vector.extract_strided_slice %30 {offsets = [14, 0], sizes = [2, 128], strides = [1, 1]} : vector<16x128xf32> to vector<2x128xf32>
    %36 = vector.shape_cast %33 : vector<1x128xi1> to vector<1x128xi1>
    %37 = vector.broadcast %36 : vector<1x128xi1> to vector<2x128xi1>
    %38 = arith.select %37, %34, %35 : vector<2x128xi1>, vector<2x128xf32>
    %39 = vector.extract_strided_slice %30 {offsets = [2, 0], sizes = [2, 128], strides = [1, 1]} : vector<16x128xf32> to vector<2x128xf32>
    %40 = vector.extract_strided_slice %30 {offsets = [12, 0], sizes = [2, 128], strides = [1, 1]} : vector<16x128xf32> to vector<2x128xf32>
    %41 = vector.shape_cast %33 : vector<1x128xi1> to vector<1x128xi1>
    %42 = vector.broadcast %41 : vector<1x128xi1> to vector<2x128xi1>
    %43 = arith.select %42, %39, %40 : vector<2x128xi1>, vector<2x128xf32>
    %44 = vector.extract_strided_slice %30 {offsets = [4, 0], sizes = [2, 128], strides = [1, 1]} : vector<16x128xf32> to vector<2x128xf32>
    %45 = vector.extract_strided_slice %30 {offsets = [10, 0], sizes = [2, 128], strides = [1, 1]} : vector<16x128xf32> to vector<2x128xf32>
    %46 = vector.shape_cast %33 : vector<1x128xi1> to vector<1x128xi1>
    %47 = vector.broadcast %46 : vector<1x128xi1> to vector<2x128xi1>
    %48 = arith.select %47, %44, %45 : vector<2x128xi1>, vector<2x128xf32>
    %49 = vector.extract_strided_slice %30 {offsets = [6, 0], sizes = [2, 128], strides = [1, 1]} : vector<16x128xf32> to vector<2x128xf32>
    %50 = vector.extract_strided_slice %30 {offsets = [8, 0], sizes = [2, 128], strides = [1, 1]} : vector<16x128xf32> to vector<2x128xf32>
    %51 = vector.shape_cast %33 : vector<1x128xi1> to vector<1x128xi1>
    %52 = vector.broadcast %51 : vector<1x128xi1> to vector<2x128xi1>
    %53 = arith.select %52, %49, %50 : vector<2x128xi1>, vector<2x128xf32>
    %54 = vector.extract_strided_slice %30 {offsets = [8, 0], sizes = [2, 128], strides = [1, 1]} : vector<16x128xf32> to vector<2x128xf32>
    %55 = vector.extract_strided_slice %30 {offsets = [6, 0], sizes = [2, 128], strides = [1, 1]} : vector<16x128xf32> to vector<2x128xf32>
    %56 = vector.shape_cast %33 : vector<1x128xi1> to vector<1x128xi1>
    %57 = vector.broadcast %56 : vector<1x128xi1> to vector<2x128xi1>
    %58 = arith.select %57, %54, %55 : vector<2x128xi1>, vector<2x128xf32>
    %59 = vector.extract_strided_slice %30 {offsets = [10, 0], sizes = [2, 128], strides = [1, 1]} : vector<16x128xf32> to vector<2x128xf32>
    %60 = vector.extract_strided_slice %30 {offsets = [4, 0], sizes = [2, 128], strides = [1, 1]} : vector<16x128xf32> to vector<2x128xf32>
    %61 = vector.shape_cast %33 : vector<1x128xi1> to vector<1x128xi1>
    %62 = vector.broadcast %61 : vector<1x128xi1> to vector<2x128xi1>
    %63 = arith.select %62, %59, %60 : vector<2x128xi1>, vector<2x128xf32>
    %64 = vector.extract_strided_slice %30 {offsets = [12, 0], sizes = [2, 128], strides = [1, 1]} : vector<16x128xf32> to vector<2x128xf32>
    %65 = vector.extract_strided_slice %30 {offsets = [2, 0], sizes = [2, 128], strides = [1, 1]} : vector<16x128xf32> to vector<2x128xf32>
    %66 = vector.shape_cast %33 : vector<1x128xi1> to vector<1x128xi1>
    %67 = vector.broadcast %66 : vector<1x128xi1> to vector<2x128xi1>
    %68 = arith.select %67, %64, %65 : vector<2x128xi1>, vector<2x128xf32>
    %69 = vector.extract_strided_slice %30 {offsets = [14, 0], sizes = [2, 128], strides = [1, 1]} : vector<16x128xf32> to vector<2x128xf32>
    %70 = vector.extract_strided_slice %30 {offsets = [0, 0], sizes = [2, 128], strides = [1, 1]} : vector<16x128xf32> to vector<2x128xf32>
    %71 = vector.shape_cast %33 : vector<1x128xi1> to vector<1x128xi1>
    %72 = vector.broadcast %71 : vector<1x128xi1> to vector<2x128xi1>
    %73 = arith.select %72, %69, %70 : vector<2x128xi1>, vector<2x128xf32>
    %c0_17 = arith.constant 0 : index
    %c0_18 = arith.constant 0 : index
    %74 = vector.load %arg6[%c0_17, %c0_18] : memref<32x128xf32, #tpu.memory_space<vmem>>, vector<32x128xf32>
    %cst_19 = arith.constant 0.000000e+00 : f32
    %75 = vector.broadcast %cst_19 : f32 to vector<2x32xf32>
    %cst_20 = arith.constant 0.000000e+00 : f32
    %76 = vector.broadcast %cst_20 : f32 to vector<2x32xf32>
    %cst_21 = arith.constant dense<0.000000e+00> : vector<2x128xf32>
    %77 = tpu.matmul %75, %74, %cst_21 {dimension_numbers = #tpu.dot_dimension_numbers<[1], [0], [0], [1], [0, 0, 1, 1], [], []>} : vector<2x32xf32>, vector<32x128xf32>, vector<2x128xf32> -> vector<2x128xf32>
    %78 = arith.addf %38, %77 : vector<2x128xf32>
    %79 = vector.extract_strided_slice %78 {offsets = [0, 0], sizes = [2, 96], strides = [1, 1]} : vector<2x128xf32> to vector<2x96xf32>
    %80 = arith.negf %79 : vector<2x96xf32>
    %81 = math.exp %80 : vector<2x96xf32>
    %cst_22 = arith.constant 1.000000e+00 : f32
    %82 = vector.broadcast %cst_22 : f32 to vector<2x96xf32>
    %83 = arith.addf %82, %81 : vector<2x96xf32>
    %84 = arith.divf %82, %83 : vector<2x96xf32>
    %85 = vector.extract_strided_slice %78 {offsets = [0, 96], sizes = [2, 32], strides = [1, 1]} : vector<2x128xf32> to vector<2x32xf32>
    %86 = math.tanh %85 : vector<2x32xf32>
    %87 = vector.extract_strided_slice %84 {offsets = [0, 0], sizes = [2, 32], strides = [1, 1]} : vector<2x96xf32> to vector<2x32xf32>
    %88 = vector.extract_strided_slice %84 {offsets = [0, 32], sizes = [2, 32], strides = [1, 1]} : vector<2x96xf32> to vector<2x32xf32>
    %89 = vector.extract_strided_slice %84 {offsets = [0, 64], sizes = [2, 32], strides = [1, 1]} : vector<2x96xf32> to vector<2x32xf32>
    %90 = arith.mulf %88, %76 : vector<2x32xf32>
    %91 = arith.mulf %87, %86 : vector<2x32xf32>
    %92 = arith.addf %90, %91 : vector<2x32xf32>
    %93 = math.tanh %92 : vector<2x32xf32>
    %94 = arith.mulf %89, %93 : vector<2x32xf32>
    %95 = vector.extract_strided_slice %94 {offsets = [0, 0], sizes = [2, 16], strides = [1, 1]} : vector<2x32xf32> to vector<2x16xf32>
    %96 = vector.extract_strided_slice %94 {offsets = [0, 16], sizes = [2, 16], strides = [1, 1]} : vector<2x32xf32> to vector<2x16xf32>
    %cst_23 = arith.constant dense<0.000000e+00> : vector<2x128xf32>
    %97 = tpu.matmul %94, %74, %cst_23 {dimension_numbers = #tpu.dot_dimension_numbers<[1], [0], [0], [1], [0, 0, 1, 1], [], []>} : vector<2x32xf32>, vector<32x128xf32>, vector<2x128xf32> -> vector<2x128xf32>
    %98 = arith.addf %43, %97 : vector<2x128xf32>
    %99 = vector.extract_strided_slice %98 {offsets = [0, 0], sizes = [2, 96], strides = [1, 1]} : vector<2x128xf32> to vector<2x96xf32>
    %100 = arith.negf %99 : vector<2x96xf32>
    %101 = math.exp %100 : vector<2x96xf32>
    %cst_24 = arith.constant 1.000000e+00 : f32
    %102 = vector.broadcast %cst_24 : f32 to vector<2x96xf32>
    %103 = arith.addf %102, %101 : vector<2x96xf32>
    %104 = arith.divf %102, %103 : vector<2x96xf32>
    %105 = vector.extract_strided_slice %98 {offsets = [0, 96], sizes = [2, 32], strides = [1, 1]} : vector<2x128xf32> to vector<2x32xf32>
    %106 = math.tanh %105 : vector<2x32xf32>
    %107 = vector.extract_strided_slice %104 {offsets = [0, 0], sizes = [2, 32], strides = [1, 1]} : vector<2x96xf32> to vector<2x32xf32>
    %108 = vector.extract_strided_slice %104 {offsets = [0, 32], sizes = [2, 32], strides = [1, 1]} : vector<2x96xf32> to vector<2x32xf32>
    %109 = vector.extract_strided_slice %104 {offsets = [0, 64], sizes = [2, 32], strides = [1, 1]} : vector<2x96xf32> to vector<2x32xf32>
    %110 = arith.mulf %108, %92 : vector<2x32xf32>
    %111 = arith.mulf %107, %106 : vector<2x32xf32>
    %112 = arith.addf %110, %111 : vector<2x32xf32>
    %113 = math.tanh %112 : vector<2x32xf32>
    %114 = arith.mulf %109, %113 : vector<2x32xf32>
    %115 = vector.extract_strided_slice %114 {offsets = [0, 0], sizes = [2, 16], strides = [1, 1]} : vector<2x32xf32> to vector<2x16xf32>
    %116 = vector.extract_strided_slice %114 {offsets = [0, 16], sizes = [2, 16], strides = [1, 1]} : vector<2x32xf32> to vector<2x16xf32>
    %cst_25 = arith.constant dense<0.000000e+00> : vector<2x128xf32>
    %117 = tpu.matmul %114, %74, %cst_25 {dimension_numbers = #tpu.dot_dimension_numbers<[1], [0], [0], [1], [0, 0, 1, 1], [], []>} : vector<2x32xf32>, vector<32x128xf32>, vector<2x128xf32> -> vector<2x128xf32>
    %118 = arith.addf %48, %117 : vector<2x128xf32>
    %119 = vector.extract_strided_slice %118 {offsets = [0, 0], sizes = [2, 96], strides = [1, 1]} : vector<2x128xf32> to vector<2x96xf32>
    %120 = arith.negf %119 : vector<2x96xf32>
    %121 = math.exp %120 : vector<2x96xf32>
    %cst_26 = arith.constant 1.000000e+00 : f32
    %122 = vector.broadcast %cst_26 : f32 to vector<2x96xf32>
    %123 = arith.addf %122, %121 : vector<2x96xf32>
    %124 = arith.divf %122, %123 : vector<2x96xf32>
    %125 = vector.extract_strided_slice %118 {offsets = [0, 96], sizes = [2, 32], strides = [1, 1]} : vector<2x128xf32> to vector<2x32xf32>
    %126 = math.tanh %125 : vector<2x32xf32>
    %127 = vector.extract_strided_slice %124 {offsets = [0, 0], sizes = [2, 32], strides = [1, 1]} : vector<2x96xf32> to vector<2x32xf32>
    %128 = vector.extract_strided_slice %124 {offsets = [0, 32], sizes = [2, 32], strides = [1, 1]} : vector<2x96xf32> to vector<2x32xf32>
    %129 = vector.extract_strided_slice %124 {offsets = [0, 64], sizes = [2, 32], strides = [1, 1]} : vector<2x96xf32> to vector<2x32xf32>
    %130 = arith.mulf %128, %112 : vector<2x32xf32>
    %131 = arith.mulf %127, %126 : vector<2x32xf32>
    %132 = arith.addf %130, %131 : vector<2x32xf32>
    %133 = math.tanh %132 : vector<2x32xf32>
    %134 = arith.mulf %129, %133 : vector<2x32xf32>
    %135 = vector.extract_strided_slice %134 {offsets = [0, 0], sizes = [2, 16], strides = [1, 1]} : vector<2x32xf32> to vector<2x16xf32>
    %136 = vector.extract_strided_slice %134 {offsets = [0, 16], sizes = [2, 16], strides = [1, 1]} : vector<2x32xf32> to vector<2x16xf32>
    %cst_27 = arith.constant dense<0.000000e+00> : vector<2x128xf32>
    %137 = tpu.matmul %134, %74, %cst_27 {dimension_numbers = #tpu.dot_dimension_numbers<[1], [0], [0], [1], [0, 0, 1, 1], [], []>} : vector<2x32xf32>, vector<32x128xf32>, vector<2x128xf32> -> vector<2x128xf32>
    %138 = arith.addf %53, %137 : vector<2x128xf32>
    %139 = vector.extract_strided_slice %138 {offsets = [0, 0], sizes = [2, 96], strides = [1, 1]} : vector<2x128xf32> to vector<2x96xf32>
    %140 = arith.negf %139 : vector<2x96xf32>
    %141 = math.exp %140 : vector<2x96xf32>
    %cst_28 = arith.constant 1.000000e+00 : f32
    %142 = vector.broadcast %cst_28 : f32 to vector<2x96xf32>
    %143 = arith.addf %142, %141 : vector<2x96xf32>
    %144 = arith.divf %142, %143 : vector<2x96xf32>
    %145 = vector.extract_strided_slice %138 {offsets = [0, 96], sizes = [2, 32], strides = [1, 1]} : vector<2x128xf32> to vector<2x32xf32>
    %146 = math.tanh %145 : vector<2x32xf32>
    %147 = vector.extract_strided_slice %144 {offsets = [0, 0], sizes = [2, 32], strides = [1, 1]} : vector<2x96xf32> to vector<2x32xf32>
    %148 = vector.extract_strided_slice %144 {offsets = [0, 32], sizes = [2, 32], strides = [1, 1]} : vector<2x96xf32> to vector<2x32xf32>
    %149 = vector.extract_strided_slice %144 {offsets = [0, 64], sizes = [2, 32], strides = [1, 1]} : vector<2x96xf32> to vector<2x32xf32>
    %150 = arith.mulf %148, %132 : vector<2x32xf32>
    %151 = arith.mulf %147, %146 : vector<2x32xf32>
    %152 = arith.addf %150, %151 : vector<2x32xf32>
    %153 = math.tanh %152 : vector<2x32xf32>
    %154 = arith.mulf %149, %153 : vector<2x32xf32>
    %155 = vector.extract_strided_slice %154 {offsets = [0, 0], sizes = [2, 16], strides = [1, 1]} : vector<2x32xf32> to vector<2x16xf32>
    %156 = vector.extract_strided_slice %154 {offsets = [0, 16], sizes = [2, 16], strides = [1, 1]} : vector<2x32xf32> to vector<2x16xf32>
    %cst_29 = arith.constant dense<0.000000e+00> : vector<2x128xf32>
    %157 = tpu.matmul %154, %74, %cst_29 {dimension_numbers = #tpu.dot_dimension_numbers<[1], [0], [0], [1], [0, 0, 1, 1], [], []>} : vector<2x32xf32>, vector<32x128xf32>, vector<2x128xf32> -> vector<2x128xf32>
    %158 = arith.addf %58, %157 : vector<2x128xf32>
    %159 = vector.extract_strided_slice %158 {offsets = [0, 0], sizes = [2, 96], strides = [1, 1]} : vector<2x128xf32> to vector<2x96xf32>
    %160 = arith.negf %159 : vector<2x96xf32>
    %161 = math.exp %160 : vector<2x96xf32>
    %cst_30 = arith.constant 1.000000e+00 : f32
    %162 = vector.broadcast %cst_30 : f32 to vector<2x96xf32>
    %163 = arith.addf %162, %161 : vector<2x96xf32>
    %164 = arith.divf %162, %163 : vector<2x96xf32>
    %165 = vector.extract_strided_slice %158 {offsets = [0, 96], sizes = [2, 32], strides = [1, 1]} : vector<2x128xf32> to vector<2x32xf32>
    %166 = math.tanh %165 : vector<2x32xf32>
    %167 = vector.extract_strided_slice %164 {offsets = [0, 0], sizes = [2, 32], strides = [1, 1]} : vector<2x96xf32> to vector<2x32xf32>
    %168 = vector.extract_strided_slice %164 {offsets = [0, 32], sizes = [2, 32], strides = [1, 1]} : vector<2x96xf32> to vector<2x32xf32>
    %169 = vector.extract_strided_slice %164 {offsets = [0, 64], sizes = [2, 32], strides = [1, 1]} : vector<2x96xf32> to vector<2x32xf32>
    %170 = arith.mulf %168, %152 : vector<2x32xf32>
    %171 = arith.mulf %167, %166 : vector<2x32xf32>
    %172 = arith.addf %170, %171 : vector<2x32xf32>
    %173 = math.tanh %172 : vector<2x32xf32>
    %174 = arith.mulf %169, %173 : vector<2x32xf32>
    %175 = vector.extract_strided_slice %174 {offsets = [0, 0], sizes = [2, 16], strides = [1, 1]} : vector<2x32xf32> to vector<2x16xf32>
    %176 = vector.extract_strided_slice %174 {offsets = [0, 16], sizes = [2, 16], strides = [1, 1]} : vector<2x32xf32> to vector<2x16xf32>
    %cst_31 = arith.constant dense<0.000000e+00> : vector<2x128xf32>
    %177 = tpu.matmul %174, %74, %cst_31 {dimension_numbers = #tpu.dot_dimension_numbers<[1], [0], [0], [1], [0, 0, 1, 1], [], []>} : vector<2x32xf32>, vector<32x128xf32>, vector<2x128xf32> -> vector<2x128xf32>
    %178 = arith.addf %63, %177 : vector<2x128xf32>
    %179 = vector.extract_strided_slice %178 {offsets = [0, 0], sizes = [2, 96], strides = [1, 1]} : vector<2x128xf32> to vector<2x96xf32>
    %180 = arith.negf %179 : vector<2x96xf32>
    %181 = math.exp %180 : vector<2x96xf32>
    %cst_32 = arith.constant 1.000000e+00 : f32
    %182 = vector.broadcast %cst_32 : f32 to vector<2x96xf32>
    %183 = arith.addf %182, %181 : vector<2x96xf32>
    %184 = arith.divf %182, %183 : vector<2x96xf32>
    %185 = vector.extract_strided_slice %178 {offsets = [0, 96], sizes = [2, 32], strides = [1, 1]} : vector<2x128xf32> to vector<2x32xf32>
    %186 = math.tanh %185 : vector<2x32xf32>
    %187 = vector.extract_strided_slice %184 {offsets = [0, 0], sizes = [2, 32], strides = [1, 1]} : vector<2x96xf32> to vector<2x32xf32>
    %188 = vector.extract_strided_slice %184 {offsets = [0, 32], sizes = [2, 32], strides = [1, 1]} : vector<2x96xf32> to vector<2x32xf32>
    %189 = vector.extract_strided_slice %184 {offsets = [0, 64], sizes = [2, 32], strides = [1, 1]} : vector<2x96xf32> to vector<2x32xf32>
    %190 = arith.mulf %188, %172 : vector<2x32xf32>
    %191 = arith.mulf %187, %186 : vector<2x32xf32>
    %192 = arith.addf %190, %191 : vector<2x32xf32>
    %193 = math.tanh %192 : vector<2x32xf32>
    %194 = arith.mulf %189, %193 : vector<2x32xf32>
    %195 = vector.extract_strided_slice %194 {offsets = [0, 0], sizes = [2, 16], strides = [1, 1]} : vector<2x32xf32> to vector<2x16xf32>
    %196 = vector.extract_strided_slice %194 {offsets = [0, 16], sizes = [2, 16], strides = [1, 1]} : vector<2x32xf32> to vector<2x16xf32>
    %cst_33 = arith.constant dense<0.000000e+00> : vector<2x128xf32>
    %197 = tpu.matmul %194, %74, %cst_33 {dimension_numbers = #tpu.dot_dimension_numbers<[1], [0], [0], [1], [0, 0, 1, 1], [], []>} : vector<2x32xf32>, vector<32x128xf32>, vector<2x128xf32> -> vector<2x128xf32>
    %198 = arith.addf %68, %197 : vector<2x128xf32>
    %199 = vector.extract_strided_slice %198 {offsets = [0, 0], sizes = [2, 96], strides = [1, 1]} : vector<2x128xf32> to vector<2x96xf32>
    %200 = arith.negf %199 : vector<2x96xf32>
    %201 = math.exp %200 : vector<2x96xf32>
    %cst_34 = arith.constant 1.000000e+00 : f32
    %202 = vector.broadcast %cst_34 : f32 to vector<2x96xf32>
    %203 = arith.addf %202, %201 : vector<2x96xf32>
    %204 = arith.divf %202, %203 : vector<2x96xf32>
    %205 = vector.extract_strided_slice %198 {offsets = [0, 96], sizes = [2, 32], strides = [1, 1]} : vector<2x128xf32> to vector<2x32xf32>
    %206 = math.tanh %205 : vector<2x32xf32>
    %207 = vector.extract_strided_slice %204 {offsets = [0, 0], sizes = [2, 32], strides = [1, 1]} : vector<2x96xf32> to vector<2x32xf32>
    %208 = vector.extract_strided_slice %204 {offsets = [0, 32], sizes = [2, 32], strides = [1, 1]} : vector<2x96xf32> to vector<2x32xf32>
    %209 = vector.extract_strided_slice %204 {offsets = [0, 64], sizes = [2, 32], strides = [1, 1]} : vector<2x96xf32> to vector<2x32xf32>
    %210 = arith.mulf %208, %192 : vector<2x32xf32>
    %211 = arith.mulf %207, %206 : vector<2x32xf32>
    %212 = arith.addf %210, %211 : vector<2x32xf32>
    %213 = math.tanh %212 : vector<2x32xf32>
    %214 = arith.mulf %209, %213 : vector<2x32xf32>
    %215 = vector.extract_strided_slice %214 {offsets = [0, 0], sizes = [2, 16], strides = [1, 1]} : vector<2x32xf32> to vector<2x16xf32>
    %216 = vector.extract_strided_slice %214 {offsets = [0, 16], sizes = [2, 16], strides = [1, 1]} : vector<2x32xf32> to vector<2x16xf32>
    %cst_35 = arith.constant dense<0.000000e+00> : vector<2x128xf32>
    %217 = tpu.matmul %214, %74, %cst_35 {dimension_numbers = #tpu.dot_dimension_numbers<[1], [0], [0], [1], [0, 0, 1, 1], [], []>} : vector<2x32xf32>, vector<32x128xf32>, vector<2x128xf32> -> vector<2x128xf32>
    %218 = arith.addf %73, %217 : vector<2x128xf32>
    %219 = vector.extract_strided_slice %218 {offsets = [0, 0], sizes = [2, 96], strides = [1, 1]} : vector<2x128xf32> to vector<2x96xf32>
    %220 = arith.negf %219 : vector<2x96xf32>
    %221 = math.exp %220 : vector<2x96xf32>
    %cst_36 = arith.constant 1.000000e+00 : f32
    %222 = vector.broadcast %cst_36 : f32 to vector<2x96xf32>
    %223 = arith.addf %222, %221 : vector<2x96xf32>
    %224 = arith.divf %222, %223 : vector<2x96xf32>
    %225 = vector.extract_strided_slice %218 {offsets = [0, 96], sizes = [2, 32], strides = [1, 1]} : vector<2x128xf32> to vector<2x32xf32>
    %226 = math.tanh %225 : vector<2x32xf32>
    %227 = vector.extract_strided_slice %224 {offsets = [0, 0], sizes = [2, 32], strides = [1, 1]} : vector<2x96xf32> to vector<2x32xf32>
    %228 = vector.extract_strided_slice %224 {offsets = [0, 32], sizes = [2, 32], strides = [1, 1]} : vector<2x96xf32> to vector<2x32xf32>
    %229 = vector.extract_strided_slice %224 {offsets = [0, 64], sizes = [2, 32], strides = [1, 1]} : vector<2x96xf32> to vector<2x32xf32>
    %230 = arith.mulf %228, %212 : vector<2x32xf32>
    %231 = arith.mulf %227, %226 : vector<2x32xf32>
    %232 = arith.addf %230, %231 : vector<2x32xf32>
    %233 = math.tanh %232 : vector<2x32xf32>
    %234 = arith.mulf %229, %233 : vector<2x32xf32>
    %235 = vector.extract_strided_slice %234 {offsets = [0, 0], sizes = [2, 16], strides = [1, 1]} : vector<2x32xf32> to vector<2x16xf32>
    %236 = vector.extract_strided_slice %234 {offsets = [0, 16], sizes = [2, 16], strides = [1, 1]} : vector<2x32xf32> to vector<2x16xf32>
    %237 = tpu.concatenate %95, %236 in 1 : vector<2x16xf32>, vector<2x16xf32> -> vector<2x32xf32>
    %238 = tpu.concatenate %115, %216 in 1 : vector<2x16xf32>, vector<2x16xf32> -> vector<2x32xf32>
    %239 = tpu.concatenate %135, %196 in 1 : vector<2x16xf32>, vector<2x16xf32> -> vector<2x32xf32>
    %240 = tpu.concatenate %155, %176 in 1 : vector<2x16xf32>, vector<2x16xf32> -> vector<2x32xf32>
    %241 = tpu.concatenate %175, %156 in 1 : vector<2x16xf32>, vector<2x16xf32> -> vector<2x32xf32>
    %242 = tpu.concatenate %195, %136 in 1 : vector<2x16xf32>, vector<2x16xf32> -> vector<2x32xf32>
    %243 = tpu.concatenate %215, %116 in 1 : vector<2x16xf32>, vector<2x16xf32> -> vector<2x32xf32>
    %244 = tpu.concatenate %235, %96 in 1 : vector<2x16xf32>, vector<2x16xf32> -> vector<2x32xf32>
    %245 = tpu.concatenate %237, %238, %239, %240, %241, %242, %243, %244 in 0 : vector<2x32xf32>, vector<2x32xf32>, vector<2x32xf32>, vector<2x32xf32>, vector<2x32xf32>, vector<2x32xf32>, vector<2x32xf32>, vector<2x32xf32> -> vector<16x32xf32>
    %246 = arith.truncf %245 : vector<16x32xf32> to vector<16x32xbf16>
    %c0_37 = arith.constant 0 : index
    %c0_38 = arith.constant 0 : index
    %247 = vector.load %arg7[%c0_37, %c0_38] : memref<32x8xbf16, #tpu.memory_space<vmem>>, vector<32x8xbf16>
    %cst_39 = arith.constant dense<0.000000e+00> : vector<16x8xf32>
    %248 = tpu.matmul %246, %247, %cst_39 {dimension_numbers = #tpu.dot_dimension_numbers<[1], [0], [0], [1], [0, 0, 1, 1], [], []>} : vector<16x32xbf16>, vector<32x8xbf16>, vector<16x8xf32> -> vector<16x8xf32>
    %c0_40 = arith.constant 0 : index
    %c0_41 = arith.constant 0 : index
    %249 = vector.load %arg8[%c0_40, %c0_41] : memref<1x8xf32, #tpu.memory_space<vmem>>, vector<1x8xf32>
    %250 = vector.broadcast %249 : vector<1x8xf32> to vector<16x8xf32>
    %251 = arith.addf %248, %250 : vector<16x8xf32>
    %c0_42 = arith.constant 0 : index
    %c0_43 = arith.constant 0 : index
    %252 = vector.load %arg10[%c0_42, %c0_43] : memref<1x8xf32, #tpu.memory_space<vmem>>, vector<1x8xf32>
    %c0_44 = arith.constant 0 : index
    %c0_45 = arith.constant 0 : index
    %253 = vector.load %arg11[%c0_44, %c0_45] : memref<1x8xf32, #tpu.memory_space<vmem>>, vector<1x8xf32>
    %c0_46 = arith.constant 0 : index
    %c0_47 = arith.constant 0 : index
    %254 = vector.load %arg12[%c0_46, %c0_47] : memref<8x8xf32, #tpu.memory_space<vmem>>, vector<8x8xf32>
    %c0_48 = arith.constant 0 : index
    %c0_49 = arith.constant 0 : index
    %c0_50 = arith.constant 0 : index
    %255 = vector.load %arg9[%c0_48, %c0_49, %c0_50] : memref<8x2x8xf32, #tpu.memory_space<vmem>>, vector<1x2x8xf32>
    %256 = vector.shape_cast %255 : vector<1x2x8xf32> to vector<2x8xf32>
    %257 = vector.extract_strided_slice %251 {offsets = [0, 0], sizes = [2, 8], strides = [1, 1]} : vector<16x8xf32> to vector<2x8xf32>
    %258 = vector.broadcast %252 : vector<1x8xf32> to vector<2x8xf32>
    %259 = arith.addf %258, %257 : vector<2x8xf32>
    %260 = arith.mulf %259, %256 : vector<2x8xf32>
    %cst_51 = arith.constant dense<0.000000e+00> : vector<2xf32>
    %261 = vector.multi_reduction <add>, %260, %cst_51 [1] : vector<2x8xf32> to vector<2xf32>
    %262 = vector.shape_cast %261 : vector<2xf32> to vector<2x1xf32>
    %c1 = arith.constant 1 : index
    %c0_52 = arith.constant 0 : index
    %c0_53 = arith.constant 0 : index
    %263 = vector.load %arg9[%c1, %c0_52, %c0_53] : memref<8x2x8xf32, #tpu.memory_space<vmem>>, vector<1x2x8xf32>
    %264 = vector.shape_cast %263 : vector<1x2x8xf32> to vector<2x8xf32>
    %cst_54 = arith.constant dense<0.000000e+00> : vector<2x8xf32>
    %265 = tpu.matmul %256, %254, %cst_54 {dimension_numbers = #tpu.dot_dimension_numbers<[1], [0], [0], [1], [0, 0, 1, 1], [], []>} : vector<2x8xf32>, vector<8x8xf32>, vector<2x8xf32> -> vector<2x8xf32>
    %266 = arith.mulf %265, %264 : vector<2x8xf32>
    %cst_55 = arith.constant dense<0.000000e+00> : vector<2xf32>
    %267 = vector.multi_reduction <add>, %266, %cst_55 [1] : vector<2x8xf32> to vector<2xf32>
    %268 = vector.shape_cast %267 : vector<2xf32> to vector<2x1xf32>
    %269 = arith.addf %262, %268 : vector<2x1xf32>
    %270 = vector.extract_strided_slice %251 {offsets = [2, 0], sizes = [2, 8], strides = [1, 1]} : vector<16x8xf32> to vector<2x8xf32>
    %271 = arith.mulf %270, %264 : vector<2x8xf32>
    %cst_56 = arith.constant dense<0.000000e+00> : vector<2xf32>
    %272 = vector.multi_reduction <add>, %271, %cst_56 [1] : vector<2x8xf32> to vector<2xf32>
    %273 = vector.shape_cast %272 : vector<2xf32> to vector<2x1xf32>
    %274 = arith.addf %269, %273 : vector<2x1xf32>
    %c2 = arith.constant 2 : index
    %c0_57 = arith.constant 0 : index
    %c0_58 = arith.constant 0 : index
    %275 = vector.load %arg9[%c2, %c0_57, %c0_58] : memref<8x2x8xf32, #tpu.memory_space<vmem>>, vector<1x2x8xf32>
    %276 = vector.shape_cast %275 : vector<1x2x8xf32> to vector<2x8xf32>
    %cst_59 = arith.constant dense<0.000000e+00> : vector<2x8xf32>
    %277 = tpu.matmul %264, %254, %cst_59 {dimension_numbers = #tpu.dot_dimension_numbers<[1], [0], [0], [1], [0, 0, 1, 1], [], []>} : vector<2x8xf32>, vector<8x8xf32>, vector<2x8xf32> -> vector<2x8xf32>
    %278 = arith.mulf %277, %276 : vector<2x8xf32>
    %cst_60 = arith.constant dense<0.000000e+00> : vector<2xf32>
    %279 = vector.multi_reduction <add>, %278, %cst_60 [1] : vector<2x8xf32> to vector<2xf32>
    %280 = vector.shape_cast %279 : vector<2xf32> to vector<2x1xf32>
    %281 = arith.addf %274, %280 : vector<2x1xf32>
    %282 = vector.extract_strided_slice %251 {offsets = [4, 0], sizes = [2, 8], strides = [1, 1]} : vector<16x8xf32> to vector<2x8xf32>
    %283 = arith.mulf %282, %276 : vector<2x8xf32>
    %cst_61 = arith.constant dense<0.000000e+00> : vector<2xf32>
    %284 = vector.multi_reduction <add>, %283, %cst_61 [1] : vector<2x8xf32> to vector<2xf32>
    %285 = vector.shape_cast %284 : vector<2xf32> to vector<2x1xf32>
    %286 = arith.addf %281, %285 : vector<2x1xf32>
    %c3 = arith.constant 3 : index
    %c0_62 = arith.constant 0 : index
    %c0_63 = arith.constant 0 : index
    %287 = vector.load %arg9[%c3, %c0_62, %c0_63] : memref<8x2x8xf32, #tpu.memory_space<vmem>>, vector<1x2x8xf32>
    %288 = vector.shape_cast %287 : vector<1x2x8xf32> to vector<2x8xf32>
    %cst_64 = arith.constant dense<0.000000e+00> : vector<2x8xf32>
    %289 = tpu.matmul %276, %254, %cst_64 {dimension_numbers = #tpu.dot_dimension_numbers<[1], [0], [0], [1], [0, 0, 1, 1], [], []>} : vector<2x8xf32>, vector<8x8xf32>, vector<2x8xf32> -> vector<2x8xf32>
    %290 = arith.mulf %289, %288 : vector<2x8xf32>
    %cst_65 = arith.constant dense<0.000000e+00> : vector<2xf32>
    %291 = vector.multi_reduction <add>, %290, %cst_65 [1] : vector<2x8xf32> to vector<2xf32>
    %292 = vector.shape_cast %291 : vector<2xf32> to vector<2x1xf32>
    %293 = arith.addf %286, %292 : vector<2x1xf32>
    %294 = vector.extract_strided_slice %251 {offsets = [6, 0], sizes = [2, 8], strides = [1, 1]} : vector<16x8xf32> to vector<2x8xf32>
    %295 = arith.mulf %294, %288 : vector<2x8xf32>
    %cst_66 = arith.constant dense<0.000000e+00> : vector<2xf32>
    %296 = vector.multi_reduction <add>, %295, %cst_66 [1] : vector<2x8xf32> to vector<2xf32>
    %297 = vector.shape_cast %296 : vector<2xf32> to vector<2x1xf32>
    %298 = arith.addf %293, %297 : vector<2x1xf32>
    %c4 = arith.constant 4 : index
    %c0_67 = arith.constant 0 : index
    %c0_68 = arith.constant 0 : index
    %299 = vector.load %arg9[%c4, %c0_67, %c0_68] : memref<8x2x8xf32, #tpu.memory_space<vmem>>, vector<1x2x8xf32>
    %300 = vector.shape_cast %299 : vector<1x2x8xf32> to vector<2x8xf32>
    %cst_69 = arith.constant dense<0.000000e+00> : vector<2x8xf32>
    %301 = tpu.matmul %288, %254, %cst_69 {dimension_numbers = #tpu.dot_dimension_numbers<[1], [0], [0], [1], [0, 0, 1, 1], [], []>} : vector<2x8xf32>, vector<8x8xf32>, vector<2x8xf32> -> vector<2x8xf32>
    %302 = arith.mulf %301, %300 : vector<2x8xf32>
    %cst_70 = arith.constant dense<0.000000e+00> : vector<2xf32>
    %303 = vector.multi_reduction <add>, %302, %cst_70 [1] : vector<2x8xf32> to vector<2xf32>
    %304 = vector.shape_cast %303 : vector<2xf32> to vector<2x1xf32>
    %305 = arith.addf %298, %304 : vector<2x1xf32>
    %306 = vector.extract_strided_slice %251 {offsets = [8, 0], sizes = [2, 8], strides = [1, 1]} : vector<16x8xf32> to vector<2x8xf32>
    %307 = arith.mulf %306, %300 : vector<2x8xf32>
    %cst_71 = arith.constant dense<0.000000e+00> : vector<2xf32>
    %308 = vector.multi_reduction <add>, %307, %cst_71 [1] : vector<2x8xf32> to vector<2xf32>
    %309 = vector.shape_cast %308 : vector<2xf32> to vector<2x1xf32>
    %310 = arith.addf %305, %309 : vector<2x1xf32>
    %c5 = arith.constant 5 : index
    %c0_72 = arith.constant 0 : index
    %c0_73 = arith.constant 0 : index
    %311 = vector.load %arg9[%c5, %c0_72, %c0_73] : memref<8x2x8xf32, #tpu.memory_space<vmem>>, vector<1x2x8xf32>
    %312 = vector.shape_cast %311 : vector<1x2x8xf32> to vector<2x8xf32>
    %cst_74 = arith.constant dense<0.000000e+00> : vector<2x8xf32>
    %313 = tpu.matmul %300, %254, %cst_74 {dimension_numbers = #tpu.dot_dimension_numbers<[1], [0], [0], [1], [0, 0, 1, 1], [], []>} : vector<2x8xf32>, vector<8x8xf32>, vector<2x8xf32> -> vector<2x8xf32>
    %314 = arith.mulf %313, %312 : vector<2x8xf32>
    %cst_75 = arith.constant dense<0.000000e+00> : vector<2xf32>
    %315 = vector.multi_reduction <add>, %314, %cst_75 [1] : vector<2x8xf32> to vector<2xf32>
    %316 = vector.shape_cast %315 : vector<2xf32> to vector<2x1xf32>
    %317 = arith.addf %310, %316 : vector<2x1xf32>
    %318 = vector.extract_strided_slice %251 {offsets = [10, 0], sizes = [2, 8], strides = [1, 1]} : vector<16x8xf32> to vector<2x8xf32>
    %319 = arith.mulf %318, %312 : vector<2x8xf32>
    %cst_76 = arith.constant dense<0.000000e+00> : vector<2xf32>
    %320 = vector.multi_reduction <add>, %319, %cst_76 [1] : vector<2x8xf32> to vector<2xf32>
    %321 = vector.shape_cast %320 : vector<2xf32> to vector<2x1xf32>
    %322 = arith.addf %317, %321 : vector<2x1xf32>
    %c6 = arith.constant 6 : index
    %c0_77 = arith.constant 0 : index
    %c0_78 = arith.constant 0 : index
    %323 = vector.load %arg9[%c6, %c0_77, %c0_78] : memref<8x2x8xf32, #tpu.memory_space<vmem>>, vector<1x2x8xf32>
    %324 = vector.shape_cast %323 : vector<1x2x8xf32> to vector<2x8xf32>
    %cst_79 = arith.constant dense<0.000000e+00> : vector<2x8xf32>
    %325 = tpu.matmul %312, %254, %cst_79 {dimension_numbers = #tpu.dot_dimension_numbers<[1], [0], [0], [1], [0, 0, 1, 1], [], []>} : vector<2x8xf32>, vector<8x8xf32>, vector<2x8xf32> -> vector<2x8xf32>
    %326 = arith.mulf %325, %324 : vector<2x8xf32>
    %cst_80 = arith.constant dense<0.000000e+00> : vector<2xf32>
    %327 = vector.multi_reduction <add>, %326, %cst_80 [1] : vector<2x8xf32> to vector<2xf32>
    %328 = vector.shape_cast %327 : vector<2xf32> to vector<2x1xf32>
    %329 = arith.addf %322, %328 : vector<2x1xf32>
    %330 = vector.extract_strided_slice %251 {offsets = [12, 0], sizes = [2, 8], strides = [1, 1]} : vector<16x8xf32> to vector<2x8xf32>
    %331 = arith.mulf %330, %324 : vector<2x8xf32>
    %cst_81 = arith.constant dense<0.000000e+00> : vector<2xf32>
    %332 = vector.multi_reduction <add>, %331, %cst_81 [1] : vector<2x8xf32> to vector<2xf32>
    %333 = vector.shape_cast %332 : vector<2xf32> to vector<2x1xf32>
    %334 = arith.addf %329, %333 : vector<2x1xf32>
    %c7 = arith.constant 7 : index
    %c0_82 = arith.constant 0 : index
    %c0_83 = arith.constant 0 : index
    %335 = vector.load %arg9[%c7, %c0_82, %c0_83] : memref<8x2x8xf32, #tpu.memory_space<vmem>>, vector<1x2x8xf32>
    %336 = vector.shape_cast %335 : vector<1x2x8xf32> to vector<2x8xf32>
    %cst_84 = arith.constant dense<0.000000e+00> : vector<2x8xf32>
    %337 = tpu.matmul %324, %254, %cst_84 {dimension_numbers = #tpu.dot_dimension_numbers<[1], [0], [0], [1], [0, 0, 1, 1], [], []>} : vector<2x8xf32>, vector<8x8xf32>, vector<2x8xf32> -> vector<2x8xf32>
    %338 = arith.mulf %337, %336 : vector<2x8xf32>
    %cst_85 = arith.constant dense<0.000000e+00> : vector<2xf32>
    %339 = vector.multi_reduction <add>, %338, %cst_85 [1] : vector<2x8xf32> to vector<2xf32>
    %340 = vector.shape_cast %339 : vector<2xf32> to vector<2x1xf32>
    %341 = arith.addf %334, %340 : vector<2x1xf32>
    %342 = vector.extract_strided_slice %251 {offsets = [14, 0], sizes = [2, 8], strides = [1, 1]} : vector<16x8xf32> to vector<2x8xf32>
    %343 = arith.mulf %342, %336 : vector<2x8xf32>
    %cst_86 = arith.constant dense<0.000000e+00> : vector<2xf32>
    %344 = vector.multi_reduction <add>, %343, %cst_86 [1] : vector<2x8xf32> to vector<2xf32>
    %345 = vector.shape_cast %344 : vector<2xf32> to vector<2x1xf32>
    %346 = arith.addf %341, %345 : vector<2x1xf32>
    %347 = vector.broadcast %253 : vector<1x8xf32> to vector<2x8xf32>
    %348 = arith.mulf %347, %336 : vector<2x8xf32>
    %cst_87 = arith.constant dense<0.000000e+00> : vector<2xf32>
    %349 = vector.multi_reduction <add>, %348, %cst_87 [1] : vector<2x8xf32> to vector<2xf32>
    %350 = vector.shape_cast %349 : vector<2xf32> to vector<2x1xf32>
    %351 = arith.addf %346, %350 : vector<2x1xf32>
    %352 = math.exp %254 : vector<8x8xf32>
    %353 = vector.extract_strided_slice %251 {offsets = [0, 0], sizes = [2, 8], strides = [1, 1]} : vector<16x8xf32> to vector<2x8xf32>
    %354 = vector.broadcast %252 : vector<1x8xf32> to vector<2x8xf32>
    %355 = arith.addf %354, %353 : vector<2x8xf32>
    %cst_88 = arith.constant dense<0xFF800000> : vector<2xf32>
    %356 = vector.multi_reduction <maximumf>, %355, %cst_88 [1] : vector<2x8xf32> to vector<2xf32>
    %357 = vector.shape_cast %356 : vector<2xf32> to vector<2x1xf32>
    %358 = vector.broadcast %357 : vector<2x1xf32> to vector<2x8xf32>
    %359 = arith.subf %355, %358 : vector<2x8xf32>
    %cst_89 = arith.constant -8.000000e+01 : f32
    %360 = vector.broadcast %cst_89 : f32 to vector<2x8xf32>
    %361 = arith.maximumf %359, %360 : vector<2x8xf32>
    %362 = math.exp %361 : vector<2x8xf32>
    %cst_90 = arith.constant dense<0.000000e+00> : vector<2x8xf32>
    %363 = tpu.matmul %362, %352, %cst_90 {dimension_numbers = #tpu.dot_dimension_numbers<[1], [0], [0], [1], [0, 0, 1, 1], [], []>} : vector<2x8xf32>, vector<8x8xf32>, vector<2x8xf32> -> vector<2x8xf32>
    %cst_91 = arith.constant 1.000000e-30 : f32
    %364 = vector.broadcast %cst_91 : f32 to vector<2x8xf32>
    %365 = arith.maximumf %363, %364 : vector<2x8xf32>
    %366 = math.log %365 : vector<2x8xf32>
    %367 = vector.broadcast %357 : vector<2x1xf32> to vector<2x8xf32>
    %368 = arith.addf %367, %366 : vector<2x8xf32>
    %369 = vector.extract_strided_slice %251 {offsets = [2, 0], sizes = [2, 8], strides = [1, 1]} : vector<16x8xf32> to vector<2x8xf32>
    %370 = arith.addf %368, %369 : vector<2x8xf32>
    %cst_92 = arith.constant dense<0xFF800000> : vector<2xf32>
    %371 = vector.multi_reduction <maximumf>, %370, %cst_92 [1] : vector<2x8xf32> to vector<2xf32>
    %372 = vector.shape_cast %371 : vector<2xf32> to vector<2x1xf32>
    %373 = vector.broadcast %372 : vector<2x1xf32> to vector<2x8xf32>
    %374 = arith.subf %370, %373 : vector<2x8xf32>
    %cst_93 = arith.constant -8.000000e+01 : f32
    %375 = vector.broadcast %cst_93 : f32 to vector<2x8xf32>
    %376 = arith.maximumf %374, %375 : vector<2x8xf32>
    %377 = math.exp %376 : vector<2x8xf32>
    %cst_94 = arith.constant dense<0.000000e+00> : vector<2x8xf32>
    %378 = tpu.matmul %377, %352, %cst_94 {dimension_numbers = #tpu.dot_dimension_numbers<[1], [0], [0], [1], [0, 0, 1, 1], [], []>} : vector<2x8xf32>, vector<8x8xf32>, vector<2x8xf32> -> vector<2x8xf32>
    %cst_95 = arith.constant 1.000000e-30 : f32
    %379 = vector.broadcast %cst_95 : f32 to vector<2x8xf32>
    %380 = arith.maximumf %378, %379 : vector<2x8xf32>
    %381 = math.log %380 : vector<2x8xf32>
    %382 = vector.broadcast %372 : vector<2x1xf32> to vector<2x8xf32>
    %383 = arith.addf %382, %381 : vector<2x8xf32>
    %384 = vector.extract_strided_slice %251 {offsets = [4, 0], sizes = [2, 8], strides = [1, 1]} : vector<16x8xf32> to vector<2x8xf32>
    %385 = arith.addf %383, %384 : vector<2x8xf32>
    %cst_96 = arith.constant dense<0xFF800000> : vector<2xf32>
    %386 = vector.multi_reduction <maximumf>, %385, %cst_96 [1] : vector<2x8xf32> to vector<2xf32>
    %387 = vector.shape_cast %386 : vector<2xf32> to vector<2x1xf32>
    %388 = vector.broadcast %387 : vector<2x1xf32> to vector<2x8xf32>
    %389 = arith.subf %385, %388 : vector<2x8xf32>
    %cst_97 = arith.constant -8.000000e+01 : f32
    %390 = vector.broadcast %cst_97 : f32 to vector<2x8xf32>
    %391 = arith.maximumf %389, %390 : vector<2x8xf32>
    %392 = math.exp %391 : vector<2x8xf32>
    %cst_98 = arith.constant dense<0.000000e+00> : vector<2x8xf32>
    %393 = tpu.matmul %392, %352, %cst_98 {dimension_numbers = #tpu.dot_dimension_numbers<[1], [0], [0], [1], [0, 0, 1, 1], [], []>} : vector<2x8xf32>, vector<8x8xf32>, vector<2x8xf32> -> vector<2x8xf32>
    %cst_99 = arith.constant 1.000000e-30 : f32
    %394 = vector.broadcast %cst_99 : f32 to vector<2x8xf32>
    %395 = arith.maximumf %393, %394 : vector<2x8xf32>
    %396 = math.log %395 : vector<2x8xf32>
    %397 = vector.broadcast %387 : vector<2x1xf32> to vector<2x8xf32>
    %398 = arith.addf %397, %396 : vector<2x8xf32>
    %399 = vector.extract_strided_slice %251 {offsets = [6, 0], sizes = [2, 8], strides = [1, 1]} : vector<16x8xf32> to vector<2x8xf32>
    %400 = arith.addf %398, %399 : vector<2x8xf32>
    %cst_100 = arith.constant dense<0xFF800000> : vector<2xf32>
    %401 = vector.multi_reduction <maximumf>, %400, %cst_100 [1] : vector<2x8xf32> to vector<2xf32>
    %402 = vector.shape_cast %401 : vector<2xf32> to vector<2x1xf32>
    %403 = vector.broadcast %402 : vector<2x1xf32> to vector<2x8xf32>
    %404 = arith.subf %400, %403 : vector<2x8xf32>
    %cst_101 = arith.constant -8.000000e+01 : f32
    %405 = vector.broadcast %cst_101 : f32 to vector<2x8xf32>
    %406 = arith.maximumf %404, %405 : vector<2x8xf32>
    %407 = math.exp %406 : vector<2x8xf32>
    %cst_102 = arith.constant dense<0.000000e+00> : vector<2x8xf32>
    %408 = tpu.matmul %407, %352, %cst_102 {dimension_numbers = #tpu.dot_dimension_numbers<[1], [0], [0], [1], [0, 0, 1, 1], [], []>} : vector<2x8xf32>, vector<8x8xf32>, vector<2x8xf32> -> vector<2x8xf32>
    %cst_103 = arith.constant 1.000000e-30 : f32
    %409 = vector.broadcast %cst_103 : f32 to vector<2x8xf32>
    %410 = arith.maximumf %408, %409 : vector<2x8xf32>
    %411 = math.log %410 : vector<2x8xf32>
    %412 = vector.broadcast %402 : vector<2x1xf32> to vector<2x8xf32>
    %413 = arith.addf %412, %411 : vector<2x8xf32>
    %414 = vector.extract_strided_slice %251 {offsets = [8, 0], sizes = [2, 8], strides = [1, 1]} : vector<16x8xf32> to vector<2x8xf32>
    %415 = arith.addf %413, %414 : vector<2x8xf32>
    %cst_104 = arith.constant dense<0xFF800000> : vector<2xf32>
    %416 = vector.multi_reduction <maximumf>, %415, %cst_104 [1] : vector<2x8xf32> to vector<2xf32>
    %417 = vector.shape_cast %416 : vector<2xf32> to vector<2x1xf32>
    %418 = vector.broadcast %417 : vector<2x1xf32> to vector<2x8xf32>
    %419 = arith.subf %415, %418 : vector<2x8xf32>
    %cst_105 = arith.constant -8.000000e+01 : f32
    %420 = vector.broadcast %cst_105 : f32 to vector<2x8xf32>
    %421 = arith.maximumf %419, %420 : vector<2x8xf32>
    %422 = math.exp %421 : vector<2x8xf32>
    %cst_106 = arith.constant dense<0.000000e+00> : vector<2x8xf32>
    %423 = tpu.matmul %422, %352, %cst_106 {dimension_numbers = #tpu.dot_dimension_numbers<[1], [0], [0], [1], [0, 0, 1, 1], [], []>} : vector<2x8xf32>, vector<8x8xf32>, vector<2x8xf32> -> vector<2x8xf32>
    %cst_107 = arith.constant 1.000000e-30 : f32
    %424 = vector.broadcast %cst_107 : f32 to vector<2x8xf32>
    %425 = arith.maximumf %423, %424 : vector<2x8xf32>
    %426 = math.log %425 : vector<2x8xf32>
    %427 = vector.broadcast %417 : vector<2x1xf32> to vector<2x8xf32>
    %428 = arith.addf %427, %426 : vector<2x8xf32>
    %429 = vector.extract_strided_slice %251 {offsets = [10, 0], sizes = [2, 8], strides = [1, 1]} : vector<16x8xf32> to vector<2x8xf32>
    %430 = arith.addf %428, %429 : vector<2x8xf32>
    %cst_108 = arith.constant dense<0xFF800000> : vector<2xf32>
    %431 = vector.multi_reduction <maximumf>, %430, %cst_108 [1] : vector<2x8xf32> to vector<2xf32>
    %432 = vector.shape_cast %431 : vector<2xf32> to vector<2x1xf32>
    %433 = vector.broadcast %432 : vector<2x1xf32> to vector<2x8xf32>
    %434 = arith.subf %430, %433 : vector<2x8xf32>
    %cst_109 = arith.constant -8.000000e+01 : f32
    %435 = vector.broadcast %cst_109 : f32 to vector<2x8xf32>
    %436 = arith.maximumf %434, %435 : vector<2x8xf32>
    %437 = math.exp %436 : vector<2x8xf32>
    %cst_110 = arith.constant dense<0.000000e+00> : vector<2x8xf32>
    %438 = tpu.matmul %437, %352, %cst_110 {dimension_numbers = #tpu.dot_dimension_numbers<[1], [0], [0], [1], [0, 0, 1, 1], [], []>} : vector<2x8xf32>, vector<8x8xf32>, vector<2x8xf32> -> vector<2x8xf32>
    %cst_111 = arith.constant 1.000000e-30 : f32
    %439 = vector.broadcast %cst_111 : f32 to vector<2x8xf32>
    %440 = arith.maximumf %438, %439 : vector<2x8xf32>
    %441 = math.log %440 : vector<2x8xf32>
    %442 = vector.broadcast %432 : vector<2x1xf32> to vector<2x8xf32>
    %443 = arith.addf %442, %441 : vector<2x8xf32>
    %444 = vector.extract_strided_slice %251 {offsets = [12, 0], sizes = [2, 8], strides = [1, 1]} : vector<16x8xf32> to vector<2x8xf32>
    %445 = arith.addf %443, %444 : vector<2x8xf32>
    %cst_112 = arith.constant dense<0xFF800000> : vector<2xf32>
    %446 = vector.multi_reduction <maximumf>, %445, %cst_112 [1] : vector<2x8xf32> to vector<2xf32>
    %447 = vector.shape_cast %446 : vector<2xf32> to vector<2x1xf32>
    %448 = vector.broadcast %447 : vector<2x1xf32> to vector<2x8xf32>
    %449 = arith.subf %445, %448 : vector<2x8xf32>
    %cst_113 = arith.constant -8.000000e+01 : f32
    %450 = vector.broadcast %cst_113 : f32 to vector<2x8xf32>
    %451 = arith.maximumf %449, %450 : vector<2x8xf32>
    %452 = math.exp %451 : vector<2x8xf32>
    %cst_114 = arith.constant dense<0.000000e+00> : vector<2x8xf32>
    %453 = tpu.matmul %452, %352, %cst_114 {dimension_numbers = #tpu.dot_dimension_numbers<[1], [0], [0], [1], [0, 0, 1, 1], [], []>} : vector<2x8xf32>, vector<8x8xf32>, vector<2x8xf32> -> vector<2x8xf32>
    %cst_115 = arith.constant 1.000000e-30 : f32
    %454 = vector.broadcast %cst_115 : f32 to vector<2x8xf32>
    %455 = arith.maximumf %453, %454 : vector<2x8xf32>
    %456 = math.log %455 : vector<2x8xf32>
    %457 = vector.broadcast %447 : vector<2x1xf32> to vector<2x8xf32>
    %458 = arith.addf %457, %456 : vector<2x8xf32>
    %459 = vector.extract_strided_slice %251 {offsets = [14, 0], sizes = [2, 8], strides = [1, 1]} : vector<16x8xf32> to vector<2x8xf32>
    %460 = arith.addf %458, %459 : vector<2x8xf32>
    %461 = vector.broadcast %253 : vector<1x8xf32> to vector<2x8xf32>
    %462 = arith.addf %460, %461 : vector<2x8xf32>
    %cst_116 = arith.constant dense<0xFF800000> : vector<2xf32>
    %463 = vector.multi_reduction <maximumf>, %462, %cst_116 [1] : vector<2x8xf32> to vector<2xf32>
    %464 = vector.shape_cast %463 : vector<2xf32> to vector<2x1xf32>
    %465 = vector.broadcast %464 : vector<2x1xf32> to vector<2x8xf32>
    %466 = arith.subf %462, %465 : vector<2x8xf32>
    %cst_117 = arith.constant -8.000000e+01 : f32
    %467 = vector.broadcast %cst_117 : f32 to vector<2x8xf32>
    %468 = arith.maximumf %466, %467 : vector<2x8xf32>
    %469 = math.exp %468 : vector<2x8xf32>
    %cst_118 = arith.constant dense<0.000000e+00> : vector<2xf32>
    %470 = vector.multi_reduction <add>, %469, %cst_118 [1] : vector<2x8xf32> to vector<2xf32>
    %471 = vector.shape_cast %470 : vector<2xf32> to vector<2x1xf32>
    %472 = math.log %471 : vector<2x1xf32>
    %473 = arith.addf %464, %472 : vector<2x1xf32>
    %474 = arith.subf %473, %351 : vector<2x1xf32>
    %cst_119 = arith.constant dense<0.000000e+00> : vector<1xf32>
    %475 = vector.multi_reduction <add>, %474, %cst_119 [0] : vector<2x1xf32> to vector<1xf32>
    %476 = vector.shape_cast %475 : vector<1xf32> to vector<1x1xf32>
    %cst_120 = arith.constant 5.000000e-01 : f32
    %477 = vector.broadcast %cst_120 : f32 to vector<1x1xf32>
    %478 = arith.mulf %476, %477 : vector<1x1xf32>
    %c0_121 = arith.constant 0 : index
    %c0_122 = arith.constant 0 : index
    %479 = vector.load %arg13[%c0_121, %c0_122] : memref<1x1xf32, #tpu.memory_space<vmem>>, vector<1x1xf32>
    tpu.vector_store %arg13[%c0_121, %c0_122], %478 {strides = array<i32>} : memref<1x1xf32, #tpu.memory_space<vmem>>, vector<1x1xf32>,
    %480 = vector.extract_strided_slice %251 {offsets = [0, 0], sizes = [2, 8], strides = [1, 1]} : vector<16x8xf32> to vector<2x8xf32>
    %481 = vector.broadcast %252 : vector<1x8xf32> to vector<2x8xf32>
    %482 = arith.addf %481, %480 : vector<2x8xf32>
    %483 = vector.extract_strided_slice %482 {offsets = [0, 0], sizes = [2, 1], strides = [1, 1]} : vector<2x8xf32> to vector<2x1xf32>
    %484 = vector.extract_strided_slice %254 {offsets = [0, 0], sizes = [1, 8], strides = [1, 1]} : vector<8x8xf32> to vector<1x8xf32>
    %485 = vector.broadcast %483 : vector<2x1xf32> to vector<2x8xf32>
    %486 = vector.broadcast %484 : vector<1x8xf32> to vector<2x8xf32>
    %487 = arith.addf %485, %486 : vector<2x8xf32>
    %c0_i32 = arith.constant 0 : i32
    %488 = vector.broadcast %c0_i32 : i32 to vector<2x8xi32>
    %489 = vector.extract_strided_slice %482 {offsets = [0, 1], sizes = [2, 1], strides = [1, 1]} : vector<2x8xf32> to vector<2x1xf32>
    %490 = vector.extract_strided_slice %254 {offsets = [1, 0], sizes = [1, 8], strides = [1, 1]} : vector<8x8xf32> to vector<1x8xf32>
    %491 = vector.broadcast %489 : vector<2x1xf32> to vector<2x8xf32>
    %492 = vector.broadcast %490 : vector<1x8xf32> to vector<2x8xf32>
    %493 = arith.addf %491, %492 : vector<2x8xf32>
    %494 = arith.cmpf ogt, %493, %487 : vector<2x8xf32>
    %495 = arith.select %494, %493, %487 : vector<2x8xi1>, vector<2x8xf32>
    %c1_i32 = arith.constant 1 : i32
    %496 = vector.broadcast %c1_i32 : i32 to vector<2x8xi32>
    %497 = arith.select %494, %496, %488 : vector<2x8xi1>, vector<2x8xi32>
    %498 = vector.extract_strided_slice %482 {offsets = [0, 2], sizes = [2, 1], strides = [1, 1]} : vector<2x8xf32> to vector<2x1xf32>
    %499 = vector.extract_strided_slice %254 {offsets = [2, 0], sizes = [1, 8], strides = [1, 1]} : vector<8x8xf32> to vector<1x8xf32>
    %500 = vector.broadcast %498 : vector<2x1xf32> to vector<2x8xf32>
    %501 = vector.broadcast %499 : vector<1x8xf32> to vector<2x8xf32>
    %502 = arith.addf %500, %501 : vector<2x8xf32>
    %503 = arith.cmpf ogt, %502, %495 : vector<2x8xf32>
    %504 = arith.select %503, %502, %495 : vector<2x8xi1>, vector<2x8xf32>
    %c2_i32 = arith.constant 2 : i32
    %505 = vector.broadcast %c2_i32 : i32 to vector<2x8xi32>
    %506 = arith.select %503, %505, %497 : vector<2x8xi1>, vector<2x8xi32>
    %507 = vector.extract_strided_slice %482 {offsets = [0, 3], sizes = [2, 1], strides = [1, 1]} : vector<2x8xf32> to vector<2x1xf32>
    %508 = vector.extract_strided_slice %254 {offsets = [3, 0], sizes = [1, 8], strides = [1, 1]} : vector<8x8xf32> to vector<1x8xf32>
    %509 = vector.broadcast %507 : vector<2x1xf32> to vector<2x8xf32>
    %510 = vector.broadcast %508 : vector<1x8xf32> to vector<2x8xf32>
    %511 = arith.addf %509, %510 : vector<2x8xf32>
    %512 = arith.cmpf ogt, %511, %504 : vector<2x8xf32>
    %513 = arith.select %512, %511, %504 : vector<2x8xi1>, vector<2x8xf32>
    %c3_i32 = arith.constant 3 : i32
    %514 = vector.broadcast %c3_i32 : i32 to vector<2x8xi32>
    %515 = arith.select %512, %514, %506 : vector<2x8xi1>, vector<2x8xi32>
    %516 = vector.extract_strided_slice %482 {offsets = [0, 4], sizes = [2, 1], strides = [1, 1]} : vector<2x8xf32> to vector<2x1xf32>
    %517 = vector.extract_strided_slice %254 {offsets = [4, 0], sizes = [1, 8], strides = [1, 1]} : vector<8x8xf32> to vector<1x8xf32>
    %518 = vector.broadcast %516 : vector<2x1xf32> to vector<2x8xf32>
    %519 = vector.broadcast %517 : vector<1x8xf32> to vector<2x8xf32>
    %520 = arith.addf %518, %519 : vector<2x8xf32>
    %521 = arith.cmpf ogt, %520, %513 : vector<2x8xf32>
    %522 = arith.select %521, %520, %513 : vector<2x8xi1>, vector<2x8xf32>
    %c4_i32 = arith.constant 4 : i32
    %523 = vector.broadcast %c4_i32 : i32 to vector<2x8xi32>
    %524 = arith.select %521, %523, %515 : vector<2x8xi1>, vector<2x8xi32>
    %525 = vector.extract_strided_slice %482 {offsets = [0, 5], sizes = [2, 1], strides = [1, 1]} : vector<2x8xf32> to vector<2x1xf32>
    %526 = vector.extract_strided_slice %254 {offsets = [5, 0], sizes = [1, 8], strides = [1, 1]} : vector<8x8xf32> to vector<1x8xf32>
    %527 = vector.broadcast %525 : vector<2x1xf32> to vector<2x8xf32>
    %528 = vector.broadcast %526 : vector<1x8xf32> to vector<2x8xf32>
    %529 = arith.addf %527, %528 : vector<2x8xf32>
    %530 = arith.cmpf ogt, %529, %522 : vector<2x8xf32>
    %531 = arith.select %530, %529, %522 : vector<2x8xi1>, vector<2x8xf32>
    %c5_i32 = arith.constant 5 : i32
    %532 = vector.broadcast %c5_i32 : i32 to vector<2x8xi32>
    %533 = arith.select %530, %532, %524 : vector<2x8xi1>, vector<2x8xi32>
    %534 = vector.extract_strided_slice %482 {offsets = [0, 6], sizes = [2, 1], strides = [1, 1]} : vector<2x8xf32> to vector<2x1xf32>
    %535 = vector.extract_strided_slice %254 {offsets = [6, 0], sizes = [1, 8], strides = [1, 1]} : vector<8x8xf32> to vector<1x8xf32>
    %536 = vector.broadcast %534 : vector<2x1xf32> to vector<2x8xf32>
    %537 = vector.broadcast %535 : vector<1x8xf32> to vector<2x8xf32>
    %538 = arith.addf %536, %537 : vector<2x8xf32>
    %539 = arith.cmpf ogt, %538, %531 : vector<2x8xf32>
    %540 = arith.select %539, %538, %531 : vector<2x8xi1>, vector<2x8xf32>
    %c6_i32 = arith.constant 6 : i32
    %541 = vector.broadcast %c6_i32 : i32 to vector<2x8xi32>
    %542 = arith.select %539, %541, %533 : vector<2x8xi1>, vector<2x8xi32>
    %543 = vector.extract_strided_slice %482 {offsets = [0, 7], sizes = [2, 1], strides = [1, 1]} : vector<2x8xf32> to vector<2x1xf32>
    %544 = vector.extract_strided_slice %254 {offsets = [7, 0], sizes = [1, 8], strides = [1, 1]} : vector<8x8xf32> to vector<1x8xf32>
    %545 = vector.broadcast %543 : vector<2x1xf32> to vector<2x8xf32>
    %546 = vector.broadcast %544 : vector<1x8xf32> to vector<2x8xf32>
    %547 = arith.addf %545, %546 : vector<2x8xf32>
    %548 = arith.cmpf ogt, %547, %540 : vector<2x8xf32>
    %549 = arith.select %548, %547, %540 : vector<2x8xi1>, vector<2x8xf32>
    %c7_i32 = arith.constant 7 : i32
    %550 = vector.broadcast %c7_i32 : i32 to vector<2x8xi32>
    %551 = arith.select %548, %550, %542 : vector<2x8xi1>, vector<2x8xi32>
    %552 = vector.extract_strided_slice %251 {offsets = [2, 0], sizes = [2, 8], strides = [1, 1]} : vector<16x8xf32> to vector<2x8xf32>
    %553 = arith.addf %549, %552 : vector<2x8xf32>
    %554 = vector.extract_strided_slice %553 {offsets = [0, 0], sizes = [2, 1], strides = [1, 1]} : vector<2x8xf32> to vector<2x1xf32>
    %555 = vector.extract_strided_slice %254 {offsets = [0, 0], sizes = [1, 8], strides = [1, 1]} : vector<8x8xf32> to vector<1x8xf32>
    %556 = vector.broadcast %554 : vector<2x1xf32> to vector<2x8xf32>
    %557 = vector.broadcast %555 : vector<1x8xf32> to vector<2x8xf32>
    %558 = arith.addf %556, %557 : vector<2x8xf32>
    %c0_i32_123 = arith.constant 0 : i32
    %559 = vector.broadcast %c0_i32_123 : i32 to vector<2x8xi32>
    %560 = vector.extract_strided_slice %553 {offsets = [0, 1], sizes = [2, 1], strides = [1, 1]} : vector<2x8xf32> to vector<2x1xf32>
    %561 = vector.extract_strided_slice %254 {offsets = [1, 0], sizes = [1, 8], strides = [1, 1]} : vector<8x8xf32> to vector<1x8xf32>
    %562 = vector.broadcast %560 : vector<2x1xf32> to vector<2x8xf32>
    %563 = vector.broadcast %561 : vector<1x8xf32> to vector<2x8xf32>
    %564 = arith.addf %562, %563 : vector<2x8xf32>
    %565 = arith.cmpf ogt, %564, %558 : vector<2x8xf32>
    %566 = arith.select %565, %564, %558 : vector<2x8xi1>, vector<2x8xf32>
    %c1_i32_124 = arith.constant 1 : i32
    %567 = vector.broadcast %c1_i32_124 : i32 to vector<2x8xi32>
    %568 = arith.select %565, %567, %559 : vector<2x8xi1>, vector<2x8xi32>
    %569 = vector.extract_strided_slice %553 {offsets = [0, 2], sizes = [2, 1], strides = [1, 1]} : vector<2x8xf32> to vector<2x1xf32>
    %570 = vector.extract_strided_slice %254 {offsets = [2, 0], sizes = [1, 8], strides = [1, 1]} : vector<8x8xf32> to vector<1x8xf32>
    %571 = vector.broadcast %569 : vector<2x1xf32> to vector<2x8xf32>
    %572 = vector.broadcast %570 : vector<1x8xf32> to vector<2x8xf32>
    %573 = arith.addf %571, %572 : vector<2x8xf32>
    %574 = arith.cmpf ogt, %573, %566 : vector<2x8xf32>
    %575 = arith.select %574, %573, %566 : vector<2x8xi1>, vector<2x8xf32>
    %c2_i32_125 = arith.constant 2 : i32
    %576 = vector.broadcast %c2_i32_125 : i32 to vector<2x8xi32>
    %577 = arith.select %574, %576, %568 : vector<2x8xi1>, vector<2x8xi32>
    %578 = vector.extract_strided_slice %553 {offsets = [0, 3], sizes = [2, 1], strides = [1, 1]} : vector<2x8xf32> to vector<2x1xf32>
    %579 = vector.extract_strided_slice %254 {offsets = [3, 0], sizes = [1, 8], strides = [1, 1]} : vector<8x8xf32> to vector<1x8xf32>
    %580 = vector.broadcast %578 : vector<2x1xf32> to vector<2x8xf32>
    %581 = vector.broadcast %579 : vector<1x8xf32> to vector<2x8xf32>
    %582 = arith.addf %580, %581 : vector<2x8xf32>
    %583 = arith.cmpf ogt, %582, %575 : vector<2x8xf32>
    %584 = arith.select %583, %582, %575 : vector<2x8xi1>, vector<2x8xf32>
    %c3_i32_126 = arith.constant 3 : i32
    %585 = vector.broadcast %c3_i32_126 : i32 to vector<2x8xi32>
    %586 = arith.select %583, %585, %577 : vector<2x8xi1>, vector<2x8xi32>
    %587 = vector.extract_strided_slice %553 {offsets = [0, 4], sizes = [2, 1], strides = [1, 1]} : vector<2x8xf32> to vector<2x1xf32>
    %588 = vector.extract_strided_slice %254 {offsets = [4, 0], sizes = [1, 8], strides = [1, 1]} : vector<8x8xf32> to vector<1x8xf32>
    %589 = vector.broadcast %587 : vector<2x1xf32> to vector<2x8xf32>
    %590 = vector.broadcast %588 : vector<1x8xf32> to vector<2x8xf32>
    %591 = arith.addf %589, %590 : vector<2x8xf32>
    %592 = arith.cmpf ogt, %591, %584 : vector<2x8xf32>
    %593 = arith.select %592, %591, %584 : vector<2x8xi1>, vector<2x8xf32>
    %c4_i32_127 = arith.constant 4 : i32
    %594 = vector.broadcast %c4_i32_127 : i32 to vector<2x8xi32>
    %595 = arith.select %592, %594, %586 : vector<2x8xi1>, vector<2x8xi32>
    %596 = vector.extract_strided_slice %553 {offsets = [0, 5], sizes = [2, 1], strides = [1, 1]} : vector<2x8xf32> to vector<2x1xf32>
    %597 = vector.extract_strided_slice %254 {offsets = [5, 0], sizes = [1, 8], strides = [1, 1]} : vector<8x8xf32> to vector<1x8xf32>
    %598 = vector.broadcast %596 : vector<2x1xf32> to vector<2x8xf32>
    %599 = vector.broadcast %597 : vector<1x8xf32> to vector<2x8xf32>
    %600 = arith.addf %598, %599 : vector<2x8xf32>
    %601 = arith.cmpf ogt, %600, %593 : vector<2x8xf32>
    %602 = arith.select %601, %600, %593 : vector<2x8xi1>, vector<2x8xf32>
    %c5_i32_128 = arith.constant 5 : i32
    %603 = vector.broadcast %c5_i32_128 : i32 to vector<2x8xi32>
    %604 = arith.select %601, %603, %595 : vector<2x8xi1>, vector<2x8xi32>
    %605 = vector.extract_strided_slice %553 {offsets = [0, 6], sizes = [2, 1], strides = [1, 1]} : vector<2x8xf32> to vector<2x1xf32>
    %606 = vector.extract_strided_slice %254 {offsets = [6, 0], sizes = [1, 8], strides = [1, 1]} : vector<8x8xf32> to vector<1x8xf32>
    %607 = vector.broadcast %605 : vector<2x1xf32> to vector<2x8xf32>
    %608 = vector.broadcast %606 : vector<1x8xf32> to vector<2x8xf32>
    %609 = arith.addf %607, %608 : vector<2x8xf32>
    %610 = arith.cmpf ogt, %609, %602 : vector<2x8xf32>
    %611 = arith.select %610, %609, %602 : vector<2x8xi1>, vector<2x8xf32>
    %c6_i32_129 = arith.constant 6 : i32
    %612 = vector.broadcast %c6_i32_129 : i32 to vector<2x8xi32>
    %613 = arith.select %610, %612, %604 : vector<2x8xi1>, vector<2x8xi32>
    %614 = vector.extract_strided_slice %553 {offsets = [0, 7], sizes = [2, 1], strides = [1, 1]} : vector<2x8xf32> to vector<2x1xf32>
    %615 = vector.extract_strided_slice %254 {offsets = [7, 0], sizes = [1, 8], strides = [1, 1]} : vector<8x8xf32> to vector<1x8xf32>
    %616 = vector.broadcast %614 : vector<2x1xf32> to vector<2x8xf32>
    %617 = vector.broadcast %615 : vector<1x8xf32> to vector<2x8xf32>
    %618 = arith.addf %616, %617 : vector<2x8xf32>
    %619 = arith.cmpf ogt, %618, %611 : vector<2x8xf32>
    %620 = arith.select %619, %618, %611 : vector<2x8xi1>, vector<2x8xf32>
    %c7_i32_130 = arith.constant 7 : i32
    %621 = vector.broadcast %c7_i32_130 : i32 to vector<2x8xi32>
    %622 = arith.select %619, %621, %613 : vector<2x8xi1>, vector<2x8xi32>
    %623 = vector.extract_strided_slice %251 {offsets = [4, 0], sizes = [2, 8], strides = [1, 1]} : vector<16x8xf32> to vector<2x8xf32>
    %624 = arith.addf %620, %623 : vector<2x8xf32>
    %625 = vector.extract_strided_slice %624 {offsets = [0, 0], sizes = [2, 1], strides = [1, 1]} : vector<2x8xf32> to vector<2x1xf32>
    %626 = vector.extract_strided_slice %254 {offsets = [0, 0], sizes = [1, 8], strides = [1, 1]} : vector<8x8xf32> to vector<1x8xf32>
    %627 = vector.broadcast %625 : vector<2x1xf32> to vector<2x8xf32>
    %628 = vector.broadcast %626 : vector<1x8xf32> to vector<2x8xf32>
    %629 = arith.addf %627, %628 : vector<2x8xf32>
    %c0_i32_131 = arith.constant 0 : i32
    %630 = vector.broadcast %c0_i32_131 : i32 to vector<2x8xi32>
    %631 = vector.extract_strided_slice %624 {offsets = [0, 1], sizes = [2, 1], strides = [1, 1]} : vector<2x8xf32> to vector<2x1xf32>
    %632 = vector.extract_strided_slice %254 {offsets = [1, 0], sizes = [1, 8], strides = [1, 1]} : vector<8x8xf32> to vector<1x8xf32>
    %633 = vector.broadcast %631 : vector<2x1xf32> to vector<2x8xf32>
    %634 = vector.broadcast %632 : vector<1x8xf32> to vector<2x8xf32>
    %635 = arith.addf %633, %634 : vector<2x8xf32>
    %636 = arith.cmpf ogt, %635, %629 : vector<2x8xf32>
    %637 = arith.select %636, %635, %629 : vector<2x8xi1>, vector<2x8xf32>
    %c1_i32_132 = arith.constant 1 : i32
    %638 = vector.broadcast %c1_i32_132 : i32 to vector<2x8xi32>
    %639 = arith.select %636, %638, %630 : vector<2x8xi1>, vector<2x8xi32>
    %640 = vector.extract_strided_slice %624 {offsets = [0, 2], sizes = [2, 1], strides = [1, 1]} : vector<2x8xf32> to vector<2x1xf32>
    %641 = vector.extract_strided_slice %254 {offsets = [2, 0], sizes = [1, 8], strides = [1, 1]} : vector<8x8xf32> to vector<1x8xf32>
    %642 = vector.broadcast %640 : vector<2x1xf32> to vector<2x8xf32>
    %643 = vector.broadcast %641 : vector<1x8xf32> to vector<2x8xf32>
    %644 = arith.addf %642, %643 : vector<2x8xf32>
    %645 = arith.cmpf ogt, %644, %637 : vector<2x8xf32>
    %646 = arith.select %645, %644, %637 : vector<2x8xi1>, vector<2x8xf32>
    %c2_i32_133 = arith.constant 2 : i32
    %647 = vector.broadcast %c2_i32_133 : i32 to vector<2x8xi32>
    %648 = arith.select %645, %647, %639 : vector<2x8xi1>, vector<2x8xi32>
    %649 = vector.extract_strided_slice %624 {offsets = [0, 3], sizes = [2, 1], strides = [1, 1]} : vector<2x8xf32> to vector<2x1xf32>
    %650 = vector.extract_strided_slice %254 {offsets = [3, 0], sizes = [1, 8], strides = [1, 1]} : vector<8x8xf32> to vector<1x8xf32>
    %651 = vector.broadcast %649 : vector<2x1xf32> to vector<2x8xf32>
    %652 = vector.broadcast %650 : vector<1x8xf32> to vector<2x8xf32>
    %653 = arith.addf %651, %652 : vector<2x8xf32>
    %654 = arith.cmpf ogt, %653, %646 : vector<2x8xf32>
    %655 = arith.select %654, %653, %646 : vector<2x8xi1>, vector<2x8xf32>
    %c3_i32_134 = arith.constant 3 : i32
    %656 = vector.broadcast %c3_i32_134 : i32 to vector<2x8xi32>
    %657 = arith.select %654, %656, %648 : vector<2x8xi1>, vector<2x8xi32>
    %658 = vector.extract_strided_slice %624 {offsets = [0, 4], sizes = [2, 1], strides = [1, 1]} : vector<2x8xf32> to vector<2x1xf32>
    %659 = vector.extract_strided_slice %254 {offsets = [4, 0], sizes = [1, 8], strides = [1, 1]} : vector<8x8xf32> to vector<1x8xf32>
    %660 = vector.broadcast %658 : vector<2x1xf32> to vector<2x8xf32>
    %661 = vector.broadcast %659 : vector<1x8xf32> to vector<2x8xf32>
    %662 = arith.addf %660, %661 : vector<2x8xf32>
    %663 = arith.cmpf ogt, %662, %655 : vector<2x8xf32>
    %664 = arith.select %663, %662, %655 : vector<2x8xi1>, vector<2x8xf32>
    %c4_i32_135 = arith.constant 4 : i32
    %665 = vector.broadcast %c4_i32_135 : i32 to vector<2x8xi32>
    %666 = arith.select %663, %665, %657 : vector<2x8xi1>, vector<2x8xi32>
    %667 = vector.extract_strided_slice %624 {offsets = [0, 5], sizes = [2, 1], strides = [1, 1]} : vector<2x8xf32> to vector<2x1xf32>
    %668 = vector.extract_strided_slice %254 {offsets = [5, 0], sizes = [1, 8], strides = [1, 1]} : vector<8x8xf32> to vector<1x8xf32>
    %669 = vector.broadcast %667 : vector<2x1xf32> to vector<2x8xf32>
    %670 = vector.broadcast %668 : vector<1x8xf32> to vector<2x8xf32>
    %671 = arith.addf %669, %670 : vector<2x8xf32>
    %672 = arith.cmpf ogt, %671, %664 : vector<2x8xf32>
    %673 = arith.select %672, %671, %664 : vector<2x8xi1>, vector<2x8xf32>
    %c5_i32_136 = arith.constant 5 : i32
    %674 = vector.broadcast %c5_i32_136 : i32 to vector<2x8xi32>
    %675 = arith.select %672, %674, %666 : vector<2x8xi1>, vector<2x8xi32>
    %676 = vector.extract_strided_slice %624 {offsets = [0, 6], sizes = [2, 1], strides = [1, 1]} : vector<2x8xf32> to vector<2x1xf32>
    %677 = vector.extract_strided_slice %254 {offsets = [6, 0], sizes = [1, 8], strides = [1, 1]} : vector<8x8xf32> to vector<1x8xf32>
    %678 = vector.broadcast %676 : vector<2x1xf32> to vector<2x8xf32>
    %679 = vector.broadcast %677 : vector<1x8xf32> to vector<2x8xf32>
    %680 = arith.addf %678, %679 : vector<2x8xf32>
    %681 = arith.cmpf ogt, %680, %673 : vector<2x8xf32>
    %682 = arith.select %681, %680, %673 : vector<2x8xi1>, vector<2x8xf32>
    %c6_i32_137 = arith.constant 6 : i32
    %683 = vector.broadcast %c6_i32_137 : i32 to vector<2x8xi32>
    %684 = arith.select %681, %683, %675 : vector<2x8xi1>, vector<2x8xi32>
    %685 = vector.extract_strided_slice %624 {offsets = [0, 7], sizes = [2, 1], strides = [1, 1]} : vector<2x8xf32> to vector<2x1xf32>
    %686 = vector.extract_strided_slice %254 {offsets = [7, 0], sizes = [1, 8], strides = [1, 1]} : vector<8x8xf32> to vector<1x8xf32>
    %687 = vector.broadcast %685 : vector<2x1xf32> to vector<2x8xf32>
    %688 = vector.broadcast %686 : vector<1x8xf32> to vector<2x8xf32>
    %689 = arith.addf %687, %688 : vector<2x8xf32>
    %690 = arith.cmpf ogt, %689, %682 : vector<2x8xf32>
    %691 = arith.select %690, %689, %682 : vector<2x8xi1>, vector<2x8xf32>
    %c7_i32_138 = arith.constant 7 : i32
    %692 = vector.broadcast %c7_i32_138 : i32 to vector<2x8xi32>
    %693 = arith.select %690, %692, %684 : vector<2x8xi1>, vector<2x8xi32>
    %694 = vector.extract_strided_slice %251 {offsets = [6, 0], sizes = [2, 8], strides = [1, 1]} : vector<16x8xf32> to vector<2x8xf32>
    %695 = arith.addf %691, %694 : vector<2x8xf32>
    %696 = vector.extract_strided_slice %695 {offsets = [0, 0], sizes = [2, 1], strides = [1, 1]} : vector<2x8xf32> to vector<2x1xf32>
    %697 = vector.extract_strided_slice %254 {offsets = [0, 0], sizes = [1, 8], strides = [1, 1]} : vector<8x8xf32> to vector<1x8xf32>
    %698 = vector.broadcast %696 : vector<2x1xf32> to vector<2x8xf32>
    %699 = vector.broadcast %697 : vector<1x8xf32> to vector<2x8xf32>
    %700 = arith.addf %698, %699 : vector<2x8xf32>
    %c0_i32_139 = arith.constant 0 : i32
    %701 = vector.broadcast %c0_i32_139 : i32 to vector<2x8xi32>
    %702 = vector.extract_strided_slice %695 {offsets = [0, 1], sizes = [2, 1], strides = [1, 1]} : vector<2x8xf32> to vector<2x1xf32>
    %703 = vector.extract_strided_slice %254 {offsets = [1, 0], sizes = [1, 8], strides = [1, 1]} : vector<8x8xf32> to vector<1x8xf32>
    %704 = vector.broadcast %702 : vector<2x1xf32> to vector<2x8xf32>
    %705 = vector.broadcast %703 : vector<1x8xf32> to vector<2x8xf32>
    %706 = arith.addf %704, %705 : vector<2x8xf32>
    %707 = arith.cmpf ogt, %706, %700 : vector<2x8xf32>
    %708 = arith.select %707, %706, %700 : vector<2x8xi1>, vector<2x8xf32>
    %c1_i32_140 = arith.constant 1 : i32
    %709 = vector.broadcast %c1_i32_140 : i32 to vector<2x8xi32>
    %710 = arith.select %707, %709, %701 : vector<2x8xi1>, vector<2x8xi32>
    %711 = vector.extract_strided_slice %695 {offsets = [0, 2], sizes = [2, 1], strides = [1, 1]} : vector<2x8xf32> to vector<2x1xf32>
    %712 = vector.extract_strided_slice %254 {offsets = [2, 0], sizes = [1, 8], strides = [1, 1]} : vector<8x8xf32> to vector<1x8xf32>
    %713 = vector.broadcast %711 : vector<2x1xf32> to vector<2x8xf32>
    %714 = vector.broadcast %712 : vector<1x8xf32> to vector<2x8xf32>
    %715 = arith.addf %713, %714 : vector<2x8xf32>
    %716 = arith.cmpf ogt, %715, %708 : vector<2x8xf32>
    %717 = arith.select %716, %715, %708 : vector<2x8xi1>, vector<2x8xf32>
    %c2_i32_141 = arith.constant 2 : i32
    %718 = vector.broadcast %c2_i32_141 : i32 to vector<2x8xi32>
    %719 = arith.select %716, %718, %710 : vector<2x8xi1>, vector<2x8xi32>
    %720 = vector.extract_strided_slice %695 {offsets = [0, 3], sizes = [2, 1], strides = [1, 1]} : vector<2x8xf32> to vector<2x1xf32>
    %721 = vector.extract_strided_slice %254 {offsets = [3, 0], sizes = [1, 8], strides = [1, 1]} : vector<8x8xf32> to vector<1x8xf32>
    %722 = vector.broadcast %720 : vector<2x1xf32> to vector<2x8xf32>
    %723 = vector.broadcast %721 : vector<1x8xf32> to vector<2x8xf32>
    %724 = arith.addf %722, %723 : vector<2x8xf32>
    %725 = arith.cmpf ogt, %724, %717 : vector<2x8xf32>
    %726 = arith.select %725, %724, %717 : vector<2x8xi1>, vector<2x8xf32>
    %c3_i32_142 = arith.constant 3 : i32
    %727 = vector.broadcast %c3_i32_142 : i32 to vector<2x8xi32>
    %728 = arith.select %725, %727, %719 : vector<2x8xi1>, vector<2x8xi32>
    %729 = vector.extract_strided_slice %695 {offsets = [0, 4], sizes = [2, 1], strides = [1, 1]} : vector<2x8xf32> to vector<2x1xf32>
    %730 = vector.extract_strided_slice %254 {offsets = [4, 0], sizes = [1, 8], strides = [1, 1]} : vector<8x8xf32> to vector<1x8xf32>
    %731 = vector.broadcast %729 : vector<2x1xf32> to vector<2x8xf32>
    %732 = vector.broadcast %730 : vector<1x8xf32> to vector<2x8xf32>
    %733 = arith.addf %731, %732 : vector<2x8xf32>
    %734 = arith.cmpf ogt, %733, %726 : vector<2x8xf32>
    %735 = arith.select %734, %733, %726 : vector<2x8xi1>, vector<2x8xf32>
    %c4_i32_143 = arith.constant 4 : i32
    %736 = vector.broadcast %c4_i32_143 : i32 to vector<2x8xi32>
    %737 = arith.select %734, %736, %728 : vector<2x8xi1>, vector<2x8xi32>
    %738 = vector.extract_strided_slice %695 {offsets = [0, 5], sizes = [2, 1], strides = [1, 1]} : vector<2x8xf32> to vector<2x1xf32>
    %739 = vector.extract_strided_slice %254 {offsets = [5, 0], sizes = [1, 8], strides = [1, 1]} : vector<8x8xf32> to vector<1x8xf32>
    %740 = vector.broadcast %738 : vector<2x1xf32> to vector<2x8xf32>
    %741 = vector.broadcast %739 : vector<1x8xf32> to vector<2x8xf32>
    %742 = arith.addf %740, %741 : vector<2x8xf32>
    %743 = arith.cmpf ogt, %742, %735 : vector<2x8xf32>
    %744 = arith.select %743, %742, %735 : vector<2x8xi1>, vector<2x8xf32>
    %c5_i32_144 = arith.constant 5 : i32
    %745 = vector.broadcast %c5_i32_144 : i32 to vector<2x8xi32>
    %746 = arith.select %743, %745, %737 : vector<2x8xi1>, vector<2x8xi32>
    %747 = vector.extract_strided_slice %695 {offsets = [0, 6], sizes = [2, 1], strides = [1, 1]} : vector<2x8xf32> to vector<2x1xf32>
    %748 = vector.extract_strided_slice %254 {offsets = [6, 0], sizes = [1, 8], strides = [1, 1]} : vector<8x8xf32> to vector<1x8xf32>
    %749 = vector.broadcast %747 : vector<2x1xf32> to vector<2x8xf32>
    %750 = vector.broadcast %748 : vector<1x8xf32> to vector<2x8xf32>
    %751 = arith.addf %749, %750 : vector<2x8xf32>
    %752 = arith.cmpf ogt, %751, %744 : vector<2x8xf32>
    %753 = arith.select %752, %751, %744 : vector<2x8xi1>, vector<2x8xf32>
    %c6_i32_145 = arith.constant 6 : i32
    %754 = vector.broadcast %c6_i32_145 : i32 to vector<2x8xi32>
    %755 = arith.select %752, %754, %746 : vector<2x8xi1>, vector<2x8xi32>
    %756 = vector.extract_strided_slice %695 {offsets = [0, 7], sizes = [2, 1], strides = [1, 1]} : vector<2x8xf32> to vector<2x1xf32>
    %757 = vector.extract_strided_slice %254 {offsets = [7, 0], sizes = [1, 8], strides = [1, 1]} : vector<8x8xf32> to vector<1x8xf32>
    %758 = vector.broadcast %756 : vector<2x1xf32> to vector<2x8xf32>
    %759 = vector.broadcast %757 : vector<1x8xf32> to vector<2x8xf32>
    %760 = arith.addf %758, %759 : vector<2x8xf32>
    %761 = arith.cmpf ogt, %760, %753 : vector<2x8xf32>
    %762 = arith.select %761, %760, %753 : vector<2x8xi1>, vector<2x8xf32>
    %c7_i32_146 = arith.constant 7 : i32
    %763 = vector.broadcast %c7_i32_146 : i32 to vector<2x8xi32>
    %764 = arith.select %761, %763, %755 : vector<2x8xi1>, vector<2x8xi32>
    %765 = vector.extract_strided_slice %251 {offsets = [8, 0], sizes = [2, 8], strides = [1, 1]} : vector<16x8xf32> to vector<2x8xf32>
    %766 = arith.addf %762, %765 : vector<2x8xf32>
    %767 = vector.extract_strided_slice %766 {offsets = [0, 0], sizes = [2, 1], strides = [1, 1]} : vector<2x8xf32> to vector<2x1xf32>
    %768 = vector.extract_strided_slice %254 {offsets = [0, 0], sizes = [1, 8], strides = [1, 1]} : vector<8x8xf32> to vector<1x8xf32>
    %769 = vector.broadcast %767 : vector<2x1xf32> to vector<2x8xf32>
    %770 = vector.broadcast %768 : vector<1x8xf32> to vector<2x8xf32>
    %771 = arith.addf %769, %770 : vector<2x8xf32>
    %c0_i32_147 = arith.constant 0 : i32
    %772 = vector.broadcast %c0_i32_147 : i32 to vector<2x8xi32>
    %773 = vector.extract_strided_slice %766 {offsets = [0, 1], sizes = [2, 1], strides = [1, 1]} : vector<2x8xf32> to vector<2x1xf32>
    %774 = vector.extract_strided_slice %254 {offsets = [1, 0], sizes = [1, 8], strides = [1, 1]} : vector<8x8xf32> to vector<1x8xf32>
    %775 = vector.broadcast %773 : vector<2x1xf32> to vector<2x8xf32>
    %776 = vector.broadcast %774 : vector<1x8xf32> to vector<2x8xf32>
    %777 = arith.addf %775, %776 : vector<2x8xf32>
    %778 = arith.cmpf ogt, %777, %771 : vector<2x8xf32>
    %779 = arith.select %778, %777, %771 : vector<2x8xi1>, vector<2x8xf32>
    %c1_i32_148 = arith.constant 1 : i32
    %780 = vector.broadcast %c1_i32_148 : i32 to vector<2x8xi32>
    %781 = arith.select %778, %780, %772 : vector<2x8xi1>, vector<2x8xi32>
    %782 = vector.extract_strided_slice %766 {offsets = [0, 2], sizes = [2, 1], strides = [1, 1]} : vector<2x8xf32> to vector<2x1xf32>
    %783 = vector.extract_strided_slice %254 {offsets = [2, 0], sizes = [1, 8], strides = [1, 1]} : vector<8x8xf32> to vector<1x8xf32>
    %784 = vector.broadcast %782 : vector<2x1xf32> to vector<2x8xf32>
    %785 = vector.broadcast %783 : vector<1x8xf32> to vector<2x8xf32>
    %786 = arith.addf %784, %785 : vector<2x8xf32>
    %787 = arith.cmpf ogt, %786, %779 : vector<2x8xf32>
    %788 = arith.select %787, %786, %779 : vector<2x8xi1>, vector<2x8xf32>
    %c2_i32_149 = arith.constant 2 : i32
    %789 = vector.broadcast %c2_i32_149 : i32 to vector<2x8xi32>
    %790 = arith.select %787, %789, %781 : vector<2x8xi1>, vector<2x8xi32>
    %791 = vector.extract_strided_slice %766 {offsets = [0, 3], sizes = [2, 1], strides = [1, 1]} : vector<2x8xf32> to vector<2x1xf32>
    %792 = vector.extract_strided_slice %254 {offsets = [3, 0], sizes = [1, 8], strides = [1, 1]} : vector<8x8xf32> to vector<1x8xf32>
    %793 = vector.broadcast %791 : vector<2x1xf32> to vector<2x8xf32>
    %794 = vector.broadcast %792 : vector<1x8xf32> to vector<2x8xf32>
    %795 = arith.addf %793, %794 : vector<2x8xf32>
    %796 = arith.cmpf ogt, %795, %788 : vector<2x8xf32>
    %797 = arith.select %796, %795, %788 : vector<2x8xi1>, vector<2x8xf32>
    %c3_i32_150 = arith.constant 3 : i32
    %798 = vector.broadcast %c3_i32_150 : i32 to vector<2x8xi32>
    %799 = arith.select %796, %798, %790 : vector<2x8xi1>, vector<2x8xi32>
    %800 = vector.extract_strided_slice %766 {offsets = [0, 4], sizes = [2, 1], strides = [1, 1]} : vector<2x8xf32> to vector<2x1xf32>
    %801 = vector.extract_strided_slice %254 {offsets = [4, 0], sizes = [1, 8], strides = [1, 1]} : vector<8x8xf32> to vector<1x8xf32>
    %802 = vector.broadcast %800 : vector<2x1xf32> to vector<2x8xf32>
    %803 = vector.broadcast %801 : vector<1x8xf32> to vector<2x8xf32>
    %804 = arith.addf %802, %803 : vector<2x8xf32>
    %805 = arith.cmpf ogt, %804, %797 : vector<2x8xf32>
    %806 = arith.select %805, %804, %797 : vector<2x8xi1>, vector<2x8xf32>
    %c4_i32_151 = arith.constant 4 : i32
    %807 = vector.broadcast %c4_i32_151 : i32 to vector<2x8xi32>
    %808 = arith.select %805, %807, %799 : vector<2x8xi1>, vector<2x8xi32>
    %809 = vector.extract_strided_slice %766 {offsets = [0, 5], sizes = [2, 1], strides = [1, 1]} : vector<2x8xf32> to vector<2x1xf32>
    %810 = vector.extract_strided_slice %254 {offsets = [5, 0], sizes = [1, 8], strides = [1, 1]} : vector<8x8xf32> to vector<1x8xf32>
    %811 = vector.broadcast %809 : vector<2x1xf32> to vector<2x8xf32>
    %812 = vector.broadcast %810 : vector<1x8xf32> to vector<2x8xf32>
    %813 = arith.addf %811, %812 : vector<2x8xf32>
    %814 = arith.cmpf ogt, %813, %806 : vector<2x8xf32>
    %815 = arith.select %814, %813, %806 : vector<2x8xi1>, vector<2x8xf32>
    %c5_i32_152 = arith.constant 5 : i32
    %816 = vector.broadcast %c5_i32_152 : i32 to vector<2x8xi32>
    %817 = arith.select %814, %816, %808 : vector<2x8xi1>, vector<2x8xi32>
    %818 = vector.extract_strided_slice %766 {offsets = [0, 6], sizes = [2, 1], strides = [1, 1]} : vector<2x8xf32> to vector<2x1xf32>
    %819 = vector.extract_strided_slice %254 {offsets = [6, 0], sizes = [1, 8], strides = [1, 1]} : vector<8x8xf32> to vector<1x8xf32>
    %820 = vector.broadcast %818 : vector<2x1xf32> to vector<2x8xf32>
    %821 = vector.broadcast %819 : vector<1x8xf32> to vector<2x8xf32>
    %822 = arith.addf %820, %821 : vector<2x8xf32>
    %823 = arith.cmpf ogt, %822, %815 : vector<2x8xf32>
    %824 = arith.select %823, %822, %815 : vector<2x8xi1>, vector<2x8xf32>
    %c6_i32_153 = arith.constant 6 : i32
    %825 = vector.broadcast %c6_i32_153 : i32 to vector<2x8xi32>
    %826 = arith.select %823, %825, %817 : vector<2x8xi1>, vector<2x8xi32>
    %827 = vector.extract_strided_slice %766 {offsets = [0, 7], sizes = [2, 1], strides = [1, 1]} : vector<2x8xf32> to vector<2x1xf32>
    %828 = vector.extract_strided_slice %254 {offsets = [7, 0], sizes = [1, 8], strides = [1, 1]} : vector<8x8xf32> to vector<1x8xf32>
    %829 = vector.broadcast %827 : vector<2x1xf32> to vector<2x8xf32>
    %830 = vector.broadcast %828 : vector<1x8xf32> to vector<2x8xf32>
    %831 = arith.addf %829, %830 : vector<2x8xf32>
    %832 = arith.cmpf ogt, %831, %824 : vector<2x8xf32>
    %833 = arith.select %832, %831, %824 : vector<2x8xi1>, vector<2x8xf32>
    %c7_i32_154 = arith.constant 7 : i32
    %834 = vector.broadcast %c7_i32_154 : i32 to vector<2x8xi32>
    %835 = arith.select %832, %834, %826 : vector<2x8xi1>, vector<2x8xi32>
    %836 = vector.extract_strided_slice %251 {offsets = [10, 0], sizes = [2, 8], strides = [1, 1]} : vector<16x8xf32> to vector<2x8xf32>
    %837 = arith.addf %833, %836 : vector<2x8xf32>
    %838 = vector.extract_strided_slice %837 {offsets = [0, 0], sizes = [2, 1], strides = [1, 1]} : vector<2x8xf32> to vector<2x1xf32>
    %839 = vector.extract_strided_slice %254 {offsets = [0, 0], sizes = [1, 8], strides = [1, 1]} : vector<8x8xf32> to vector<1x8xf32>
    %840 = vector.broadcast %838 : vector<2x1xf32> to vector<2x8xf32>
    %841 = vector.broadcast %839 : vector<1x8xf32> to vector<2x8xf32>
    %842 = arith.addf %840, %841 : vector<2x8xf32>
    %c0_i32_155 = arith.constant 0 : i32
    %843 = vector.broadcast %c0_i32_155 : i32 to vector<2x8xi32>
    %844 = vector.extract_strided_slice %837 {offsets = [0, 1], sizes = [2, 1], strides = [1, 1]} : vector<2x8xf32> to vector<2x1xf32>
    %845 = vector.extract_strided_slice %254 {offsets = [1, 0], sizes = [1, 8], strides = [1, 1]} : vector<8x8xf32> to vector<1x8xf32>
    %846 = vector.broadcast %844 : vector<2x1xf32> to vector<2x8xf32>
    %847 = vector.broadcast %845 : vector<1x8xf32> to vector<2x8xf32>
    %848 = arith.addf %846, %847 : vector<2x8xf32>
    %849 = arith.cmpf ogt, %848, %842 : vector<2x8xf32>
    %850 = arith.select %849, %848, %842 : vector<2x8xi1>, vector<2x8xf32>
    %c1_i32_156 = arith.constant 1 : i32
    %851 = vector.broadcast %c1_i32_156 : i32 to vector<2x8xi32>
    %852 = arith.select %849, %851, %843 : vector<2x8xi1>, vector<2x8xi32>
    %853 = vector.extract_strided_slice %837 {offsets = [0, 2], sizes = [2, 1], strides = [1, 1]} : vector<2x8xf32> to vector<2x1xf32>
    %854 = vector.extract_strided_slice %254 {offsets = [2, 0], sizes = [1, 8], strides = [1, 1]} : vector<8x8xf32> to vector<1x8xf32>
    %855 = vector.broadcast %853 : vector<2x1xf32> to vector<2x8xf32>
    %856 = vector.broadcast %854 : vector<1x8xf32> to vector<2x8xf32>
    %857 = arith.addf %855, %856 : vector<2x8xf32>
    %858 = arith.cmpf ogt, %857, %850 : vector<2x8xf32>
    %859 = arith.select %858, %857, %850 : vector<2x8xi1>, vector<2x8xf32>
    %c2_i32_157 = arith.constant 2 : i32
    %860 = vector.broadcast %c2_i32_157 : i32 to vector<2x8xi32>
    %861 = arith.select %858, %860, %852 : vector<2x8xi1>, vector<2x8xi32>
    %862 = vector.extract_strided_slice %837 {offsets = [0, 3], sizes = [2, 1], strides = [1, 1]} : vector<2x8xf32> to vector<2x1xf32>
    %863 = vector.extract_strided_slice %254 {offsets = [3, 0], sizes = [1, 8], strides = [1, 1]} : vector<8x8xf32> to vector<1x8xf32>
    %864 = vector.broadcast %862 : vector<2x1xf32> to vector<2x8xf32>
    %865 = vector.broadcast %863 : vector<1x8xf32> to vector<2x8xf32>
    %866 = arith.addf %864, %865 : vector<2x8xf32>
    %867 = arith.cmpf ogt, %866, %859 : vector<2x8xf32>
    %868 = arith.select %867, %866, %859 : vector<2x8xi1>, vector<2x8xf32>
    %c3_i32_158 = arith.constant 3 : i32
    %869 = vector.broadcast %c3_i32_158 : i32 to vector<2x8xi32>
    %870 = arith.select %867, %869, %861 : vector<2x8xi1>, vector<2x8xi32>
    %871 = vector.extract_strided_slice %837 {offsets = [0, 4], sizes = [2, 1], strides = [1, 1]} : vector<2x8xf32> to vector<2x1xf32>
    %872 = vector.extract_strided_slice %254 {offsets = [4, 0], sizes = [1, 8], strides = [1, 1]} : vector<8x8xf32> to vector<1x8xf32>
    %873 = vector.broadcast %871 : vector<2x1xf32> to vector<2x8xf32>
    %874 = vector.broadcast %872 : vector<1x8xf32> to vector<2x8xf32>
    %875 = arith.addf %873, %874 : vector<2x8xf32>
    %876 = arith.cmpf ogt, %875, %868 : vector<2x8xf32>
    %877 = arith.select %876, %875, %868 : vector<2x8xi1>, vector<2x8xf32>
    %c4_i32_159 = arith.constant 4 : i32
    %878 = vector.broadcast %c4_i32_159 : i32 to vector<2x8xi32>
    %879 = arith.select %876, %878, %870 : vector<2x8xi1>, vector<2x8xi32>
    %880 = vector.extract_strided_slice %837 {offsets = [0, 5], sizes = [2, 1], strides = [1, 1]} : vector<2x8xf32> to vector<2x1xf32>
    %881 = vector.extract_strided_slice %254 {offsets = [5, 0], sizes = [1, 8], strides = [1, 1]} : vector<8x8xf32> to vector<1x8xf32>
    %882 = vector.broadcast %880 : vector<2x1xf32> to vector<2x8xf32>
    %883 = vector.broadcast %881 : vector<1x8xf32> to vector<2x8xf32>
    %884 = arith.addf %882, %883 : vector<2x8xf32>
    %885 = arith.cmpf ogt, %884, %877 : vector<2x8xf32>
    %886 = arith.select %885, %884, %877 : vector<2x8xi1>, vector<2x8xf32>
    %c5_i32_160 = arith.constant 5 : i32
    %887 = vector.broadcast %c5_i32_160 : i32 to vector<2x8xi32>
    %888 = arith.select %885, %887, %879 : vector<2x8xi1>, vector<2x8xi32>
    %889 = vector.extract_strided_slice %837 {offsets = [0, 6], sizes = [2, 1], strides = [1, 1]} : vector<2x8xf32> to vector<2x1xf32>
    %890 = vector.extract_strided_slice %254 {offsets = [6, 0], sizes = [1, 8], strides = [1, 1]} : vector<8x8xf32> to vector<1x8xf32>
    %891 = vector.broadcast %889 : vector<2x1xf32> to vector<2x8xf32>
    %892 = vector.broadcast %890 : vector<1x8xf32> to vector<2x8xf32>
    %893 = arith.addf %891, %892 : vector<2x8xf32>
    %894 = arith.cmpf ogt, %893, %886 : vector<2x8xf32>
    %895 = arith.select %894, %893, %886 : vector<2x8xi1>, vector<2x8xf32>
    %c6_i32_161 = arith.constant 6 : i32
    %896 = vector.broadcast %c6_i32_161 : i32 to vector<2x8xi32>
    %897 = arith.select %894, %896, %888 : vector<2x8xi1>, vector<2x8xi32>
    %898 = vector.extract_strided_slice %837 {offsets = [0, 7], sizes = [2, 1], strides = [1, 1]} : vector<2x8xf32> to vector<2x1xf32>
    %899 = vector.extract_strided_slice %254 {offsets = [7, 0], sizes = [1, 8], strides = [1, 1]} : vector<8x8xf32> to vector<1x8xf32>
    %900 = vector.broadcast %898 : vector<2x1xf32> to vector<2x8xf32>
    %901 = vector.broadcast %899 : vector<1x8xf32> to vector<2x8xf32>
    %902 = arith.addf %900, %901 : vector<2x8xf32>
    %903 = arith.cmpf ogt, %902, %895 : vector<2x8xf32>
    %904 = arith.select %903, %902, %895 : vector<2x8xi1>, vector<2x8xf32>
    %c7_i32_162 = arith.constant 7 : i32
    %905 = vector.broadcast %c7_i32_162 : i32 to vector<2x8xi32>
    %906 = arith.select %903, %905, %897 : vector<2x8xi1>, vector<2x8xi32>
    %907 = vector.extract_strided_slice %251 {offsets = [12, 0], sizes = [2, 8], strides = [1, 1]} : vector<16x8xf32> to vector<2x8xf32>
    %908 = arith.addf %904, %907 : vector<2x8xf32>
    %909 = vector.extract_strided_slice %908 {offsets = [0, 0], sizes = [2, 1], strides = [1, 1]} : vector<2x8xf32> to vector<2x1xf32>
    %910 = vector.extract_strided_slice %254 {offsets = [0, 0], sizes = [1, 8], strides = [1, 1]} : vector<8x8xf32> to vector<1x8xf32>
    %911 = vector.broadcast %909 : vector<2x1xf32> to vector<2x8xf32>
    %912 = vector.broadcast %910 : vector<1x8xf32> to vector<2x8xf32>
    %913 = arith.addf %911, %912 : vector<2x8xf32>
    %c0_i32_163 = arith.constant 0 : i32
    %914 = vector.broadcast %c0_i32_163 : i32 to vector<2x8xi32>
    %915 = vector.extract_strided_slice %908 {offsets = [0, 1], sizes = [2, 1], strides = [1, 1]} : vector<2x8xf32> to vector<2x1xf32>
    %916 = vector.extract_strided_slice %254 {offsets = [1, 0], sizes = [1, 8], strides = [1, 1]} : vector<8x8xf32> to vector<1x8xf32>
    %917 = vector.broadcast %915 : vector<2x1xf32> to vector<2x8xf32>
    %918 = vector.broadcast %916 : vector<1x8xf32> to vector<2x8xf32>
    %919 = arith.addf %917, %918 : vector<2x8xf32>
    %920 = arith.cmpf ogt, %919, %913 : vector<2x8xf32>
    %921 = arith.select %920, %919, %913 : vector<2x8xi1>, vector<2x8xf32>
    %c1_i32_164 = arith.constant 1 : i32
    %922 = vector.broadcast %c1_i32_164 : i32 to vector<2x8xi32>
    %923 = arith.select %920, %922, %914 : vector<2x8xi1>, vector<2x8xi32>
    %924 = vector.extract_strided_slice %908 {offsets = [0, 2], sizes = [2, 1], strides = [1, 1]} : vector<2x8xf32> to vector<2x1xf32>
    %925 = vector.extract_strided_slice %254 {offsets = [2, 0], sizes = [1, 8], strides = [1, 1]} : vector<8x8xf32> to vector<1x8xf32>
    %926 = vector.broadcast %924 : vector<2x1xf32> to vector<2x8xf32>
    %927 = vector.broadcast %925 : vector<1x8xf32> to vector<2x8xf32>
    %928 = arith.addf %926, %927 : vector<2x8xf32>
    %929 = arith.cmpf ogt, %928, %921 : vector<2x8xf32>
    %930 = arith.select %929, %928, %921 : vector<2x8xi1>, vector<2x8xf32>
    %c2_i32_165 = arith.constant 2 : i32
    %931 = vector.broadcast %c2_i32_165 : i32 to vector<2x8xi32>
    %932 = arith.select %929, %931, %923 : vector<2x8xi1>, vector<2x8xi32>
    %933 = vector.extract_strided_slice %908 {offsets = [0, 3], sizes = [2, 1], strides = [1, 1]} : vector<2x8xf32> to vector<2x1xf32>
    %934 = vector.extract_strided_slice %254 {offsets = [3, 0], sizes = [1, 8], strides = [1, 1]} : vector<8x8xf32> to vector<1x8xf32>
    %935 = vector.broadcast %933 : vector<2x1xf32> to vector<2x8xf32>
    %936 = vector.broadcast %934 : vector<1x8xf32> to vector<2x8xf32>
    %937 = arith.addf %935, %936 : vector<2x8xf32>
    %938 = arith.cmpf ogt, %937, %930 : vector<2x8xf32>
    %939 = arith.select %938, %937, %930 : vector<2x8xi1>, vector<2x8xf32>
    %c3_i32_166 = arith.constant 3 : i32
    %940 = vector.broadcast %c3_i32_166 : i32 to vector<2x8xi32>
    %941 = arith.select %938, %940, %932 : vector<2x8xi1>, vector<2x8xi32>
    %942 = vector.extract_strided_slice %908 {offsets = [0, 4], sizes = [2, 1], strides = [1, 1]} : vector<2x8xf32> to vector<2x1xf32>
    %943 = vector.extract_strided_slice %254 {offsets = [4, 0], sizes = [1, 8], strides = [1, 1]} : vector<8x8xf32> to vector<1x8xf32>
    %944 = vector.broadcast %942 : vector<2x1xf32> to vector<2x8xf32>
    %945 = vector.broadcast %943 : vector<1x8xf32> to vector<2x8xf32>
    %946 = arith.addf %944, %945 : vector<2x8xf32>
    %947 = arith.cmpf ogt, %946, %939 : vector<2x8xf32>
    %948 = arith.select %947, %946, %939 : vector<2x8xi1>, vector<2x8xf32>
    %c4_i32_167 = arith.constant 4 : i32
    %949 = vector.broadcast %c4_i32_167 : i32 to vector<2x8xi32>
    %950 = arith.select %947, %949, %941 : vector<2x8xi1>, vector<2x8xi32>
    %951 = vector.extract_strided_slice %908 {offsets = [0, 5], sizes = [2, 1], strides = [1, 1]} : vector<2x8xf32> to vector<2x1xf32>
    %952 = vector.extract_strided_slice %254 {offsets = [5, 0], sizes = [1, 8], strides = [1, 1]} : vector<8x8xf32> to vector<1x8xf32>
    %953 = vector.broadcast %951 : vector<2x1xf32> to vector<2x8xf32>
    %954 = vector.broadcast %952 : vector<1x8xf32> to vector<2x8xf32>
    %955 = arith.addf %953, %954 : vector<2x8xf32>
    %956 = arith.cmpf ogt, %955, %948 : vector<2x8xf32>
    %957 = arith.select %956, %955, %948 : vector<2x8xi1>, vector<2x8xf32>
    %c5_i32_168 = arith.constant 5 : i32
    %958 = vector.broadcast %c5_i32_168 : i32 to vector<2x8xi32>
    %959 = arith.select %956, %958, %950 : vector<2x8xi1>, vector<2x8xi32>
    %960 = vector.extract_strided_slice %908 {offsets = [0, 6], sizes = [2, 1], strides = [1, 1]} : vector<2x8xf32> to vector<2x1xf32>
    %961 = vector.extract_strided_slice %254 {offsets = [6, 0], sizes = [1, 8], strides = [1, 1]} : vector<8x8xf32> to vector<1x8xf32>
    %962 = vector.broadcast %960 : vector<2x1xf32> to vector<2x8xf32>
    %963 = vector.broadcast %961 : vector<1x8xf32> to vector<2x8xf32>
    %964 = arith.addf %962, %963 : vector<2x8xf32>
    %965 = arith.cmpf ogt, %964, %957 : vector<2x8xf32>
    %966 = arith.select %965, %964, %957 : vector<2x8xi1>, vector<2x8xf32>
    %c6_i32_169 = arith.constant 6 : i32
    %967 = vector.broadcast %c6_i32_169 : i32 to vector<2x8xi32>
    %968 = arith.select %965, %967, %959 : vector<2x8xi1>, vector<2x8xi32>
    %969 = vector.extract_strided_slice %908 {offsets = [0, 7], sizes = [2, 1], strides = [1, 1]} : vector<2x8xf32> to vector<2x1xf32>
    %970 = vector.extract_strided_slice %254 {offsets = [7, 0], sizes = [1, 8], strides = [1, 1]} : vector<8x8xf32> to vector<1x8xf32>
    %971 = vector.broadcast %969 : vector<2x1xf32> to vector<2x8xf32>
    %972 = vector.broadcast %970 : vector<1x8xf32> to vector<2x8xf32>
    %973 = arith.addf %971, %972 : vector<2x8xf32>
    %974 = arith.cmpf ogt, %973, %966 : vector<2x8xf32>
    %975 = arith.select %974, %973, %966 : vector<2x8xi1>, vector<2x8xf32>
    %c7_i32_170 = arith.constant 7 : i32
    %976 = vector.broadcast %c7_i32_170 : i32 to vector<2x8xi32>
    %977 = arith.select %974, %976, %968 : vector<2x8xi1>, vector<2x8xi32>
    %978 = vector.extract_strided_slice %251 {offsets = [14, 0], sizes = [2, 8], strides = [1, 1]} : vector<16x8xf32> to vector<2x8xf32>
    %979 = arith.addf %975, %978 : vector<2x8xf32>
    %980 = vector.broadcast %253 : vector<1x8xf32> to vector<2x8xf32>
    %981 = arith.addf %979, %980 : vector<2x8xf32>
    %982 = vector.extract_strided_slice %981 {offsets = [0, 0], sizes = [2, 1], strides = [1, 1]} : vector<2x8xf32> to vector<2x1xf32>
    %c0_i32_171 = arith.constant 0 : i32
    %983 = vector.broadcast %c0_i32_171 : i32 to vector<2x1xi32>
    %984 = vector.extract_strided_slice %981 {offsets = [0, 1], sizes = [2, 1], strides = [1, 1]} : vector<2x8xf32> to vector<2x1xf32>
    %985 = arith.cmpf ogt, %984, %982 : vector<2x1xf32>
    %986 = arith.select %985, %984, %982 : vector<2x1xi1>, vector<2x1xf32>
    %c1_i32_172 = arith.constant 1 : i32
    %987 = vector.broadcast %c1_i32_172 : i32 to vector<2x1xi32>
    %988 = arith.select %985, %987, %983 : vector<2x1xi1>, vector<2x1xi32>
    %989 = vector.extract_strided_slice %981 {offsets = [0, 2], sizes = [2, 1], strides = [1, 1]} : vector<2x8xf32> to vector<2x1xf32>
    %990 = arith.cmpf ogt, %989, %986 : vector<2x1xf32>
    %991 = arith.select %990, %989, %986 : vector<2x1xi1>, vector<2x1xf32>
    %c2_i32_173 = arith.constant 2 : i32
    %992 = vector.broadcast %c2_i32_173 : i32 to vector<2x1xi32>
    %993 = arith.select %990, %992, %988 : vector<2x1xi1>, vector<2x1xi32>
    %994 = vector.extract_strided_slice %981 {offsets = [0, 3], sizes = [2, 1], strides = [1, 1]} : vector<2x8xf32> to vector<2x1xf32>
    %995 = arith.cmpf ogt, %994, %991 : vector<2x1xf32>
    %996 = arith.select %995, %994, %991 : vector<2x1xi1>, vector<2x1xf32>
    %c3_i32_174 = arith.constant 3 : i32
    %997 = vector.broadcast %c3_i32_174 : i32 to vector<2x1xi32>
    %998 = arith.select %995, %997, %993 : vector<2x1xi1>, vector<2x1xi32>
    %999 = vector.extract_strided_slice %981 {offsets = [0, 4], sizes = [2, 1], strides = [1, 1]} : vector<2x8xf32> to vector<2x1xf32>
    %1000 = arith.cmpf ogt, %999, %996 : vector<2x1xf32>
    %1001 = arith.select %1000, %999, %996 : vector<2x1xi1>, vector<2x1xf32>
    %c4_i32_175 = arith.constant 4 : i32
    %1002 = vector.broadcast %c4_i32_175 : i32 to vector<2x1xi32>
    %1003 = arith.select %1000, %1002, %998 : vector<2x1xi1>, vector<2x1xi32>
    %1004 = vector.extract_strided_slice %981 {offsets = [0, 5], sizes = [2, 1], strides = [1, 1]} : vector<2x8xf32> to vector<2x1xf32>
    %1005 = arith.cmpf ogt, %1004, %1001 : vector<2x1xf32>
    %1006 = arith.select %1005, %1004, %1001 : vector<2x1xi1>, vector<2x1xf32>
    %c5_i32_176 = arith.constant 5 : i32
    %1007 = vector.broadcast %c5_i32_176 : i32 to vector<2x1xi32>
    %1008 = arith.select %1005, %1007, %1003 : vector<2x1xi1>, vector<2x1xi32>
    %1009 = vector.extract_strided_slice %981 {offsets = [0, 6], sizes = [2, 1], strides = [1, 1]} : vector<2x8xf32> to vector<2x1xf32>
    %1010 = arith.cmpf ogt, %1009, %1006 : vector<2x1xf32>
    %1011 = arith.select %1010, %1009, %1006 : vector<2x1xi1>, vector<2x1xf32>
    %c6_i32_177 = arith.constant 6 : i32
    %1012 = vector.broadcast %c6_i32_177 : i32 to vector<2x1xi32>
    %1013 = arith.select %1010, %1012, %1008 : vector<2x1xi1>, vector<2x1xi32>
    %1014 = vector.extract_strided_slice %981 {offsets = [0, 7], sizes = [2, 1], strides = [1, 1]} : vector<2x8xf32> to vector<2x1xf32>
    %1015 = arith.cmpf ogt, %1014, %1011 : vector<2x1xf32>
    %c7_i32_178 = arith.constant 7 : i32
    %1016 = vector.broadcast %c7_i32_178 : i32 to vector<2x1xi32>
    %1017 = arith.select %1015, %1016, %1013 : vector<2x1xi1>, vector<2x1xi32>
    %1018 = tpu.iota {dimensions = array<i32: 1>} : vector<2x8xi32>
    %1019 = vector.broadcast %1017 : vector<2x1xi32> to vector<2x8xi32>
    %1020 = arith.cmpi eq, %1018, %1019 : vector<2x8xi32>
    %c0_i32_179 = arith.constant 0 : i32
    %1021 = vector.broadcast %c0_i32_179 : i32 to vector<2x8xi32>
    %1022 = arith.select %1020, %977, %1021 : vector<2x8xi1>, vector<2x8xi32>
    %cst_180 = arith.constant dense<0> : vector<2xi32>
    %1023 = vector.multi_reduction <add>, %1022, %cst_180 [1] : vector<2x8xi32> to vector<2xi32>
    %1024 = vector.shape_cast %1023 : vector<2xi32> to vector<2x1xi32>
    %1025 = vector.broadcast %1024 : vector<2x1xi32> to vector<2x8xi32>
    %1026 = arith.cmpi eq, %1018, %1025 : vector<2x8xi32>
    %c0_i32_181 = arith.constant 0 : i32
    %1027 = vector.broadcast %c0_i32_181 : i32 to vector<2x8xi32>
    %1028 = arith.select %1026, %906, %1027 : vector<2x8xi1>, vector<2x8xi32>
    %cst_182 = arith.constant dense<0> : vector<2xi32>
    %1029 = vector.multi_reduction <add>, %1028, %cst_182 [1] : vector<2x8xi32> to vector<2xi32>
    %1030 = vector.shape_cast %1029 : vector<2xi32> to vector<2x1xi32>
    %1031 = vector.broadcast %1030 : vector<2x1xi32> to vector<2x8xi32>
    %1032 = arith.cmpi eq, %1018, %1031 : vector<2x8xi32>
    %c0_i32_183 = arith.constant 0 : i32
    %1033 = vector.broadcast %c0_i32_183 : i32 to vector<2x8xi32>
    %1034 = arith.select %1032, %835, %1033 : vector<2x8xi1>, vector<2x8xi32>
    %cst_184 = arith.constant dense<0> : vector<2xi32>
    %1035 = vector.multi_reduction <add>, %1034, %cst_184 [1] : vector<2x8xi32> to vector<2xi32>
    %1036 = vector.shape_cast %1035 : vector<2xi32> to vector<2x1xi32>
    %1037 = vector.broadcast %1036 : vector<2x1xi32> to vector<2x8xi32>
    %1038 = arith.cmpi eq, %1018, %1037 : vector<2x8xi32>
    %c0_i32_185 = arith.constant 0 : i32
    %1039 = vector.broadcast %c0_i32_185 : i32 to vector<2x8xi32>
    %1040 = arith.select %1038, %764, %1039 : vector<2x8xi1>, vector<2x8xi32>
    %cst_186 = arith.constant dense<0> : vector<2xi32>
    %1041 = vector.multi_reduction <add>, %1040, %cst_186 [1] : vector<2x8xi32> to vector<2xi32>
    %1042 = vector.shape_cast %1041 : vector<2xi32> to vector<2x1xi32>
    %1043 = vector.broadcast %1042 : vector<2x1xi32> to vector<2x8xi32>
    %1044 = arith.cmpi eq, %1018, %1043 : vector<2x8xi32>
    %c0_i32_187 = arith.constant 0 : i32
    %1045 = vector.broadcast %c0_i32_187 : i32 to vector<2x8xi32>
    %1046 = arith.select %1044, %693, %1045 : vector<2x8xi1>, vector<2x8xi32>
    %cst_188 = arith.constant dense<0> : vector<2xi32>
    %1047 = vector.multi_reduction <add>, %1046, %cst_188 [1] : vector<2x8xi32> to vector<2xi32>
    %1048 = vector.shape_cast %1047 : vector<2xi32> to vector<2x1xi32>
    %1049 = vector.broadcast %1048 : vector<2x1xi32> to vector<2x8xi32>
    %1050 = arith.cmpi eq, %1018, %1049 : vector<2x8xi32>
    %c0_i32_189 = arith.constant 0 : i32
    %1051 = vector.broadcast %c0_i32_189 : i32 to vector<2x8xi32>
    %1052 = arith.select %1050, %622, %1051 : vector<2x8xi1>, vector<2x8xi32>
    %cst_190 = arith.constant dense<0> : vector<2xi32>
    %1053 = vector.multi_reduction <add>, %1052, %cst_190 [1] : vector<2x8xi32> to vector<2xi32>
    %1054 = vector.shape_cast %1053 : vector<2xi32> to vector<2x1xi32>
    %1055 = vector.broadcast %1054 : vector<2x1xi32> to vector<2x8xi32>
    %1056 = arith.cmpi eq, %1018, %1055 : vector<2x8xi32>
    %c0_i32_191 = arith.constant 0 : i32
    %1057 = vector.broadcast %c0_i32_191 : i32 to vector<2x8xi32>
    %1058 = arith.select %1056, %551, %1057 : vector<2x8xi1>, vector<2x8xi32>
    %cst_192 = arith.constant dense<0> : vector<2xi32>
    %1059 = vector.multi_reduction <add>, %1058, %cst_192 [1] : vector<2x8xi32> to vector<2xi32>
    %1060 = vector.shape_cast %1059 : vector<2xi32> to vector<2x1xi32>
    %1061 = tpu.concatenate %1060, %1054, %1048, %1042, %1036, %1030, %1024, %1017 in 1 : vector<2x1xi32>, vector<2x1xi32>, vector<2x1xi32>, vector<2x1xi32>, vector<2x1xi32>, vector<2x1xi32>, vector<2x1xi32>, vector<2x1xi32> -> vector<2x8xi32>
    %c0_193 = arith.constant 0 : index
    %c0_194 = arith.constant 0 : index
    %1062 = vector.load %arg14[%c0_193, %c0_194] : memref<2x8xi32, #tpu.memory_space<vmem>>, vector<2x8xi32>
    tpu.vector_store %arg14[%c0_193, %c0_194], %1061 {strides = array<i32>} : memref<2x8xi32, #tpu.memory_space<vmem>>, vector<2x8xi32>,
    return
  }
}

</mosaic_0001>

<llo_original>
// kernel: lstm_crf_forward.1
$region0: #{lstm_crf_forward.1}
  #allocation0 [shape = 'u32[]', space=smem, size = 0x4, offset = 0x4, fixed_abs, tag = 'smem constant byte address 0x4 - core index']
  #allocation1 [shape = 'u32[144,128]{1,0:T(1,128)}', space=vmem, size = 0x12000, scoped, tag = 'internal scratch']
  %s0 = inlined_call_operand.vmem [shape: f32[16,32], index: 0, kind: input, shape index: {}]
  %s1 = inlined_call_operand.vmem [shape: f32[1,32], index: 1, kind: input, shape index: {}]
  %s2 = inlined_call_operand.vmem [shape: f32[1,32], index: 2, kind: input, shape index: {}]
  %s3 = inlined_call_operand.vmem [shape: bf16[32,128], index: 3, kind: input, shape index: {}]
  %s4 = inlined_call_operand.vmem [shape: f32[1,128], index: 4, kind: input, shape index: {}]
  %s5 = inlined_call_operand.vmem [shape: f32[1,128], index: 5, kind: input, shape index: {}]
  %s6 = inlined_call_operand.vmem [shape: f32[32,128], index: 6, kind: input, shape index: {}]
  %s7 = inlined_call_operand.vmem [shape: bf16[32,8], index: 7, kind: input, shape index: {}]
  %s8 = inlined_call_operand.vmem [shape: f32[1,8], index: 8, kind: input, shape index: {}]
  %s9 = inlined_call_operand.vmem [shape: f32[8,2,8], index: 9, kind: input, shape index: {}]
  %s10 = inlined_call_operand.vmem [shape: f32[1,8], index: 10, kind: input, shape index: {}]
  %s11 = inlined_call_operand.vmem [shape: f32[1,8], index: 11, kind: input, shape index: {}]
  %s12 = inlined_call_operand.vmem [shape: f32[8,8], index: 12, kind: input, shape index: {}]
  %s13 = inlined_call_operand.hbm [shape: f32[1,1], index: 13, kind: output, shape index: {0}]
  %s14 = inlined_call_operand.vmem [shape: s32[2,8], index: 14, kind: output, shape index: {1}]
  %15 = xla_tuple %s13, %s14
  %s16 = sld [smem:[#allocation0]]
  $region70: #{lstm_crf_forward.1} parent=0
    _
  %s18 = ssub.s32 1, %s16
  %s19 = scalar_select 0, %s18, %s16
  $region1: #{lstm_crf_forward.1} parent=0
    #allocation2 [shape = 'u8[512]{0}', space=vmem, size = 0x400, scoped, tag = 'output window, operand 0, single buffered']
    #allocation3 [shape = 's32[1]{0}', space=sflag, size = 0x4, scoped, tag = 'scoped memory for lstm_crf_forward.1']
    %20 = vsyncpa [#allocation3], 0
    // Predicated region
    $region2: #{lstm_crf_forward.1} parent=1 // pred_check
      _
    $region3: #{lstm_crf_forward.1} parent=1 // pred_check_branch
      %22 = sbr.rel (0) target = $region5
    $region4: #{lstm_crf_forward.1} parent=1 // pred_region
      _
    $region5: #{lstm_crf_forward.1} parent=1 // pred_fallthru
      _
    // Predicated region
    $region6: #{lstm_crf_forward.1} parent=1 // pred_check
      _
    $region7: #{lstm_crf_forward.1} parent=1 // pred_check_branch
      %24 = sbr.rel (0) target = $region9
    $region8: #{lstm_crf_forward.1} parent=1 // pred_region
      _
    $region9: #{lstm_crf_forward.1} parent=1 // pred_fallthru
      _
    // Predicated region
    $region10: #{lstm_crf_forward.1} parent=1 // pred_check
      _
    $region11: #{lstm_crf_forward.1} parent=1 // pred_check_branch
      %26 = sbr.rel (0) target = $region13
    $region12: #{lstm_crf_forward.1} parent=1 // pred_region
      _
    $region13: #{lstm_crf_forward.1} parent=1 // pred_fallthru
      _
    // Predicated region
    $region14: #{lstm_crf_forward.1} parent=1 // pred_check
      _
    $region15: #{lstm_crf_forward.1} parent=1 // pred_check_branch
      %28 = sbr.rel (0) target = $region17
    $region16: #{lstm_crf_forward.1} parent=1 // pred_region
      _
    $region17: #{lstm_crf_forward.1} parent=1 // pred_fallthru
      _
    // Predicated region
    $region18: #{lstm_crf_forward.1} parent=1 // pred_check
      _
    $region19: #{lstm_crf_forward.1} parent=1 // pred_check_branch
      %30 = sbr.rel (0) target = $region21
    $region20: #{lstm_crf_forward.1} parent=1 // pred_region
      _
    $region21: #{lstm_crf_forward.1} parent=1 // pred_fallthru
      _
    // Predicated region
    $region22: #{lstm_crf_forward.1} parent=1 // pred_check
      _
    $region23: #{lstm_crf_forward.1} parent=1 // pred_check_branch
      %32 = sbr.rel (0) target = $region25
    $region24: #{lstm_crf_forward.1} parent=1 // pred_region
      _
    $region25: #{lstm_crf_forward.1} parent=1 // pred_fallthru
      _
    // Predicated region
    $region26: #{lstm_crf_forward.1} parent=1 // pred_check
      _
    $region27: #{lstm_crf_forward.1} parent=1 // pred_check_branch
      %34 = sbr.rel (0) target = $region29
    $region28: #{lstm_crf_forward.1} parent=1 // pred_region
      _
    $region29: #{lstm_crf_forward.1} parent=1 // pred_fallthru
      _
    // Predicated region
    $region30: #{lstm_crf_forward.1} parent=1 // pred_check
      _
    $region31: #{lstm_crf_forward.1} parent=1 // pred_check_branch
      %36 = sbr.rel (0) target = $region33
    $region32: #{lstm_crf_forward.1} parent=1 // pred_region
      _
    $region33: #{lstm_crf_forward.1} parent=1 // pred_fallthru
      _
    // Predicated region
    $region34: #{lstm_crf_forward.1} parent=1 // pred_check
      _
    $region35: #{lstm_crf_forward.1} parent=1 // pred_check_branch
      %38 = sbr.rel (0) target = $region37
    $region36: #{lstm_crf_forward.1} parent=1 // pred_region
      _
    $region37: #{lstm_crf_forward.1} parent=1 // pred_fallthru
      _
    // Predicated region
    $region38: #{lstm_crf_forward.1} parent=1 // pred_check
      _
    $region39: #{lstm_crf_forward.1} parent=1 // pred_check_branch
      %40 = sbr.rel (0) target = $region41
    $region40: #{lstm_crf_forward.1} parent=1 // pred_region
      _
    $region41: #{lstm_crf_forward.1} parent=1 // pred_fallthru
      _
    // Predicated region
    $region42: #{lstm_crf_forward.1} parent=1 // pred_check
      _
    $region43: #{lstm_crf_forward.1} parent=1 // pred_check_branch
      %42 = sbr.rel (0) target = $region45
    $region44: #{lstm_crf_forward.1} parent=1 // pred_region
      _
    $region45: #{lstm_crf_forward.1} parent=1 // pred_fallthru
      _
    // Predicated region
    $region46: #{lstm_crf_forward.1} parent=1 // pred_check
      _
    $region47: #{lstm_crf_forward.1} parent=1 // pred_check_branch
      %44 = sbr.rel (0) target = $region49
    $region48: #{lstm_crf_forward.1} parent=1 // pred_region
      _
    $region49: #{lstm_crf_forward.1} parent=1 // pred_fallthru
      _
    // Predicated region
    $region50: #{lstm_crf_forward.1} parent=1 // pred_check
      _
    $region51: #{lstm_crf_forward.1} parent=1 // pred_check_branch
      %46 = sbr.rel (0) target = $region53
    $region52: #{lstm_crf_forward.1} parent=1 // pred_region
      _
    $region53: #{lstm_crf_forward.1} parent=1 // pred_fallthru
      _
    %v48 = vld [vmem:[%s0] sm:$0xff]
    %v49 = vld [vmem:[%s0 + $0x8] sm:$0xff]
    %vm50 = vcmask 261120
    %v51 = vsel %vm50, %v48, 0.0
    %52 = vadd.xlane.f32.xlu0 %v51
    %v53 = vpop.xlane.xlu0 %52
    %v54 = vsel %vm50, %v49, 0.0
    %55 = vadd.xlane.f32.xlu0 %v54
    %v56 = vpop.xlane.xlu0 %55
    %v57 = vrcp.pop 32.0
    %v58 = vmul.f32 %v53, %v57
    %v59 = vmul.f32 %v56, %v57
    %v60 = vsub.f32 %v48, %v58
    %v61 = vsub.f32 %v49, %v59
    %v62 = vmul.f32 %v60, %v60
    %v63 = vmul.f32 %v61, %v61
    %v64 = vsel %vm50, %v62, 0.0
    %65 = vadd.xlane.f32.xlu0 %v64
    %v66 = vpop.xlane.xlu0 %65
    %v67 = vsel %vm50, %v63, 0.0
    %68 = vadd.xlane.f32.xlu0 %v67
    %v69 = vpop.xlane.xlu0 %68
    %v70 = vmul.f32 %v66, %v57
    %v71 = vmul.f32 %v69, %v57
    %v72 = vadd.f32 %v70, 1e-06
    %v73 = vadd.f32 %v71, 1e-06
    %v74 = vrsqrt.pop %v72
    %v75 = vrsqrt.pop %v73
    %v76 = vmul.f32 %v60, %v74
    %v77 = vmul.f32 %v61, %v75
    %v78 = vld [vmem:[%s1] sm:$0x1]
    %v80 = vlaneseq
    %v81 = vshrl.u32 %v80, 7
    %v82 = vsub.s32 0, %v81
    %v83 = vrot.slane %v78, %v82
    %v85 = vmul.f32 %v76, %v83
    %v86 = vmul.f32 %v77, %v83
    %v87 = vld [vmem:[%s2] sm:$0x1]
    %v89 = vlaneseq
    %v90 = vshrl.u32 %v89, 7
    %v91 = vsub.s32 0, %v90
    %v92 = vrot.slane %v87, %v91
    %v94 = vadd.f32 %v85, %v92
    %v95 = vadd.f32 %v86, %v92
    %v96 = vpack.c.bf16 %v95, %v94
    %v97 = vld [vmem:[%s3] sm:$0xf]
    %v98 = vld [vmem:[%s3 + $0x4] sm:$0xf]
    %v99 = vld [vmem:[%s3 + $0x8] sm:$0xf]
    %v100 = vld [vmem:[%s3 + $0xc] sm:$0xf]
    %v101 = vld [vmem:[%s4] sm:$0x1]
    %v103 = vlaneseq
    %v104 = vshrl.u32 %v103, 7
    %v105 = vsub.s32 0, %v104
    %v106 = vrot.slane %v101, %v105
    %v112 = vunpack.c.l.b16 %v97
    %v113 = vunpack.c.l.b16 %v98
    %v114 = vunpack.c.l.b16 %v99
    %v115 = vunpack.c.l.b16 %v100
    %v116 = vpack.c.b16 %v113, %v112
    %v117 = vpack.c.b16 %v115, %v114
    %v121 = vsel %vm50, %v96, 0
    %123 = vmatprep.subr.bf16.mxu0 0
    %124 = vmatpush1.bf16.msra.mxu0 0
    %125 = vmatprep.subr.bf16.mxu0 0
    %126 = vmatpush1.bf16.msra.mxu0 0
    %127 = vmatprep.subr.bf16.mxu0 0
    %128 = vmatpush1.bf16.msra.mxu0 0
    %129 = vmatprep.subr.bf16.mxu0 0
    %130 = vmatpush1.bf16.msra.mxu0 0
    %131 = vmatprep.subr.bf16.mxu0 0
    %132 = vmatpush1.bf16.msra.mxu0 0
    %133 = vmatprep.subr.bf16.mxu0 0
    %134 = vmatpush1.bf16.msra.mxu0 0
    %135 = vmatprep.subr.bf16.mxu0 0
    %136 = vmatpush1.bf16.msra.mxu0 %v117
    %137 = vmatprep.subr.bf16.mxu0 0
    %138 = vmatpush1.bf16.msra.mxu0 %v116
    %139 = vmatprep.subr.bf16.mxu0 0
    %140 = vmatpush2.bf16.msra.mxu0 0
    %141 = vmatprep.subr.bf16.mxu0 0
    %142 = vmatpush2.bf16.msra.mxu0 0
    %143 = vmatprep.subr.bf16.mxu0 0
    %144 = vmatpush2.bf16.msra.mxu0 0
    %145 = vmatprep.subr.bf16.mxu0 0
    %146 = vmatpush2.bf16.msra.mxu0 0
    %147 = vmatprep.subr.bf16.mxu0 0
    %148 = vmatpush2.bf16.msra.mxu0 0
    %149 = vmatprep.subr.bf16.mxu0 0
    %150 = vmatpush2.bf16.msra.mxu0 0
    %151 = vmatprep.subr.bf16.mxu0 0
    %152 = vmatpush2.bf16.msra.mxu0 0
    %153 = vmatprep.subr.bf16.mxu0 0
    %154 = vmatpush2.bf16.msra.mxu0 0
    %155 = vmatprep.mubr.bf16.mxu0 0
    %156 = vmatmul.mubr.bf16.gmra.mxu0 %v121
    %v157 = vpop.f32.mrf.mxu0
    %v158 = vadd.f32 %v106, %v157
    %v159 = vpop.f32.mrf.mxu0
    %v160 = vpop.f32.mrf.mxu0
    %v161 = vadd.f32 %v106, %v160
    %v162 = vpop.f32.mrf.mxu0
    %163 = vdwg.mxu0
    %v164 = vld [vmem:[%s5] sm:$0x1]
    %vm165 = vcmp.gt.f32.partialorder %v164, 0.5
    %v166 = vsel %vm165, 1, 0
    %v167 = vlaneseq
    %v168 = vshrl.u32 %v167, 7
    %v169 = vsub.s32 0, %v168
    %v170 = vrot.slane %v166, %v169
    %vm171 = vcmp.eq.s32.totalorder %v170, 1
    %v173 = vrot.slane %v161, 6
    %v175 = vsel %vm171, %v158, %v173
    %v176 = vrot.slane %v161, 2
    %v178 = vsel %vm171, %v158, %v176
    %v180 = vrot.slane %v158, 6
    %v182 = vsel %vm171, %v161, %v180
    %v183 = vrot.slane %v158, 2
    %v185 = vsel %vm171, %v161, %v183
    %v186 = vld [vmem:[%s6] sm:$0xff]
    %v187 = vld [vmem:[%s6 + $0x8] sm:$0xff]
    %v188 = vld [vmem:[%s6 + $0x10] sm:$0xff]
    %v189 = vld [vmem:[%s6 + $0x18] sm:$0xff]
    %v191 = vsel %vm50, 0.0, 0
    %193 = vmatprep.subr.mxu0 0.0
    %194 = vmatpush1.msra.mxu0 0.0
    %195 = vmatprep.subr.mxu0 0.0
    %196 = vmatpush1.msra.mxu0 0.0
    %197 = vmatprep.subr.mxu0 0.0
    %198 = vmatpush1.msra.mxu0 0.0
    %199 = vmatprep.subr.mxu0 0.0
    %200 = vmatpush1.msra.mxu0 0.0
    %201 = vmatprep.subr.mxu0 0.0
    %202 = vmatpush1.msra.mxu0 0.0
    %203 = vmatprep.subr.mxu0 0.0
    %204 = vmatpush1.msra.mxu0 0.0
    %205 = vmatprep.subr.mxu0 0.0
    %206 = vmatpush1.msra.mxu0 0.0
    %207 = vmatprep.subr.mxu0 0.0
    %208 = vmatpush1.msra.mxu0 0.0
    %209 = vmatprep.subr.mxu0 0.0
    %210 = vmatpush1.msra.mxu0 0.0
    %211 = vmatprep.subr.mxu0 0.0
    %212 = vmatpush1.msra.mxu0 0.0
    %213 = vmatprep.subr.mxu0 0.0
    %214 = vmatpush1.msra.mxu0 0.0
    %215 = vmatprep.subr.mxu0 0.0
    %216 = vmatpush1.msra.mxu0 0.0
    %217 = vmatprep.subr.mxu0 0.0
    %218 = vmatpush1.msra.mxu0 %v189
    %219 = vmatprep.subr.mxu0 0.0
    %220 = vmatpush1.msra.mxu0 %v188
    %221 = vmatprep.subr.mxu0 0.0
    %222 = vmatpush1.msra.mxu0 %v187
    %223 = vmatprep.subr.mxu0 0.0
    %224 = vmatpush1.msra.mxu0 %v186
    %225 = vmatprep.subr.mxu0 0.0
    %226 = vmatpush2.msra.mxu0 0.0
    %227 = vmatprep.subr.mxu0 0.0
    %228 = vmatpush2.msra.mxu0 0.0
    %229 = vmatprep.subr.mxu0 0.0
    %230 = vmatpush2.msra.mxu0 0.0
    %231 = vmatprep.subr.mxu0 0.0
    %232 = vmatpush2.msra.mxu0 0.0
    %233 = vmatprep.subr.mxu0 0.0
    %234 = vmatpush2.msra.mxu0 0.0
    %235 = vmatprep.subr.mxu0 0.0
    %236 = vmatpush2.msra.mxu0 0.0
    %237 = vmatprep.subr.mxu0 0.0
    %238 = vmatpush2.msra.mxu0 0.0
    %239 = vmatprep.subr.mxu0 0.0
    %240 = vmatpush2.msra.mxu0 0.0
    %241 = vmatprep.subr.mxu0 0.0
    %242 = vmatpush2.msra.mxu0 0.0
    %243 = vmatprep.subr.mxu0 0.0
    %244 = vmatpush2.msra.mxu0 0.0
    %245 = vmatprep.subr.mxu0 0.0
    %246 = vmatpush2.msra.mxu0 0.0
    %247 = vmatprep.subr.mxu0 0.0
    %248 = vmatpush2.msra.mxu0 0.0
    %249 = vmatprep.subr.mxu0 0.0
    %250 = vmatpush2.msra.mxu0 0.0
    %251 = vmatprep.subr.mxu0 0.0
    %252 = vmatpush2.msra.mxu0 0.0
    %253 = vmatprep.subr.mxu0 0.0
    %254 = vmatpush2.msra.mxu0 0.0
    %255 = vmatprep.subr.mxu0 0.0
    %256 = vmatpush2.msra.mxu0 0.0
    %257 = vmatprep.mubr.f32.mxu0 0.0
    %258 = vmatmul.mubr.f32.gmra.mxu0 %v191
    %v259 = vpop.f32.mrf.mxu0
    %v260 = vadd.f32 0.0, %v259
    %v261 = vpop.f32.mrf.mxu0
    %262 = vdwg.mxu0
    %v263 = vadd.f32 %v175, %v260
    %v264 = vxor.u32 %v263, 2147483648
    %v265 = vmul.f32 %v264, 1.442695
    %v266 = vpow.pop %v265
    %v267 = vadd.f32 %v266, 1.0
    %v268 = vrcp.pop %v267
    %v269 = vmul.f32 1.0, %v268
    %v270 = vtanh.pop %v263
    %v271 = vmul.f32 %v269, 0.0
    %273 = vrot.lane.b32.xlu0 %v270, 32
    %v274 = vpop.permute.xlu0 %273
    %v276 = vmul.f32 %v269, %v274
    %278 = vrot.lane.b32.xlu0 %v276, 32
    %v279 = vpop.permute.xlu0 %278
    %v281 = vadd.f32 %v271, %v279
    %v282 = vtanh.pop %v281
    %284 = vrot.lane.b32.xlu0 %v282, 32
    %v285 = vpop.permute.xlu0 %284
    %v287 = vmul.f32 %v269, %v285
    %289 = vrot.lane.b32.xlu0 %v287, 64
    %v290 = vpop.permute.xlu0 %289
    %v291 = vsel %vm50, %v290, 0
    %293 = vmatprep.subr.mxu0 0.0
    %294 = vmatpush1.msra.mxu0 0.0
    %295 = vmatprep.subr.mxu0 0.0
    %296 = vmatpush1.msra.mxu0 0.0
    %297 = vmatprep.subr.mxu0 0.0
    %298 = vmatpush1.msra.mxu0 0.0
    %299 = vmatprep.subr.mxu0 0.0
    %300 = vmatpush1.msra.mxu0 0.0
    %301 = vmatprep.subr.mxu0 0.0
    %302 = vmatpush1.msra.mxu0 0.0
    %303 = vmatprep.subr.mxu0 0.0
    %304 = vmatpush1.msra.mxu0 0.0
    %305 = vmatprep.subr.mxu0 0.0
    %306 = vmatpush1.msra.mxu0 0.0
    %307 = vmatprep.subr.mxu0 0.0
    %308 = vmatpush1.msra.mxu0 0.0
    %309 = vmatprep.subr.mxu0 0.0
    %310 = vmatpush1.msra.mxu0 0.0
    %311 = vmatprep.subr.mxu0 0.0
    %312 = vmatpush1.msra.mxu0 0.0
    %313 = vmatprep.subr.mxu0 0.0
    %314 = vmatpush1.msra.mxu0 0.0
    %315 = vmatprep.subr.mxu0 0.0
    %316 = vmatpush1.msra.mxu0 0.0
    %317 = vmatprep.subr.mxu0 0.0
    %318 = vmatpush1.msra.mxu0 %v189
    %319 = vmatprep.subr.mxu0 0.0
    %320 = vmatpush1.msra.mxu0 %v188
    %321 = vmatprep.subr.mxu0 0.0
    %322 = vmatpush1.msra.mxu0 %v187
    %323 = vmatprep.subr.mxu0 0.0
    %324 = vmatpush1.msra.mxu0 %v186
    %325 = vmatprep.subr.mxu0 0.0
    %326 = vmatpush2.msra.mxu0 0.0
    %327 = vmatprep.subr.mxu0 0.0
    %328 = vmatpush2.msra.mxu0 0.0
    %329 = vmatprep.subr.mxu0 0.0
    %330 = vmatpush2.msra.mxu0 0.0
    %331 = vmatprep.subr.mxu0 0.0
    %332 = vmatpush2.msra.mxu0 0.0
    %333 = vmatprep.subr.mxu0 0.0
    %334 = vmatpush2.msra.mxu0 0.0
    %335 = vmatprep.subr.mxu0 0.0
    %336 = vmatpush2.msra.mxu0 0.0
    %337 = vmatprep.subr.mxu0 0.0
    %338 = vmatpush2.msra.mxu0 0.0
    %339 = vmatprep.subr.mxu0 0.0
    %340 = vmatpush2.msra.mxu0 0.0
    %341 = vmatprep.subr.mxu0 0.0
    %342 = vmatpush2.msra.mxu0 0.0
    %343 = vmatprep.subr.mxu0 0.0
    %344 = vmatpush2.msra.mxu0 0.0
    %345 = vmatprep.subr.mxu0 0.0
    %346 = vmatpush2.msra.mxu0 0.0
    %347 = vmatprep.subr.mxu0 0.0
    %348 = vmatpush2.msra.mxu0 0.0
    %349 = vmatprep.subr.mxu0 0.0
    %350 = vmatpush2.msra.mxu0 0.0
    %351 = vmatprep.subr.mxu0 0.0
    %352 = vmatpush2.msra.mxu0 0.0
    %353 = vmatprep.subr.mxu0 0.0
    %354 = vmatpush2.msra.mxu0 0.0
    %355 = vmatprep.subr.mxu0 0.0
    %356 = vmatpush2.msra.mxu0 0.0
    %357 = vmatprep.mubr.f32.mxu0 0.0
    %358 = vmatmul.mubr.f32.gmra.mxu0 %v291
    %v359 = vpop.f32.mrf.mxu0
    %v360 = vadd.f32 0.0, %v359
    %v361 = vpop.f32.mrf.mxu0
    %362 = vdwg.mxu0
    %v364 = vrot.slane %v360, 6
    %v366 = vadd.f32 %v178, %v364
    %v367 = vxor.u32 %v366, 2147483648
    %v368 = vmul.f32 %v367, 1.442695
    %v369 = vpow.pop %v368
    %v370 = vadd.f32 %v369, 1.0
    %v371 = vrcp.pop %v370
    %v372 = vmul.f32 1.0, %v371
    %v373 = vtanh.pop %v366
    %v375 = vrot.slane %v281, 6
    %v377 = vmul.f32 %v372, %v375
    %379 = vrot.lane.b32.xlu0 %v373, 32
    %v380 = vpop.permute.xlu0 %379
    %v382 = vmul.f32 %v372, %v380
    %384 = vrot.lane.b32.xlu0 %v382, 32
    %v385 = vpop.permute.xlu0 %384
    %v387 = vadd.f32 %v377, %v385
    %v388 = vtanh.pop %v387
    %390 = vrot.lane.b32.xlu0 %v388, 32
    %v391 = vpop.permute.xlu0 %390
    %v393 = vmul.f32 %v372, %v391
    %v395 = vrot.slane %v393, 2
    %396 = vrot.lane.b32.xlu0 %v395, 64
    %v397 = vpop.permute.xlu0 %396
    %v398 = vsel %vm50, %v397, 0
    %400 = vmatprep.subr.mxu0 0.0
    %401 = vmatpush1.msra.mxu0 0.0
    %402 = vmatprep.subr.mxu0 0.0
    %403 = vmatpush1.msra.mxu0 0.0
    %404 = vmatprep.subr.mxu0 0.0
    %405 = vmatpush1.msra.mxu0 0.0
    %406 = vmatprep.subr.mxu0 0.0
    %407 = vmatpush1.msra.mxu0 0.0
    %408 = vmatprep.subr.mxu0 0.0
    %409 = vmatpush1.msra.mxu0 0.0
    %410 = vmatprep.subr.mxu0 0.0
    %411 = vmatpush1.msra.mxu0 0.0
    %412 = vmatprep.subr.mxu0 0.0
    %413 = vmatpush1.msra.mxu0 0.0
    %414 = vmatprep.subr.mxu0 0.0
    %415 = vmatpush1.msra.mxu0 0.0
    %416 = vmatprep.subr.mxu0 0.0
    %417 = vmatpush1.msra.mxu0 0.0
    %418 = vmatprep.subr.mxu0 0.0
    %419 = vmatpush1.msra.mxu0 0.0
    %420 = vmatprep.subr.mxu0 0.0
    %421 = vmatpush1.msra.mxu0 0.0
    %422 = vmatprep.subr.mxu0 0.0
    %423 = vmatpush1.msra.mxu0 0.0
    %424 = vmatprep.subr.mxu0 0.0
    %425 = vmatpush1.msra.mxu0 %v189
    %426 = vmatprep.subr.mxu0 0.0
    %427 = vmatpush1.msra.mxu0 %v188
    %428 = vmatprep.subr.mxu0 0.0
    %429 = vmatpush1.msra.mxu0 %v187
    %430 = vmatprep.subr.mxu0 0.0
    %431 = vmatpush1.msra.mxu0 %v186
    %432 = vmatprep.subr.mxu0 0.0
    %433 = vmatpush2.msra.mxu0 0.0
    %434 = vmatprep.subr.mxu0 0.0
    %435 = vmatpush2.msra.mxu0 0.0
    %436 = vmatprep.subr.mxu0 0.0
    %437 = vmatpush2.msra.mxu0 0.0
    %438 = vmatprep.subr.mxu0 0.0
    %439 = vmatpush2.msra.mxu0 0.0
    %440 = vmatprep.subr.mxu0 0.0
    %441 = vmatpush2.msra.mxu0 0.0
    %442 = vmatprep.subr.mxu0 0.0
    %443 = vmatpush2.msra.mxu0 0.0
    %444 = vmatprep.subr.mxu0 0.0
    %445 = vmatpush2.msra.mxu0 0.0
    %446 = vmatprep.subr.mxu0 0.0
    %447 = vmatpush2.msra.mxu0 0.0
    %448 = vmatprep.subr.mxu0 0.0
    %449 = vmatpush2.msra.mxu0 0.0
    %450 = vmatprep.subr.mxu0 0.0
    %451 = vmatpush2.msra.mxu0 0.0
    %452 = vmatprep.subr.mxu0 0.0
    %453 = vmatpush2.msra.mxu0 0.0
    %454 = vmatprep.subr.mxu0 0.0
    %455 = vmatpush2.msra.mxu0 0.0
    %456 = vmatprep.subr.mxu0 0.0
    %457 = vmatpush2.msra.mxu0 0.0
    %458 = vmatprep.subr.mxu0 0.0
    %459 = vmatpush2.msra.mxu0 0.0
    %460 = vmatprep.subr.mxu0 0.0
    %461 = vmatpush2.msra.mxu0 0.0
    %462 = vmatprep.subr.mxu0 0.0
    %463 = vmatpush2.msra.mxu0 0.0
    %464 = vmatprep.mubr.f32.mxu0 0.0
    %465 = vmatmul.mubr.f32.gmra.mxu0 %v398
    %v466 = vpop.f32.mrf.mxu0
    %v467 = vadd.f32 0.0, %v466
    %v468 = vpop.f32.mrf.mxu0
    %469 = vdwg.mxu0
    %v471 = vrot.slane %v467, 4
    %v473 = vadd.f32 %v175, %v471
    %v474 = vxor.u32 %v473, 2147483648
    %v475 = vmul.f32 %v474, 1.442695
    %v476 = vpow.pop %v475
    %v477 = vadd.f32 %v476, 1.0
    %v478 = vrcp.pop %v477
    %v479 = vmul.f32 1.0, %v478
    %v480 = vtanh.pop %v473
    %v482 = vrot.slane %v387, 6
    %v484 = vmul.f32 %v479, %v482
    %486 = vrot.lane.b32.xlu0 %v480, 32
    %v487 = vpop.permute.xlu0 %486
    %v489 = vmul.f32 %v479, %v487
    %491 = vrot.lane.b32.xlu0 %v489, 32
    %v492 = vpop.permute.xlu0 %491
    %v494 = vadd.f32 %v484, %v492
    %v495 = vtanh.pop %v494
    %497 = vrot.lane.b32.xlu0 %v495, 32
    %v498 = vpop.permute.xlu0 %497
    %v500 = vmul.f32 %v479, %v498
    %v502 = vrot.slane %v500, 4
    %503 = vrot.lane.b32.xlu0 %v502, 64
    %v504 = vpop.permute.xlu0 %503
    %v505 = vsel %vm50, %v504, 0
    %507 = vmatprep.subr.mxu0 0.0
    %508 = vmatpush1.msra.mxu0 0.0
    %509 = vmatprep.subr.mxu0 0.0
    %510 = vmatpush1.msra.mxu0 0.0
    %511 = vmatprep.subr.mxu0 0.0
    %512 = vmatpush1.msra.mxu0 0.0
    %513 = vmatprep.subr.mxu0 0.0
    %514 = vmatpush1.msra.mxu0 0.0
    %515 = vmatprep.subr.mxu0 0.0
    %516 = vmatpush1.msra.mxu0 0.0
    %517 = vmatprep.subr.mxu0 0.0
    %518 = vmatpush1.msra.mxu0 0.0
    %519 = vmatprep.subr.mxu0 0.0
    %520 = vmatpush1.msra.mxu0 0.0
    %521 = vmatprep.subr.mxu0 0.0
    %522 = vmatpush1.msra.mxu0 0.0
    %523 = vmatprep.subr.mxu0 0.0
    %524 = vmatpush1.msra.mxu0 0.0
    %525 = vmatprep.subr.mxu0 0.0
    %526 = vmatpush1.msra.mxu0 0.0
    %527 = vmatprep.subr.mxu0 0.0
    %528 = vmatpush1.msra.mxu0 0.0
    %529 = vmatprep.subr.mxu0 0.0
    %530 = vmatpush1.msra.mxu0 0.0
    %531 = vmatprep.subr.mxu0 0.0
    %532 = vmatpush1.msra.mxu0 %v189
    %533 = vmatprep.subr.mxu0 0.0
    %534 = vmatpush1.msra.mxu0 %v188
    %535 = vmatprep.subr.mxu0 0.0
    %536 = vmatpush1.msra.mxu0 %v187
    %537 = vmatprep.subr.mxu0 0.0
    %538 = vmatpush1.msra.mxu0 %v186
    %539 = vmatprep.subr.mxu0 0.0
    %540 = vmatpush2.msra.mxu0 0.0
    %541 = vmatprep.subr.mxu0 0.0
    %542 = vmatpush2.msra.mxu0 0.0
    %543 = vmatprep.subr.mxu0 0.0
    %544 = vmatpush2.msra.mxu0 0.0
    %545 = vmatprep.subr.mxu0 0.0
    %546 = vmatpush2.msra.mxu0 0.0
    %547 = vmatprep.subr.mxu0 0.0
    %548 = vmatpush2.msra.mxu0 0.0
    %549 = vmatprep.subr.mxu0 0.0
    %550 = vmatpush2.msra.mxu0 0.0
    %551 = vmatprep.subr.mxu0 0.0
    %552 = vmatpush2.msra.mxu0 0.0
    %553 = vmatprep.subr.mxu0 0.0
    %554 = vmatpush2.msra.mxu0 0.0
    %555 = vmatprep.subr.mxu0 0.0
    %556 = vmatpush2.msra.mxu0 0.0
    %557 = vmatprep.subr.mxu0 0.0
    %558 = vmatpush2.msra.mxu0 0.0
    %559 = vmatprep.subr.mxu0 0.0
    %560 = vmatpush2.msra.mxu0 0.0
    %561 = vmatprep.subr.mxu0 0.0
    %562 = vmatpush2.msra.mxu0 0.0
    %563 = vmatprep.subr.mxu0 0.0
    %564 = vmatpush2.msra.mxu0 0.0
    %565 = vmatprep.subr.mxu0 0.0
    %566 = vmatpush2.msra.mxu0 0.0
    %567 = vmatprep.subr.mxu0 0.0
    %568 = vmatpush2.msra.mxu0 0.0
    %569 = vmatprep.subr.mxu0 0.0
    %570 = vmatpush2.msra.mxu0 0.0
    %571 = vmatprep.mubr.f32.mxu0 0.0
    %572 = vmatmul.mubr.f32.gmra.mxu0 %v505
    %v573 = vpop.f32.mrf.mxu0
    %v574 = vadd.f32 0.0, %v573
    %v575 = vpop.f32.mrf.mxu0
    %576 = vdwg.mxu0
    %v578 = vrot.slane %v574, 2
    %v580 = vadd.f32 %v178, %v578
    %v581 = vxor.u32 %v580, 2147483648
    %v582 = vmul.f32 %v581, 1.442695
    %v583 = vpow.pop %v582
    %v584 = vadd.f32 %v583, 1.0
    %v585 = vrcp.pop %v584
    %v586 = vmul.f32 1.0, %v585
    %v587 = vtanh.pop %v580
    %v589 = vrot.slane %v494, 6
    %v591 = vmul.f32 %v586, %v589
    %593 = vrot.lane.b32.xlu0 %v587, 32
    %v594 = vpop.permute.xlu0 %593
    %v596 = vmul.f32 %v586, %v594
    %598 = vrot.lane.b32.xlu0 %v596, 32
    %v599 = vpop.permute.xlu0 %598
    %v601 = vadd.f32 %v591, %v599
    %v602 = vtanh.pop %v601
    %604 = vrot.lane.b32.xlu0 %v602, 32
    %v605 = vpop.permute.xlu0 %604
    %v607 = vmul.f32 %v586, %v605
    %v609 = vrot.slane %v607, 6
    %610 = vrot.lane.b32.xlu0 %v609, 64
    %v611 = vpop.permute.xlu0 %610
    %v612 = vsel %vm50, %v611, 0
    %614 = vmatprep.subr.mxu0 0.0
    %615 = vmatpush1.msra.mxu0 0.0
    %616 = vmatprep.subr.mxu0 0.0
    %617 = vmatpush1.msra.mxu0 0.0
    %618 = vmatprep.subr.mxu0 0.0
    %619 = vmatpush1.msra.mxu0 0.0
    %620 = vmatprep.subr.mxu0 0.0
    %621 = vmatpush1.msra.mxu0 0.0
    %622 = vmatprep.subr.mxu0 0.0
    %623 = vmatpush1.msra.mxu0 0.0
    %624 = vmatprep.subr.mxu0 0.0
    %625 = vmatpush1.msra.mxu0 0.0
    %626 = vmatprep.subr.mxu0 0.0
    %627 = vmatpush1.msra.mxu0 0.0
    %628 = vmatprep.subr.mxu0 0.0
    %629 = vmatpush1.msra.mxu0 0.0
    %630 = vmatprep.subr.mxu0 0.0
    %631 = vmatpush1.msra.mxu0 0.0
    %632 = vmatprep.subr.mxu0 0.0
    %633 = vmatpush1.msra.mxu0 0.0
    %634 = vmatprep.subr.mxu0 0.0
    %635 = vmatpush1.msra.mxu0 0.0
    %636 = vmatprep.subr.mxu0 0.0
    %637 = vmatpush1.msra.mxu0 0.0
    %638 = vmatprep.subr.mxu0 0.0
    %639 = vmatpush1.msra.mxu0 %v189
    %640 = vmatprep.subr.mxu0 0.0
    %641 = vmatpush1.msra.mxu0 %v188
    %642 = vmatprep.subr.mxu0 0.0
    %643 = vmatpush1.msra.mxu0 %v187
    %644 = vmatprep.subr.mxu0 0.0
    %645 = vmatpush1.msra.mxu0 %v186
    %646 = vmatprep.subr.mxu0 0.0
    %647 = vmatpush2.msra.mxu0 0.0
    %648 = vmatprep.subr.mxu0 0.0
    %649 = vmatpush2.msra.mxu0 0.0
    %650 = vmatprep.subr.mxu0 0.0
    %651 = vmatpush2.msra.mxu0 0.0
    %652 = vmatprep.subr.mxu0 0.0
    %653 = vmatpush2.msra.mxu0 0.0
    %654 = vmatprep.subr.mxu0 0.0
    %655 = vmatpush2.msra.mxu0 0.0
    %656 = vmatprep.subr.mxu0 0.0
    %657 = vmatpush2.msra.mxu0 0.0
    %658 = vmatprep.subr.mxu0 0.0
    %659 = vmatpush2.msra.mxu0 0.0
    %660 = vmatprep.subr.mxu0 0.0
    %661 = vmatpush2.msra.mxu0 0.0
    %662 = vmatprep.subr.mxu0 0.0
    %663 = vmatpush2.msra.mxu0 0.0
    %664 = vmatprep.subr.mxu0 0.0
    %665 = vmatpush2.msra.mxu0 0.0
    %666 = vmatprep.subr.mxu0 0.0
    %667 = vmatpush2.msra.mxu0 0.0
    %668 = vmatprep.subr.mxu0 0.0
    %669 = vmatpush2.msra.mxu0 0.0
    %670 = vmatprep.subr.mxu0 0.0
    %671 = vmatpush2.msra.mxu0 0.0
    %672 = vmatprep.subr.mxu0 0.0
    %673 = vmatpush2.msra.mxu0 0.0
    %674 = vmatprep.subr.mxu0 0.0
    %675 = vmatpush2.msra.mxu0 0.0
    %676 = vmatprep.subr.mxu0 0.0
    %677 = vmatpush2.msra.mxu0 0.0
    %678 = vmatprep.mubr.f32.mxu0 0.0
    %679 = vmatmul.mubr.f32.gmra.mxu0 %v612
    %v680 = vpop.f32.mrf.mxu0
    %v681 = vadd.f32 0.0, %v680
    %v682 = vpop.f32.mrf.mxu0
    %683 = vdwg.mxu0
    %v684 = vadd.f32 %v182, %v681
    %v685 = vxor.u32 %v684, 2147483648
    %v686 = vmul.f32 %v685, 1.442695
    %v687 = vpow.pop %v686
    %v688 = vadd.f32 %v687, 1.0
    %v689 = vrcp.pop %v688
    %v690 = vmul.f32 1.0, %v689
    %v691 = vtanh.pop %v684
    %v693 = vrot.slane %v601, 6
    %v695 = vmul.f32 %v690, %v693
    %697 = vrot.lane.b32.xlu0 %v691, 32
    %v698 = vpop.permute.xlu0 %697
    %v700 = vmul.f32 %v690, %v698
    %702 = vrot.lane.b32.xlu0 %v700, 32
    %v703 = vpop.permute.xlu0 %702
    %v705 = vadd.f32 %v695, %v703
    %v706 = vtanh.pop %v705
    %708 = vrot.lane.b32.xlu0 %v706, 32
    %v709 = vpop.permute.xlu0 %708
    %v711 = vmul.f32 %v690, %v709
    %713 = vrot.lane.b32.xlu0 %v711, 64
    %v714 = vpop.permute.xlu0 %713
    %v715 = vsel %vm50, %v714, 0
    %717 = vmatprep.subr.mxu0 0.0
    %718 = vmatpush1.msra.mxu0 0.0
    %719 = vmatprep.subr.mxu0 0.0
    %720 = vmatpush1.msra.mxu0 0.0
    %721 = vmatprep.subr.mxu0 0.0
    %722 = vmatpush1.msra.mxu0 0.0
    %723 = vmatprep.subr.mxu0 0.0
    %724 = vmatpush1.msra.mxu0 0.0
    %725 = vmatprep.subr.mxu0 0.0
    %726 = vmatpush1.msra.mxu0 0.0
    %727 = vmatprep.subr.mxu0 0.0
    %728 = vmatpush1.msra.mxu0 0.0
    %729 = vmatprep.subr.mxu0 0.0
    %730 = vmatpush1.msra.mxu0 0.0
    %731 = vmatprep.subr.mxu0 0.0
    %732 = vmatpush1.msra.mxu0 0.0
    %733 = vmatprep.subr.mxu0 0.0
    %734 = vmatpush1.msra.mxu0 0.0
    %735 = vmatprep.subr.mxu0 0.0
    %736 = vmatpush1.msra.mxu0 0.0
    %737 = vmatprep.subr.mxu0 0.0
    %738 = vmatpush1.msra.mxu0 0.0
    %739 = vmatprep.subr.mxu0 0.0
    %740 = vmatpush1.msra.mxu0 0.0
    %741 = vmatprep.subr.mxu0 0.0
    %742 = vmatpush1.msra.mxu0 %v189
    %743 = vmatprep.subr.mxu0 0.0
    %744 = vmatpush1.msra.mxu0 %v188
    %745 = vmatprep.subr.mxu0 0.0
    %746 = vmatpush1.msra.mxu0 %v187
    %747 = vmatprep.subr.mxu0 0.0
    %748 = vmatpush1.msra.mxu0 %v186
    %749 = vmatprep.subr.mxu0 0.0
    %750 = vmatpush2.msra.mxu0 0.0
    %751 = vmatprep.subr.mxu0 0.0
    %752 = vmatpush2.msra.mxu0 0.0
    %753 = vmatprep.subr.mxu0 0.0
    %754 = vmatpush2.msra.mxu0 0.0
    %755 = vmatprep.subr.mxu0 0.0
    %756 = vmatpush2.msra.mxu0 0.0
    %757 = vmatprep.subr.mxu0 0.0
    %758 = vmatpush2.msra.mxu0 0.0
    %759 = vmatprep.subr.mxu0 0.0
    %760 = vmatpush2.msra.mxu0 0.0
    %761 = vmatprep.subr.mxu0 0.0
    %762 = vmatpush2.msra.mxu0 0.0
    %763 = vmatprep.subr.mxu0 0.0
    %764 = vmatpush2.msra.mxu0 0.0
    %765 = vmatprep.subr.mxu0 0.0
    %766 = vmatpush2.msra.mxu0 0.0
    %767 = vmatprep.subr.mxu0 0.0
    %768 = vmatpush2.msra.mxu0 0.0
    %769 = vmatprep.subr.mxu0 0.0
    %770 = vmatpush2.msra.mxu0 0.0
    %771 = vmatprep.subr.mxu0 0.0
    %772 = vmatpush2.msra.mxu0 0.0
    %773 = vmatprep.subr.mxu0 0.0
    %774 = vmatpush2.msra.mxu0 0.0
    %775 = vmatprep.subr.mxu0 0.0
    %776 = vmatpush2.msra.mxu0 0.0
    %777 = vmatprep.subr.mxu0 0.0
    %778 = vmatpush2.msra.mxu0 0.0
    %779 = vmatprep.subr.mxu0 0.0
    %780 = vmatpush2.msra.mxu0 0.0
    %781 = vmatprep.mubr.f32.mxu0 0.0
    %782 = vmatmul.mubr.f32.gmra.mxu0 %v715
    %v783 = vpop.f32.mrf.mxu0
    %v784 = vadd.f32 0.0, %v783
    %v785 = vpop.f32.mrf.mxu0
    %786 = vdwg.mxu0
    %v788 = vrot.slane %v784, 6
    %v790 = vadd.f32 %v185, %v788
    %v791 = vxor.u32 %v790, 2147483648
    %v792 = vmul.f32 %v791, 1.442695
    %v793 = vpow.pop %v792
    %v794 = vadd.f32 %v793, 1.0
    %v795 = vrcp.pop %v794
    %v796 = vmul.f32 1.0, %v795
    %v797 = vtanh.pop %v790
    %v799 = vrot.slane %v705, 6
    %v801 = vmul.f32 %v796, %v799
    %803 = vrot.lane.b32.xlu0 %v797, 32
    %v804 = vpop.permute.xlu0 %803
    %v806 = vmul.f32 %v796, %v804
    %808 = vrot.lane.b32.xlu0 %v806, 32
    %v809 = vpop.permute.xlu0 %808
    %v811 = vadd.f32 %v801, %v809
    %v812 = vtanh.pop %v811
    %814 = vrot.lane.b32.xlu0 %v812, 32
    %v815 = vpop.permute.xlu0 %814
    %v817 = vmul.f32 %v796, %v815
    %v819 = vrot.slane %v817, 2
    %820 = vrot.lane.b32.xlu0 %v819, 64
    %v821 = vpop.permute.xlu0 %820
    %v822 = vsel %vm50, %v821, 0
    %824 = vmatprep.subr.mxu0 0.0
    %825 = vmatpush1.msra.mxu0 0.0
    %826 = vmatprep.subr.mxu0 0.0
    %827 = vmatpush1.msra.mxu0 0.0
    %828 = vmatprep.subr.mxu0 0.0
    %829 = vmatpush1.msra.mxu0 0.0
    %830 = vmatprep.subr.mxu0 0.0
    %831 = vmatpush1.msra.mxu0 0.0
    %832 = vmatprep.subr.mxu0 0.0
    %833 = vmatpush1.msra.mxu0 0.0
    %834 = vmatprep.subr.mxu0 0.0
    %835 = vmatpush1.msra.mxu0 0.0
    %836 = vmatprep.subr.mxu0 0.0
    %837 = vmatpush1.msra.mxu0 0.0
    %838 = vmatprep.subr.mxu0 0.0
    %839 = vmatpush1.msra.mxu0 0.0
    %840 = vmatprep.subr.mxu0 0.0
    %841 = vmatpush1.msra.mxu0 0.0
    %842 = vmatprep.subr.mxu0 0.0
    %843 = vmatpush1.msra.mxu0 0.0
    %844 = vmatprep.subr.mxu0 0.0
    %845 = vmatpush1.msra.mxu0 0.0
    %846 = vmatprep.subr.mxu0 0.0
    %847 = vmatpush1.msra.mxu0 0.0
    %848 = vmatprep.subr.mxu0 0.0
    %849 = vmatpush1.msra.mxu0 %v189
    %850 = vmatprep.subr.mxu0 0.0
    %851 = vmatpush1.msra.mxu0 %v188
    %852 = vmatprep.subr.mxu0 0.0
    %853 = vmatpush1.msra.mxu0 %v187
    %854 = vmatprep.subr.mxu0 0.0
    %855 = vmatpush1.msra.mxu0 %v186
    %856 = vmatprep.subr.mxu0 0.0
    %857 = vmatpush2.msra.mxu0 0.0
    %858 = vmatprep.subr.mxu0 0.0
    %859 = vmatpush2.msra.mxu0 0.0
    %860 = vmatprep.subr.mxu0 0.0
    %861 = vmatpush2.msra.mxu0 0.0
    %862 = vmatprep.subr.mxu0 0.0
    %863 = vmatpush2.msra.mxu0 0.0
    %864 = vmatprep.subr.mxu0 0.0
    %865 = vmatpush2.msra.mxu0 0.0
    %866 = vmatprep.subr.mxu0 0.0
    %867 = vmatpush2.msra.mxu0 0.0
    %868 = vmatprep.subr.mxu0 0.0
    %869 = vmatpush2.msra.mxu0 0.0
    %870 = vmatprep.subr.mxu0 0.0
    %871 = vmatpush2.msra.mxu0 0.0
    %872 = vmatprep.subr.mxu0 0.0
    %873 = vmatpush2.msra.mxu0 0.0
    %874 = vmatprep.subr.mxu0 0.0
    %875 = vmatpush2.msra.mxu0 0.0
    %876 = vmatprep.subr.mxu0 0.0
    %877 = vmatpush2.msra.mxu0 0.0
    %878 = vmatprep.subr.mxu0 0.0
    %879 = vmatpush2.msra.mxu0 0.0
    %880 = vmatprep.subr.mxu0 0.0
    %881 = vmatpush2.msra.mxu0 0.0
    %882 = vmatprep.subr.mxu0 0.0
    %883 = vmatpush2.msra.mxu0 0.0
    %884 = vmatprep.subr.mxu0 0.0
    %885 = vmatpush2.msra.mxu0 0.0
    %886 = vmatprep.subr.mxu0 0.0
    %887 = vmatpush2.msra.mxu0 0.0
    %888 = vmatprep.mubr.f32.mxu0 0.0
    %889 = vmatmul.mubr.f32.gmra.mxu0 %v822
    %v890 = vpop.f32.mrf.mxu0
    %v891 = vadd.f32 0.0, %v890
    %v892 = vpop.f32.mrf.mxu0
    %893 = vdwg.mxu0
    %v895 = vrot.slane %v891, 4
    %v897 = vadd.f32 %v182, %v895
    %v898 = vxor.u32 %v897, 2147483648
    %v899 = vmul.f32 %v898, 1.442695
    %v900 = vpow.pop %v899
    %v901 = vadd.f32 %v900, 1.0
    %v902 = vrcp.pop %v901
    %v903 = vmul.f32 1.0, %v902
    %v904 = vtanh.pop %v897
    %v906 = vrot.slane %v811, 6
    %v908 = vmul.f32 %v903, %v906
    %910 = vrot.lane.b32.xlu0 %v904, 32
    %v911 = vpop.permute.xlu0 %910
    %v913 = vmul.f32 %v903, %v911
    %915 = vrot.lane.b32.xlu0 %v913, 32
    %v916 = vpop.permute.xlu0 %915
    %v918 = vadd.f32 %v908, %v916
    %v919 = vtanh.pop %v918
    %921 = vrot.lane.b32.xlu0 %v919, 32
    %v922 = vpop.permute.xlu0 %921
    %v924 = vmul.f32 %v903, %v922
    %v926 = vrot.slane %v924, 4
    %927 = vrot.lane.b32.xlu0 %v926, 64
    %v928 = vpop.permute.xlu0 %927
    %v929 = vsel %vm50, %v928, 0
    %931 = vmatprep.subr.mxu0 0.0
    %932 = vmatpush1.msra.mxu0 0.0
    %933 = vmatprep.subr.mxu0 0.0
    %934 = vmatpush1.msra.mxu0 0.0
    %935 = vmatprep.subr.mxu0 0.0
    %936 = vmatpush1.msra.mxu0 0.0
    %937 = vmatprep.subr.mxu0 0.0
    %938 = vmatpush1.msra.mxu0 0.0
    %939 = vmatprep.subr.mxu0 0.0
    %940 = vmatpush1.msra.mxu0 0.0
    %941 = vmatprep.subr.mxu0 0.0
    %942 = vmatpush1.msra.mxu0 0.0
    %943 = vmatprep.subr.mxu0 0.0
    %944 = vmatpush1.msra.mxu0 0.0
    %945 = vmatprep.subr.mxu0 0.0
    %946 = vmatpush1.msra.mxu0 0.0
    %947 = vmatprep.subr.mxu0 0.0
    %948 = vmatpush1.msra.mxu0 0.0
    %949 = vmatprep.subr.mxu0 0.0
    %950 = vmatpush1.msra.mxu0 0.0
    %951 = vmatprep.subr.mxu0 0.0
    %952 = vmatpush1.msra.mxu0 0.0
    %953 = vmatprep.subr.mxu0 0.0
    %954 = vmatpush1.msra.mxu0 0.0
    %955 = vmatprep.subr.mxu0 0.0
    %956 = vmatpush1.msra.mxu0 %v189
    %957 = vmatprep.subr.mxu0 0.0
    %958 = vmatpush1.msra.mxu0 %v188
    %959 = vmatprep.subr.mxu0 0.0
    %960 = vmatpush1.msra.mxu0 %v187
    %961 = vmatprep.subr.mxu0 0.0
    %962 = vmatpush1.msra.mxu0 %v186
    %963 = vmatprep.subr.mxu0 0.0
    %964 = vmatpush2.msra.mxu0 0.0
    %965 = vmatprep.subr.mxu0 0.0
    %966 = vmatpush2.msra.mxu0 0.0
    %967 = vmatprep.subr.mxu0 0.0
    %968 = vmatpush2.msra.mxu0 0.0
    %969 = vmatprep.subr.mxu0 0.0
    %970 = vmatpush2.msra.mxu0 0.0
    %971 = vmatprep.subr.mxu0 0.0
    %972 = vmatpush2.msra.mxu0 0.0
    %973 = vmatprep.subr.mxu0 0.0
    %974 = vmatpush2.msra.mxu0 0.0
    %975 = vmatprep.subr.mxu0 0.0
    %976 = vmatpush2.msra.mxu0 0.0
    %977 = vmatprep.subr.mxu0 0.0
    %978 = vmatpush2.msra.mxu0 0.0
    %979 = vmatprep.subr.mxu0 0.0
    %980 = vmatpush2.msra.mxu0 0.0
    %981 = vmatprep.subr.mxu0 0.0
    %982 = vmatpush2.msra.mxu0 0.0
    %983 = vmatprep.subr.mxu0 0.0
    %984 = vmatpush2.msra.mxu0 0.0
    %985 = vmatprep.subr.mxu0 0.0
    %986 = vmatpush2.msra.mxu0 0.0
    %987 = vmatprep.subr.mxu0 0.0
    %988 = vmatpush2.msra.mxu0 0.0
    %989 = vmatprep.subr.mxu0 0.0
    %990 = vmatpush2.msra.mxu0 0.0
    %991 = vmatprep.subr.mxu0 0.0
    %992 = vmatpush2.msra.mxu0 0.0
    %993 = vmatprep.subr.mxu0 0.0
    %994 = vmatpush2.msra.mxu0 0.0
    %995 = vmatprep.mubr.f32.mxu0 0.0
    %996 = vmatmul.mubr.f32.gmra.mxu0 %v929
    %v997 = vpop.f32.mrf.mxu0
    %v998 = vadd.f32 0.0, %v997
    %v999 = vpop.f32.mrf.mxu0
    %1000 = vdwg.mxu0
    %v1002 = vrot.slane %v998, 2
    %v1004 = vadd.f32 %v185, %v1002
    %v1005 = vxor.u32 %v1004, 2147483648
    %v1006 = vmul.f32 %v1005, 1.442695
    %v1007 = vpow.pop %v1006
    %v1008 = vadd.f32 %v1007, 1.0
    %v1009 = vrcp.pop %v1008
    %v1010 = vmul.f32 1.0, %v1009
    %v1011 = vtanh.pop %v1004
    %v1013 = vrot.slane %v918, 6
    %v1015 = vmul.f32 %v1010, %v1013
    %1017 = vrot.lane.b32.xlu0 %v1011, 32
    %v1018 = vpop.permute.xlu0 %1017
    %v1020 = vmul.f32 %v1010, %v1018
    %1022 = vrot.lane.b32.xlu0 %v1020, 32
    %v1023 = vpop.permute.xlu0 %1022
    %v1025 = vadd.f32 %v1015, %v1023
    %v1026 = vtanh.pop %v1025
    %1028 = vrot.lane.b32.xlu0 %v1026, 32
    %v1029 = vpop.permute.xlu0 %1028
    %v1031 = vmul.f32 %v1010, %v1029
    %v1034 = vrot.slane %v1031, 6
    %1035 = vrot.lane.b32.xlu0 %v1034, 64
    %v1036 = vpop.permute.xlu0 %1035
    %vm1038 = vcmask 130048
    %v1039 = vsel %vm1038, %v290, %v1036
    %1040 = vrot.lane.b32.xlu0 %v393, 64
    %v1041 = vpop.permute.xlu0 %1040
    %v1043 = vrot.slane %v924, 2
    %1044 = vrot.lane.b32.xlu0 %v1043, 64
    %v1045 = vpop.permute.xlu0 %1044
    %v1047 = vsel %vm1038, %v1041, %v1045
    %1048 = vrot.lane.b32.xlu0 %v500, 64
    %v1049 = vpop.permute.xlu0 %1048
    %v1051 = vrot.slane %v817, 6
    %1052 = vrot.lane.b32.xlu0 %v1051, 64
    %v1053 = vpop.permute.xlu0 %1052
    %v1055 = vsel %vm1038, %v1049, %v1053
    %1056 = vrot.lane.b32.xlu0 %v607, 64
    %v1057 = vpop.permute.xlu0 %1056
    %v1059 = vrot.slane %v711, 2
    %1060 = vrot.lane.b32.xlu0 %v1059, 64
    %v1061 = vpop.permute.xlu0 %1060
    %v1063 = vsel %vm1038, %v1057, %v1061
    %v1066 = vsel %vm1038, %v714, %v611
    %1067 = vrot.lane.b32.xlu0 %v817, 64
    %v1068 = vpop.permute.xlu0 %1067
    %v1070 = vrot.slane %v500, 2
    %1071 = vrot.lane.b32.xlu0 %v1070, 64
    %v1072 = vpop.permute.xlu0 %1071
    %v1074 = vsel %vm1038, %v1068, %v1072
    %1075 = vrot.lane.b32.xlu0 %v924, 64
    %v1076 = vpop.permute.xlu0 %1075
    %v1078 = vrot.slane %v393, 6
    %1079 = vrot.lane.b32.xlu0 %v1078, 64
    %v1080 = vpop.permute.xlu0 %1079
    %v1082 = vsel %vm1038, %v1076, %v1080
    %1083 = vrot.lane.b32.xlu0 %v1031, 64
    %v1084 = vpop.permute.xlu0 %1083
    %v1086 = vrot.slane %v287, 2
    %1087 = vrot.lane.b32.xlu0 %v1086, 64
    %v1088 = vpop.permute.xlu0 %1087
    %v1090 = vsel %vm1038, %v1084, %v1088
    %vm1091 = vcmask 1041408
    %v1092 = vsel %vm1091, %v1039, %v1047
    %vm1093 = vcmask 1043456
    %v1094 = vsel %vm1093, %v1092, %v1055
    %vm1095 = vcmask 1045504
    %v1096 = vsel %vm1095, %v1094, %v1063
    %v1097 = vsel %vm1091, %v1066, %v1074
    %v1098 = vsel %vm1093, %v1097, %v1082
    %v1099 = vsel %vm1095, %v1098, %v1090
    %v1100 = vpack.c.bf16 %v1099, %v1096
    %v1101 = vld [vmem:[%s7] sm:$0xf]
    %v1102 = vld [vmem:[%s7 + $0x4] sm:$0xf]
    %v1103 = vld [vmem:[%s7 + $0x8] sm:$0xf]
    %v1104 = vld [vmem:[%s7 + $0xc] sm:$0xf]
    %v1105 = vld [vmem:[%s8] sm:$0x1]
    %v1107 = vlaneseq
    %v1108 = vshrl.u32 %v1107, 7
    %v1109 = vsub.s32 0, %v1108
    %v1110 = vrot.slane %v1105, %v1109
    %v1116 = vunpack.c.l.b16 %v1101
    %v1117 = vunpack.c.l.b16 %v1102
    %v1118 = vunpack.c.l.b16 %v1103
    %v1119 = vunpack.c.l.b16 %v1104
    %v1120 = vpack.c.b16 %v1117, %v1116
    %v1121 = vpack.c.b16 %v1119, %v1118
    %v1125 = vsel %vm50, %v1100, 0
    %1127 = vmatprep.subr.bf16.mxu0 0
    %1128 = vmatpush1.bf16.msra.mxu0 0
    %1129 = vmatprep.subr.bf16.mxu0 0
    %1130 = vmatpush1.bf16.msra.mxu0 0
    %1131 = vmatprep.subr.bf16.mxu0 0
    %1132 = vmatpush1.bf16.msra.mxu0 0
    %1133 = vmatprep.subr.bf16.mxu0 0
    %1134 = vmatpush1.bf16.msra.mxu0 0
    %1135 = vmatprep.subr.bf16.mxu0 0
    %1136 = vmatpush1.bf16.msra.mxu0 0
    %1137 = vmatprep.subr.bf16.mxu0 0
    %1138 = vmatpush1.bf16.msra.mxu0 0
    %1139 = vmatprep.subr.bf16.mxu0 0
    %1140 = vmatpush1.bf16.msra.mxu0 %v1121
    %1141 = vmatprep.subr.bf16.mxu0 0
    %1142 = vmatpush1.bf16.msra.mxu0 %v1120
    %1143 = vmatprep.subr.bf16.mxu0 0
    %1144 = vmatpush2.bf16.msra.mxu0 0
    %1145 = vmatprep.subr.bf16.mxu0 0
    %1146 = vmatpush2.bf16.msra.mxu0 0
    %1147 = vmatprep.subr.bf16.mxu0 0
    %1148 = vmatpush2.bf16.msra.mxu0 0
    %1149 = vmatprep.subr.bf16.mxu0 0
    %1150 = vmatpush2.bf16.msra.mxu0 0
    %1151 = vmatprep.subr.bf16.mxu0 0
    %1152 = vmatpush2.bf16.msra.mxu0 0
    %1153 = vmatprep.subr.bf16.mxu0 0
    %1154 = vmatpush2.bf16.msra.mxu0 0
    %1155 = vmatprep.subr.bf16.mxu0 0
    %1156 = vmatpush2.bf16.msra.mxu0 0
    %1157 = vmatprep.subr.bf16.mxu0 0
    %1158 = vmatpush2.bf16.msra.mxu0 0
    %1159 = vmatprep.mubr.bf16.mxu0 0
    %1160 = vmatmul.mubr.bf16.gmra.mxu0 %v1125
    %v1161 = vpop.f32.mrf.mxu0
    %v1162 = vadd.f32 %v1110, %v1161
    %v1163 = vpop.f32.mrf.mxu0
    %v1164 = vpop.f32.mrf.mxu0
    %v1165 = vadd.f32 %v1110, %v1164
    %v1166 = vpop.f32.mrf.mxu0
    %1167 = vdwg.mxu0
    %v1168 = vld [vmem:[%s10] sm:$0x1]
    %v1169 = vld [vmem:[%s11] sm:$0x1]
    %v1170 = vld [vmem:[%s12] sm:$0xff]
    %v1171 = vld [vmem:[%s9] sm:$0x3]
    %v1173 = vlaneseq
    %v1174 = vshrl.u32 %v1173, 7
    %v1175 = vsub.s32 0, %v1174
    %v1176 = vrot.slane %v1168, %v1175
    %v1178 = vadd.f32 %v1176, %v1162
    %v1179 = vmul.f32 %v1178, %v1171
    %vm1180 = vcmask 58368
    %v1181 = vsel %vm1180, %v1179, 0.0
    %1182 = vadd.xlane.f32.xlu0 %v1181
    %v1183 = vpop.xlane.xlu0 %1182
    %s1184 = scalar_lea.vmem %s9, 2
    %v1185 = vld [vmem:[%s1184] sm:$0x3]
    %vm1186 = vcmask 64512
    %v1188 = vsel %vm1186, %v1171, 0
    %1190 = vmatprep.subr.mxu0 0.0
    %1191 = vmatpush1.msra.mxu0 0.0
    %1192 = vmatprep.subr.mxu0 0.0
    %1193 = vmatpush1.msra.mxu0 0.0
    %1194 = vmatprep.subr.mxu0 0.0
    %1195 = vmatpush1.msra.mxu0 0.0
    %1196 = vmatprep.subr.mxu0 0.0
    %1197 = vmatpush1.msra.mxu0 0.0
    %1198 = vmatprep.subr.mxu0 0.0
    %1199 = vmatpush1.msra.mxu0 0.0
    %1200 = vmatprep.subr.mxu0 0.0
    %1201 = vmatpush1.msra.mxu0 0.0
    %1202 = vmatprep.subr.mxu0 0.0
    %1203 = vmatpush1.msra.mxu0 0.0
    %1204 = vmatprep.subr.mxu0 0.0
    %1205 = vmatpush1.msra.mxu0 0.0
    %1206 = vmatprep.subr.mxu0 0.0
    %1207 = vmatpush1.msra.mxu0 0.0
    %1208 = vmatprep.subr.mxu0 0.0
    %1209 = vmatpush1.msra.mxu0 0.0
    %1210 = vmatprep.subr.mxu0 0.0
    %1211 = vmatpush1.msra.mxu0 0.0
    %1212 = vmatprep.subr.mxu0 0.0
    %1213 = vmatpush1.msra.mxu0 0.0
    %1214 = vmatprep.subr.mxu0 0.0
    %1215 = vmatpush1.msra.mxu0 0.0
    %1216 = vmatprep.subr.mxu0 0.0
    %1217 = vmatpush1.msra.mxu0 0.0
    %1218 = vmatprep.subr.mxu0 0.0
    %1219 = vmatpush1.msra.mxu0 0.0
    %1220 = vmatprep.subr.mxu0 0.0
    %1221 = vmatpush1.msra.mxu0 %v1170
    %1222 = vmatprep.subr.mxu0 0.0
    %1223 = vmatpush2.msra.mxu0 0.0
    %1224 = vmatprep.subr.mxu0 0.0
    %1225 = vmatpush2.msra.mxu0 0.0
    %1226 = vmatprep.subr.mxu0 0.0
    %1227 = vmatpush2.msra.mxu0 0.0
    %1228 = vmatprep.subr.mxu0 0.0
    %1229 = vmatpush2.msra.mxu0 0.0
    %1230 = vmatprep.subr.mxu0 0.0
    %1231 = vmatpush2.msra.mxu0 0.0
    %1232 = vmatprep.subr.mxu0 0.0
    %1233 = vmatpush2.msra.mxu0 0.0
    %1234 = vmatprep.subr.mxu0 0.0
    %1235 = vmatpush2.msra.mxu0 0.0
    %1236 = vmatprep.subr.mxu0 0.0
    %1237 = vmatpush2.msra.mxu0 0.0
    %1238 = vmatprep.subr.mxu0 0.0
    %1239 = vmatpush2.msra.mxu0 0.0
    %1240 = vmatprep.subr.mxu0 0.0
    %1241 = vmatpush2.msra.mxu0 0.0
    %1242 = vmatprep.subr.mxu0 0.0
    %1243 = vmatpush2.msra.mxu0 0.0
    %1244 = vmatprep.subr.mxu0 0.0
    %1245 = vmatpush2.msra.mxu0 0.0
    %1246 = vmatprep.subr.mxu0 0.0
    %1247 = vmatpush2.msra.mxu0 0.0
    %1248 = vmatprep.subr.mxu0 0.0
    %1249 = vmatpush2.msra.mxu0 0.0
    %1250 = vmatprep.subr.mxu0 0.0
    %1251 = vmatpush2.msra.mxu0 0.0
    %1252 = vmatprep.subr.mxu0 0.0
    %1253 = vmatpush2.msra.mxu0 0.0
    %1254 = vmatprep.mubr.f32.mxu0 0.0
    %1255 = vmatmul.mubr.f32.gmra.mxu0 %v1188
    %v1256 = vpop.f32.mrf.mxu0
    %v1257 = vadd.f32 0.0, %v1256
    %v1258 = vpop.f32.mrf.mxu0
    %1259 = vdwg.mxu0
    %v1260 = vmul.f32 %v1257, %v1185
    %v1261 = vsel %vm1180, %v1260, 0.0
    %1262 = vadd.xlane.f32.xlu0 %v1261
    %v1263 = vpop.xlane.xlu0 %1262
    %v1264 = vadd.f32 %v1183, %v1263
    %v1266 = vrot.slane %v1185, 6
    %v1268 = vmul.f32 %v1162, %v1266
    %vm1269 = vcmask 60418
    %v1270 = vsel %vm1269, %v1268, 0.0
    %1271 = vadd.xlane.f32.xlu0 %v1270
    %v1272 = vpop.xlane.xlu0 %1271
    %v1274 = vrot.slane %v1272, 2
    %v1276 = vadd.f32 %v1264, %v1274
    %s1277 = scalar_lea.vmem %s9, 4
    %v1278 = vld [vmem:[%s1277] sm:$0x3]
    %v1279 = vsel %vm1186, %v1185, 0
    %1281 = vmatprep.subr.mxu0 0.0
    %1282 = vmatpush1.msra.mxu0 0.0
    %1283 = vmatprep.subr.mxu0 0.0
    %1284 = vmatpush1.msra.mxu0 0.0
    %1285 = vmatprep.subr.mxu0 0.0
    %1286 = vmatpush1.msra.mxu0 0.0
    %1287 = vmatprep.subr.mxu0 0.0
    %1288 = vmatpush1.msra.mxu0 0.0
    %1289 = vmatprep.subr.mxu0 0.0
    %1290 = vmatpush1.msra.mxu0 0.0
    %1291 = vmatprep.subr.mxu0 0.0
    %1292 = vmatpush1.msra.mxu0 0.0
    %1293 = vmatprep.subr.mxu0 0.0
    %1294 = vmatpush1.msra.mxu0 0.0
    %1295 = vmatprep.subr.mxu0 0.0
    %1296 = vmatpush1.msra.mxu0 0.0
    %1297 = vmatprep.subr.mxu0 0.0
    %1298 = vmatpush1.msra.mxu0 0.0
    %1299 = vmatprep.subr.mxu0 0.0
    %1300 = vmatpush1.msra.mxu0 0.0
    %1301 = vmatprep.subr.mxu0 0.0
    %1302 = vmatpush1.msra.mxu0 0.0
    %1303 = vmatprep.subr.mxu0 0.0
    %1304 = vmatpush1.msra.mxu0 0.0
    %1305 = vmatprep.subr.mxu0 0.0
    %1306 = vmatpush1.msra.mxu0 0.0
    %1307 = vmatprep.subr.mxu0 0.0
    %1308 = vmatpush1.msra.mxu0 0.0
    %1309 = vmatprep.subr.mxu0 0.0
    %1310 = vmatpush1.msra.mxu0 0.0
    %1311 = vmatprep.subr.mxu0 0.0
    %1312 = vmatpush1.msra.mxu0 %v1170
    %1313 = vmatprep.subr.mxu0 0.0
    %1314 = vmatpush2.msra.mxu0 0.0
    %1315 = vmatprep.subr.mxu0 0.0
    %1316 = vmatpush2.msra.mxu0 0.0
    %1317 = vmatprep.subr.mxu0 0.0
    %1318 = vmatpush2.msra.mxu0 0.0
    %1319 = vmatprep.subr.mxu0 0.0
    %1320 = vmatpush2.msra.mxu0 0.0
    %1321 = vmatprep.subr.mxu0 0.0
    %1322 = vmatpush2.msra.mxu0 0.0
    %1323 = vmatprep.subr.mxu0 0.0
    %1324 = vmatpush2.msra.mxu0 0.0
    %1325 = vmatprep.subr.mxu0 0.0
    %1326 = vmatpush2.msra.mxu0 0.0
    %1327 = vmatprep.subr.mxu0 0.0
    %1328 = vmatpush2.msra.mxu0 0.0
    %1329 = vmatprep.subr.mxu0 0.0
    %1330 = vmatpush2.msra.mxu0 0.0
    %1331 = vmatprep.subr.mxu0 0.0
    %1332 = vmatpush2.msra.mxu0 0.0
    %1333 = vmatprep.subr.mxu0 0.0
    %1334 = vmatpush2.msra.mxu0 0.0
    %1335 = vmatprep.subr.mxu0 0.0
    %1336 = vmatpush2.msra.mxu0 0.0
    %1337 = vmatprep.subr.mxu0 0.0
    %1338 = vmatpush2.msra.mxu0 0.0
    %1339 = vmatprep.subr.mxu0 0.0
    %1340 = vmatpush2.msra.mxu0 0.0
    %1341 = vmatprep.subr.mxu0 0.0
    %1342 = vmatpush2.msra.mxu0 0.0
    %1343 = vmatprep.subr.mxu0 0.0
    %1344 = vmatpush2.msra.mxu0 0.0
    %1345 = vmatprep.mubr.f32.mxu0 0.0
    %1346 = vmatmul.mubr.f32.gmra.mxu0 %v1279
    %v1347 = vpop.f32.mrf.mxu0
    %v1348 = vadd.f32 0.0, %v1347
    %v1349 = vpop.f32.mrf.mxu0
    %1350 = vdwg.mxu0
    %v1351 = vmul.f32 %v1348, %v1278
    %v1352 = vsel %vm1180, %v1351, 0.0
    %1353 = vadd.xlane.f32.xlu0 %v1352
    %v1354 = vpop.xlane.xlu0 %1353
    %v1355 = vadd.f32 %v1276, %v1354
    %v1357 = vrot.slane %v1278, 4
    %v1359 = vmul.f32 %v1162, %v1357
    %vm1360 = vcmask 62468
    %v1361 = vsel %vm1360, %v1359, 0.0
    %1362 = vadd.xlane.f32.xlu0 %v1361
    %v1363 = vpop.xlane.xlu0 %1362
    %v1365 = vrot.slane %v1363, 4
    %v1367 = vadd.f32 %v1355, %v1365
    %s1368 = scalar_lea.vmem %s9, 6
    %v1369 = vld [vmem:[%s1368] sm:$0x3]
    %v1370 = vsel %vm1186, %v1278, 0
    %1372 = vmatprep.subr.mxu0 0.0
    %1373 = vmatpush1.msra.mxu0 0.0
    %1374 = vmatprep.subr.mxu0 0.0
    %1375 = vmatpush1.msra.mxu0 0.0
    %1376 = vmatprep.subr.mxu0 0.0
    %1377 = vmatpush1.msra.mxu0 0.0
    %1378 = vmatprep.subr.mxu0 0.0
    %1379 = vmatpush1.msra.mxu0 0.0
    %1380 = vmatprep.subr.mxu0 0.0
    %1381 = vmatpush1.msra.mxu0 0.0
    %1382 = vmatprep.subr.mxu0 0.0
    %1383 = vmatpush1.msra.mxu0 0.0
    %1384 = vmatprep.subr.mxu0 0.0
    %1385 = vmatpush1.msra.mxu0 0.0
    %1386 = vmatprep.subr.mxu0 0.0
    %1387 = vmatpush1.msra.mxu0 0.0
    %1388 = vmatprep.subr.mxu0 0.0
    %1389 = vmatpush1.msra.mxu0 0.0
    %1390 = vmatprep.subr.mxu0 0.0
    %1391 = vmatpush1.msra.mxu0 0.0
    %1392 = vmatprep.subr.mxu0 0.0
    %1393 = vmatpush1.msra.mxu0 0.0
    %1394 = vmatprep.subr.mxu0 0.0
    %1395 = vmatpush1.msra.mxu0 0.0
    %1396 = vmatprep.subr.mxu0 0.0
    %1397 = vmatpush1.msra.mxu0 0.0
    %1398 = vmatprep.subr.mxu0 0.0
    %1399 = vmatpush1.msra.mxu0 0.0
    %1400 = vmatprep.subr.mxu0 0.0
    %1401 = vmatpush1.msra.mxu0 0.0
    %1402 = vmatprep.subr.mxu0 0.0
    %1403 = vmatpush1.msra.mxu0 %v1170
    %1404 = vmatprep.subr.mxu0 0.0
    %1405 = vmatpush2.msra.mxu0 0.0
    %1406 = vmatprep.subr.mxu0 0.0
    %1407 = vmatpush2.msra.mxu0 0.0
    %1408 = vmatprep.subr.mxu0 0.0
    %1409 = vmatpush2.msra.mxu0 0.0
    %1410 = vmatprep.subr.mxu0 0.0
    %1411 = vmatpush2.msra.mxu0 0.0
    %1412 = vmatprep.subr.mxu0 0.0
    %1413 = vmatpush2.msra.mxu0 0.0
    %1414 = vmatprep.subr.mxu0 0.0
    %1415 = vmatpush2.msra.mxu0 0.0
    %1416 = vmatprep.subr.mxu0 0.0
    %1417 = vmatpush2.msra.mxu0 0.0
    %1418 = vmatprep.subr.mxu0 0.0
    %1419 = vmatpush2.msra.mxu0 0.0
    %1420 = vmatprep.subr.mxu0 0.0
    %1421 = vmatpush2.msra.mxu0 0.0
    %1422 = vmatprep.subr.mxu0 0.0
    %1423 = vmatpush2.msra.mxu0 0.0
    %1424 = vmatprep.subr.mxu0 0.0
    %1425 = vmatpush2.msra.mxu0 0.0
    %1426 = vmatprep.subr.mxu0 0.0
    %1427 = vmatpush2.msra.mxu0 0.0
    %1428 = vmatprep.subr.mxu0 0.0
    %1429 = vmatpush2.msra.mxu0 0.0
    %1430 = vmatprep.subr.mxu0 0.0
    %1431 = vmatpush2.msra.mxu0 0.0
    %1432 = vmatprep.subr.mxu0 0.0
    %1433 = vmatpush2.msra.mxu0 0.0
    %1434 = vmatprep.subr.mxu0 0.0
    %1435 = vmatpush2.msra.mxu0 0.0
    %1436 = vmatprep.mubr.f32.mxu0 0.0
    %1437 = vmatmul.mubr.f32.gmra.mxu0 %v1370
    %v1438 = vpop.f32.mrf.mxu0
    %v1439 = vadd.f32 0.0, %v1438
    %v1440 = vpop.f32.mrf.mxu0
    %1441 = vdwg.mxu0
    %v1442 = vmul.f32 %v1439, %v1369
    %v1443 = vsel %vm1180, %v1442, 0.0
    %1444 = vadd.xlane.f32.xlu0 %v1443
    %v1445 = vpop.xlane.xlu0 %1444
    %v1446 = vadd.f32 %v1367, %v1445
    %v1448 = vrot.slane %v1369, 2
    %v1450 = vmul.f32 %v1162, %v1448
    %vm1451 = vcmask 64518
    %v1452 = vsel %vm1451, %v1450, 0.0
    %1453 = vadd.xlane.f32.xlu0 %v1452
    %v1454 = vpop.xlane.xlu0 %1453
    %v1456 = vrot.slane %v1454, 6
    %v1458 = vadd.f32 %v1446, %v1456
    %s1459 = scalar_lea.vmem %s9, 8
    %v1460 = vld [vmem:[%s1459] sm:$0x3]
    %v1461 = vsel %vm1186, %v1369, 0
    %1463 = vmatprep.subr.mxu0 0.0
    %1464 = vmatpush1.msra.mxu0 0.0
    %1465 = vmatprep.subr.mxu0 0.0
    %1466 = vmatpush1.msra.mxu0 0.0
    %1467 = vmatprep.subr.mxu0 0.0
    %1468 = vmatpush1.msra.mxu0 0.0
    %1469 = vmatprep.subr.mxu0 0.0
    %1470 = vmatpush1.msra.mxu0 0.0
    %1471 = vmatprep.subr.mxu0 0.0
    %1472 = vmatpush1.msra.mxu0 0.0
    %1473 = vmatprep.subr.mxu0 0.0
    %1474 = vmatpush1.msra.mxu0 0.0
    %1475 = vmatprep.subr.mxu0 0.0
    %1476 = vmatpush1.msra.mxu0 0.0
    %1477 = vmatprep.subr.mxu0 0.0
    %1478 = vmatpush1.msra.mxu0 0.0
    %1479 = vmatprep.subr.mxu0 0.0
    %1480 = vmatpush1.msra.mxu0 0.0
    %1481 = vmatprep.subr.mxu0 0.0
    %1482 = vmatpush1.msra.mxu0 0.0
    %1483 = vmatprep.subr.mxu0 0.0
    %1484 = vmatpush1.msra.mxu0 0.0
    %1485 = vmatprep.subr.mxu0 0.0
    %1486 = vmatpush1.msra.mxu0 0.0
    %1487 = vmatprep.subr.mxu0 0.0
    %1488 = vmatpush1.msra.mxu0 0.0
    %1489 = vmatprep.subr.mxu0 0.0
    %1490 = vmatpush1.msra.mxu0 0.0
    %1491 = vmatprep.subr.mxu0 0.0
    %1492 = vmatpush1.msra.mxu0 0.0
    %1493 = vmatprep.subr.mxu0 0.0
    %1494 = vmatpush1.msra.mxu0 %v1170
    %1495 = vmatprep.subr.mxu0 0.0
    %1496 = vmatpush2.msra.mxu0 0.0
    %1497 = vmatprep.subr.mxu0 0.0
    %1498 = vmatpush2.msra.mxu0 0.0
    %1499 = vmatprep.subr.mxu0 0.0
    %1500 = vmatpush2.msra.mxu0 0.0
    %1501 = vmatprep.subr.mxu0 0.0
    %1502 = vmatpush2.msra.mxu0 0.0
    %1503 = vmatprep.subr.mxu0 0.0
    %1504 = vmatpush2.msra.mxu0 0.0
    %1505 = vmatprep.subr.mxu0 0.0
    %1506 = vmatpush2.msra.mxu0 0.0
    %1507 = vmatprep.subr.mxu0 0.0
    %1508 = vmatpush2.msra.mxu0 0.0
    %1509 = vmatprep.subr.mxu0 0.0
    %1510 = vmatpush2.msra.mxu0 0.0
    %1511 = vmatprep.subr.mxu0 0.0
    %1512 = vmatpush2.msra.mxu0 0.0
    %1513 = vmatprep.subr.mxu0 0.0
    %1514 = vmatpush2.msra.mxu0 0.0
    %1515 = vmatprep.subr.mxu0 0.0
    %1516 = vmatpush2.msra.mxu0 0.0
    %1517 = vmatprep.subr.mxu0 0.0
    %1518 = vmatpush2.msra.mxu0 0.0
    %1519 = vmatprep.subr.mxu0 0.0
    %1520 = vmatpush2.msra.mxu0 0.0
    %1521 = vmatprep.subr.mxu0 0.0
    %1522 = vmatpush2.msra.mxu0 0.0
    %1523 = vmatprep.subr.mxu0 0.0
    %1524 = vmatpush2.msra.mxu0 0.0
    %1525 = vmatprep.subr.mxu0 0.0
    %1526 = vmatpush2.msra.mxu0 0.0
    %1527 = vmatprep.mubr.f32.mxu0 0.0
    %1528 = vmatmul.mubr.f32.gmra.mxu0 %v1461
    %v1529 = vpop.f32.mrf.mxu0
    %v1530 = vadd.f32 0.0, %v1529
    %v1531 = vpop.f32.mrf.mxu0
    %1532 = vdwg.mxu0
    %v1533 = vmul.f32 %v1530, %v1460
    %v1534 = vsel %vm1180, %v1533, 0.0
    %1535 = vadd.xlane.f32.xlu0 %v1534
    %v1536 = vpop.xlane.xlu0 %1535
    %v1537 = vadd.f32 %v1458, %v1536
    %v1538 = vmul.f32 %v1165, %v1460
    %v1539 = vsel %vm1180, %v1538, 0.0
    %1540 = vadd.xlane.f32.xlu0 %v1539
    %v1541 = vpop.xlane.xlu0 %1540
    %v1542 = vadd.f32 %v1537, %v1541
    %s1543 = scalar_lea.vmem %s9, 10
    %v1544 = vld [vmem:[%s1543] sm:$0x3]
    %v1546 = vsel %vm1186, %v1460, 0
    %1548 = vmatprep.subr.mxu0 0.0
    %1549 = vmatpush1.msra.mxu0 0.0
    %1550 = vmatprep.subr.mxu0 0.0
    %1551 = vmatpush1.msra.mxu0 0.0
    %1552 = vmatprep.subr.mxu0 0.0
    %1553 = vmatpush1.msra.mxu0 0.0
    %1554 = vmatprep.subr.mxu0 0.0
    %1555 = vmatpush1.msra.mxu0 0.0
    %1556 = vmatprep.subr.mxu0 0.0
    %1557 = vmatpush1.msra.mxu0 0.0
    %1558 = vmatprep.subr.mxu0 0.0
    %1559 = vmatpush1.msra.mxu0 0.0
    %1560 = vmatprep.subr.mxu0 0.0
    %1561 = vmatpush1.msra.mxu0 0.0
    %1562 = vmatprep.subr.mxu0 0.0
    %1563 = vmatpush1.msra.mxu0 0.0
    %1564 = vmatprep.subr.mxu0 0.0
    %1565 = vmatpush1.msra.mxu0 0.0
    %1566 = vmatprep.subr.mxu0 0.0
    %1567 = vmatpush1.msra.mxu0 0.0
    %1568 = vmatprep.subr.mxu0 0.0
    %1569 = vmatpush1.msra.mxu0 0.0
    %1570 = vmatprep.subr.mxu0 0.0
    %1571 = vmatpush1.msra.mxu0 0.0
    %1572 = vmatprep.subr.mxu0 0.0
    %1573 = vmatpush1.msra.mxu0 0.0
    %1574 = vmatprep.subr.mxu0 0.0
    %1575 = vmatpush1.msra.mxu0 0.0
    %1576 = vmatprep.subr.mxu0 0.0
    %1577 = vmatpush1.msra.mxu0 0.0
    %1578 = vmatprep.subr.mxu0 0.0
    %1579 = vmatpush1.msra.mxu0 %v1170
    %1580 = vmatprep.subr.mxu0 0.0
    %1581 = vmatpush2.msra.mxu0 0.0
    %1582 = vmatprep.subr.mxu0 0.0
    %1583 = vmatpush2.msra.mxu0 0.0
    %1584 = vmatprep.subr.mxu0 0.0
    %1585 = vmatpush2.msra.mxu0 0.0
    %1586 = vmatprep.subr.mxu0 0.0
    %1587 = vmatpush2.msra.mxu0 0.0
    %1588 = vmatprep.subr.mxu0 0.0
    %1589 = vmatpush2.msra.mxu0 0.0
    %1590 = vmatprep.subr.mxu0 0.0
    %1591 = vmatpush2.msra.mxu0 0.0
    %1592 = vmatprep.subr.mxu0 0.0
    %1593 = vmatpush2.msra.mxu0 0.0
    %1594 = vmatprep.subr.mxu0 0.0
    %1595 = vmatpush2.msra.mxu0 0.0
    %1596 = vmatprep.subr.mxu0 0.0
    %1597 = vmatpush2.msra.mxu0 0.0
    %1598 = vmatprep.subr.mxu0 0.0
    %1599 = vmatpush2.msra.mxu0 0.0
    %1600 = vmatprep.subr.mxu0 0.0
    %1601 = vmatpush2.msra.mxu0 0.0
    %1602 = vmatprep.subr.mxu0 0.0
    %1603 = vmatpush2.msra.mxu0 0.0
    %1604 = vmatprep.subr.mxu0 0.0
    %1605 = vmatpush2.msra.mxu0 0.0
    %1606 = vmatprep.subr.mxu0 0.0
    %1607 = vmatpush2.msra.mxu0 0.0
    %1608 = vmatprep.subr.mxu0 0.0
    %1609 = vmatpush2.msra.mxu0 0.0
    %1610 = vmatprep.subr.mxu0 0.0
    %1611 = vmatpush2.msra.mxu0 0.0
    %1612 = vmatprep.mubr.f32.mxu0 0.0
    %1613 = vmatmul.mubr.f32.gmra.mxu0 %v1546
    %v1614 = vpop.f32.mrf.mxu0
    %v1615 = vadd.f32 0.0, %v1614
    %v1616 = vpop.f32.mrf.mxu0
    %1617 = vdwg.mxu0
    %v1618 = vmul.f32 %v1615, %v1544
    %v1619 = vsel %vm1180, %v1618, 0.0
    %1620 = vadd.xlane.f32.xlu0 %v1619
    %v1621 = vpop.xlane.xlu0 %1620
    %v1622 = vadd.f32 %v1542, %v1621
    %v1624 = vrot.slane %v1544, 6
    %v1626 = vmul.f32 %v1165, %v1624
    %v1627 = vsel %vm1269, %v1626, 0.0
    %1628 = vadd.xlane.f32.xlu0 %v1627
    %v1629 = vpop.xlane.xlu0 %1628
    %v1631 = vrot.slane %v1629, 2
    %v1633 = vadd.f32 %v1622, %v1631
    %s1634 = scalar_lea.vmem %s9, 12
    %v1635 = vld [vmem:[%s1634] sm:$0x3]
    %v1636 = vsel %vm1186, %v1544, 0
    %1638 = vmatprep.subr.mxu0 0.0
    %1639 = vmatpush1.msra.mxu0 0.0
    %1640 = vmatprep.subr.mxu0 0.0
    %1641 = vmatpush1.msra.mxu0 0.0
    %1642 = vmatprep.subr.mxu0 0.0
    %1643 = vmatpush1.msra.mxu0 0.0
    %1644 = vmatprep.subr.mxu0 0.0
    %1645 = vmatpush1.msra.mxu0 0.0
    %1646 = vmatprep.subr.mxu0 0.0
    %1647 = vmatpush1.msra.mxu0 0.0
    %1648 = vmatprep.subr.mxu0 0.0
    %1649 = vmatpush1.msra.mxu0 0.0
    %1650 = vmatprep.subr.mxu0 0.0
    %1651 = vmatpush1.msra.mxu0 0.0
    %1652 = vmatprep.subr.mxu0 0.0
    %1653 = vmatpush1.msra.mxu0 0.0
    %1654 = vmatprep.subr.mxu0 0.0
    %1655 = vmatpush1.msra.mxu0 0.0
    %1656 = vmatprep.subr.mxu0 0.0
    %1657 = vmatpush1.msra.mxu0 0.0
    %1658 = vmatprep.subr.mxu0 0.0
    %1659 = vmatpush1.msra.mxu0 0.0
    %1660 = vmatprep.subr.mxu0 0.0
    %1661 = vmatpush1.msra.mxu0 0.0
    %1662 = vmatprep.subr.mxu0 0.0
    %1663 = vmatpush1.msra.mxu0 0.0
    %1664 = vmatprep.subr.mxu0 0.0
    %1665 = vmatpush1.msra.mxu0 0.0
    %1666 = vmatprep.subr.mxu0 0.0
    %1667 = vmatpush1.msra.mxu0 0.0
    %1668 = vmatprep.subr.mxu0 0.0
    %1669 = vmatpush1.msra.mxu0 %v1170
    %1670 = vmatprep.subr.mxu0 0.0
    %1671 = vmatpush2.msra.mxu0 0.0
    %1672 = vmatprep.subr.mxu0 0.0
    %1673 = vmatpush2.msra.mxu0 0.0
    %1674 = vmatprep.subr.mxu0 0.0
    %1675 = vmatpush2.msra.mxu0 0.0
    %1676 = vmatprep.subr.mxu0 0.0
    %1677 = vmatpush2.msra.mxu0 0.0
    %1678 = vmatprep.subr.mxu0 0.0
    %1679 = vmatpush2.msra.mxu0 0.0
    %1680 = vmatprep.subr.mxu0 0.0
    %1681 = vmatpush2.msra.mxu0 0.0
    %1682 = vmatprep.subr.mxu0 0.0
    %1683 = vmatpush2.msra.mxu0 0.0
    %1684 = vmatprep.subr.mxu0 0.0
    %1685 = vmatpush2.msra.mxu0 0.0
    %1686 = vmatprep.subr.mxu0 0.0
    %1687 = vmatpush2.msra.mxu0 0.0
    %1688 = vmatprep.subr.mxu0 0.0
    %1689 = vmatpush2.msra.mxu0 0.0
    %1690 = vmatprep.subr.mxu0 0.0
    %1691 = vmatpush2.msra.mxu0 0.0
    %1692 = vmatprep.subr.mxu0 0.0
    %1693 = vmatpush2.msra.mxu0 0.0
    %1694 = vmatprep.subr.mxu0 0.0
    %1695 = vmatpush2.msra.mxu0 0.0
    %1696 = vmatprep.subr.mxu0 0.0
    %1697 = vmatpush2.msra.mxu0 0.0
    %1698 = vmatprep.subr.mxu0 0.0
    %1699 = vmatpush2.msra.mxu0 0.0
    %1700 = vmatprep.subr.mxu0 0.0
    %1701 = vmatpush2.msra.mxu0 0.0
    %1702 = vmatprep.mubr.f32.mxu0 0.0
    %1703 = vmatmul.mubr.f32.gmra.mxu0 %v1636
    %v1704 = vpop.f32.mrf.mxu0
    %v1705 = vadd.f32 0.0, %v1704
    %v1706 = vpop.f32.mrf.mxu0
    %1707 = vdwg.mxu0
    %v1708 = vmul.f32 %v1705, %v1635
    %v1709 = vsel %vm1180, %v1708, 0.0
    %1710 = vadd.xlane.f32.xlu0 %v1709
    %v1711 = vpop.xlane.xlu0 %1710
    %v1712 = vadd.f32 %v1633, %v1711
    %v1714 = vrot.slane %v1635, 4
    %v1716 = vmul.f32 %v1165, %v1714
    %v1717 = vsel %vm1360, %v1716, 0.0
    %1718 = vadd.xlane.f32.xlu0 %v1717
    %v1719 = vpop.xlane.xlu0 %1718
    %v1721 = vrot.slane %v1719, 4
    %v1723 = vadd.f32 %v1712, %v1721
    %s1724 = scalar_lea.vmem %s9, 14
    %v1725 = vld [vmem:[%s1724] sm:$0x3]
    %v1726 = vsel %vm1186, %v1635, 0
    %1728 = vmatprep.subr.mxu0 0.0
    %1729 = vmatpush1.msra.mxu0 0.0
    %1730 = vmatprep.subr.mxu0 0.0
    %1731 = vmatpush1.msra.mxu0 0.0
    %1732 = vmatprep.subr.mxu0 0.0
    %1733 = vmatpush1.msra.mxu0 0.0
    %1734 = vmatprep.subr.mxu0 0.0
    %1735 = vmatpush1.msra.mxu0 0.0
    %1736 = vmatprep.subr.mxu0 0.0
    %1737 = vmatpush1.msra.mxu0 0.0
    %1738 = vmatprep.subr.mxu0 0.0
    %1739 = vmatpush1.msra.mxu0 0.0
    %1740 = vmatprep.subr.mxu0 0.0
    %1741 = vmatpush1.msra.mxu0 0.0
    %1742 = vmatprep.subr.mxu0 0.0
    %1743 = vmatpush1.msra.mxu0 0.0
    %1744 = vmatprep.subr.mxu0 0.0
    %1745 = vmatpush1.msra.mxu0 0.0
    %1746 = vmatprep.subr.mxu0 0.0
    %1747 = vmatpush1.msra.mxu0 0.0
    %1748 = vmatprep.subr.mxu0 0.0
    %1749 = vmatpush1.msra.mxu0 0.0
    %1750 = vmatprep.subr.mxu0 0.0
    %1751 = vmatpush1.msra.mxu0 0.0
    %1752 = vmatprep.subr.mxu0 0.0
    %1753 = vmatpush1.msra.mxu0 0.0
    %1754 = vmatprep.subr.mxu0 0.0
    %1755 = vmatpush1.msra.mxu0 0.0
    %1756 = vmatprep.subr.mxu0 0.0
    %1757 = vmatpush1.msra.mxu0 0.0
    %1758 = vmatprep.subr.mxu0 0.0
    %1759 = vmatpush1.msra.mxu0 %v1170
    %1760 = vmatprep.subr.mxu0 0.0
    %1761 = vmatpush2.msra.mxu0 0.0
    %1762 = vmatprep.subr.mxu0 0.0
    %1763 = vmatpush2.msra.mxu0 0.0
    %1764 = vmatprep.subr.mxu0 0.0
    %1765 = vmatpush2.msra.mxu0 0.0
    %1766 = vmatprep.subr.mxu0 0.0
    %1767 = vmatpush2.msra.mxu0 0.0
    %1768 = vmatprep.subr.mxu0 0.0
    %1769 = vmatpush2.msra.mxu0 0.0
    %1770 = vmatprep.subr.mxu0 0.0
    %1771 = vmatpush2.msra.mxu0 0.0
    %1772 = vmatprep.subr.mxu0 0.0
    %1773 = vmatpush2.msra.mxu0 0.0
    %1774 = vmatprep.subr.mxu0 0.0
    %1775 = vmatpush2.msra.mxu0 0.0
    %1776 = vmatprep.subr.mxu0 0.0
    %1777 = vmatpush2.msra.mxu0 0.0
    %1778 = vmatprep.subr.mxu0 0.0
    %1779 = vmatpush2.msra.mxu0 0.0
    %1780 = vmatprep.subr.mxu0 0.0
    %1781 = vmatpush2.msra.mxu0 0.0
    %1782 = vmatprep.subr.mxu0 0.0
    %1783 = vmatpush2.msra.mxu0 0.0
    %1784 = vmatprep.subr.mxu0 0.0
    %1785 = vmatpush2.msra.mxu0 0.0
    %1786 = vmatprep.subr.mxu0 0.0
    %1787 = vmatpush2.msra.mxu0 0.0
    %1788 = vmatprep.subr.mxu0 0.0
    %1789 = vmatpush2.msra.mxu0 0.0
    %1790 = vmatprep.subr.mxu0 0.0
    %1791 = vmatpush2.msra.mxu0 0.0
    %1792 = vmatprep.mubr.f32.mxu0 0.0
    %1793 = vmatmul.mubr.f32.gmra.mxu0 %v1726
    %v1794 = vpop.f32.mrf.mxu0
    %v1795 = vadd.f32 0.0, %v1794
    %v1796 = vpop.f32.mrf.mxu0
    %1797 = vdwg.mxu0
    %v1798 = vmul.f32 %v1795, %v1725
    %v1799 = vsel %vm1180, %v1798, 0.0
    %1800 = vadd.xlane.f32.xlu0 %v1799
    %v1801 = vpop.xlane.xlu0 %1800
    %v1802 = vadd.f32 %v1723, %v1801
    %v1804 = vrot.slane %v1725, 2
    %v1806 = vmul.f32 %v1165, %v1804
    %v1807 = vsel %vm1451, %v1806, 0.0
    %1808 = vadd.xlane.f32.xlu0 %v1807
    %v1809 = vpop.xlane.xlu0 %1808
    %v1811 = vrot.slane %v1809, 6
    %v1813 = vadd.f32 %v1802, %v1811
    %v1815 = vlaneseq
    %v1816 = vshrl.u32 %v1815, 7
    %v1817 = vsub.s32 0, %v1816
    %v1818 = vrot.slane %v1169, %v1817
    %v1820 = vmul.f32 %v1818, %v1725
    %v1821 = vsel %vm1180, %v1820, 0.0
    %1822 = vadd.xlane.f32.xlu0 %v1821
    %v1823 = vpop.xlane.xlu0 %1822
    %v1824 = vadd.f32 %v1813, %v1823
    %v1825 = vmul.f32 %v1170, 1.442695
    %v1826 = vpow.pop %v1825
    %v1827 = vsel %vm1180, %v1178, -inf
    %1828 = vmax.xlane.f32.xlu0 %v1827
    %v1829 = vpop.xlane.xlu0 %1828
    %v1830 = vsub.f32 %v1178, %v1829
    %v1831 = vmax.f32 %v1830, -80.0
    %v1832 = vmul.f32 %v1831, 1.442695
    %v1833 = vpow.pop %v1832
    %v1835 = vsel %vm1186, %v1833, 0
    %1837 = vmatprep.subr.mxu0 0.0
    %1838 = vmatpush1.msra.mxu0 0.0
    %1839 = vmatprep.subr.mxu0 0.0
    %1840 = vmatpush1.msra.mxu0 0.0
    %1841 = vmatprep.subr.mxu0 0.0
    %1842 = vmatpush1.msra.mxu0 0.0
    %1843 = vmatprep.subr.mxu0 0.0
    %1844 = vmatpush1.msra.mxu0 0.0
    %1845 = vmatprep.subr.mxu0 0.0
    %1846 = vmatpush1.msra.mxu0 0.0
    %1847 = vmatprep.subr.mxu0 0.0
    %1848 = vmatpush1.msra.mxu0 0.0
    %1849 = vmatprep.subr.mxu0 0.0
    %1850 = vmatpush1.msra.mxu0 0.0
    %1851 = vmatprep.subr.mxu0 0.0
    %1852 = vmatpush1.msra.mxu0 0.0
    %1853 = vmatprep.subr.mxu0 0.0
    %1854 = vmatpush1.msra.mxu0 0.0
    %1855 = vmatprep.subr.mxu0 0.0
    %1856 = vmatpush1.msra.mxu0 0.0
    %1857 = vmatprep.subr.mxu0 0.0
    %1858 = vmatpush1.msra.mxu0 0.0
    %1859 = vmatprep.subr.mxu0 0.0
    %1860 = vmatpush1.msra.mxu0 0.0
    %1861 = vmatprep.subr.mxu0 0.0
    %1862 = vmatpush1.msra.mxu0 0.0
    %1863 = vmatprep.subr.mxu0 0.0
    %1864 = vmatpush1.msra.mxu0 0.0
    %1865 = vmatprep.subr.mxu0 0.0
    %1866 = vmatpush1.msra.mxu0 0.0
    %1867 = vmatprep.subr.mxu0 0.0
    %1868 = vmatpush1.msra.mxu0 %v1826
    %1869 = vmatprep.subr.mxu0 0.0
    %1870 = vmatpush2.msra.mxu0 0.0
    %1871 = vmatprep.subr.mxu0 0.0
    %1872 = vmatpush2.msra.mxu0 0.0
    %1873 = vmatprep.subr.mxu0 0.0
    %1874 = vmatpush2.msra.mxu0 0.0
    %1875 = vmatprep.subr.mxu0 0.0
    %1876 = vmatpush2.msra.mxu0 0.0
    %1877 = vmatprep.subr.mxu0 0.0
    %1878 = vmatpush2.msra.mxu0 0.0
    %1879 = vmatprep.subr.mxu0 0.0
    %1880 = vmatpush2.msra.mxu0 0.0
    %1881 = vmatprep.subr.mxu0 0.0
    %1882 = vmatpush2.msra.mxu0 0.0
    %1883 = vmatprep.subr.mxu0 0.0
    %1884 = vmatpush2.msra.mxu0 0.0
    %1885 = vmatprep.subr.mxu0 0.0
    %1886 = vmatpush2.msra.mxu0 0.0
    %1887 = vmatprep.subr.mxu0 0.0
    %1888 = vmatpush2.msra.mxu0 0.0
    %1889 = vmatprep.subr.mxu0 0.0
    %1890 = vmatpush2.msra.mxu0 0.0
    %1891 = vmatprep.subr.mxu0 0.0
    %1892 = vmatpush2.msra.mxu0 0.0
    %1893 = vmatprep.subr.mxu0 0.0
    %1894 = vmatpush2.msra.mxu0 0.0
    %1895 = vmatprep.subr.mxu0 0.0
    %1896 = vmatpush2.msra.mxu0 0.0
    %1897 = vmatprep.subr.mxu0 0.0
    %1898 = vmatpush2.msra.mxu0 0.0
    %1899 = vmatprep.subr.mxu0 0.0
    %1900 = vmatpush2.msra.mxu0 0.0
    %1901 = vmatprep.mubr.f32.mxu0 0.0
    %1902 = vmatmul.mubr.f32.gmra.mxu0 %v1835
    %v1903 = vpop.f32.mrf.mxu0
    %v1904 = vadd.f32 0.0, %v1903
    %v1905 = vpop.f32.mrf.mxu0
    %1906 = vdwg.mxu0
    %v1907 = vmax.f32 %v1904, 1e-30
    %v1908 = vlog2.pop %v1907
    %v1909 = vmul.f32 %v1908, 0.6931472
    %v1910 = vadd.f32 %v1829, %v1909
    %v1912 = vrot.slane %v1162, 2
    %v1914 = vadd.f32 %v1910, %v1912
    %v1915 = vsel %vm1180, %v1914, -inf
    %1916 = vmax.xlane.f32.xlu0 %v1915
    %v1917 = vpop.xlane.xlu0 %1916
    %v1918 = vsub.f32 %v1914, %v1917
    %v1919 = vmax.f32 %v1918, -80.0
    %v1920 = vmul.f32 %v1919, 1.442695
    %v1921 = vpow.pop %v1920
    %v1923 = vsel %vm1186, %v1921, 0
    %1925 = vmatprep.subr.mxu0 0.0
    %1926 = vmatpush1.msra.mxu0 0.0
    %1927 = vmatprep.subr.mxu0 0.0
    %1928 = vmatpush1.msra.mxu0 0.0
    %1929 = vmatprep.subr.mxu0 0.0
    %1930 = vmatpush1.msra.mxu0 0.0
    %1931 = vmatprep.subr.mxu0 0.0
    %1932 = vmatpush1.msra.mxu0 0.0
    %1933 = vmatprep.subr.mxu0 0.0
    %1934 = vmatpush1.msra.mxu0 0.0
    %1935 = vmatprep.subr.mxu0 0.0
    %1936 = vmatpush1.msra.mxu0 0.0
    %1937 = vmatprep.subr.mxu0 0.0
    %1938 = vmatpush1.msra.mxu0 0.0
    %1939 = vmatprep.subr.mxu0 0.0
    %1940 = vmatpush1.msra.mxu0 0.0
    %1941 = vmatprep.subr.mxu0 0.0
    %1942 = vmatpush1.msra.mxu0 0.0
    %1943 = vmatprep.subr.mxu0 0.0
    %1944 = vmatpush1.msra.mxu0 0.0
    %1945 = vmatprep.subr.mxu0 0.0
    %1946 = vmatpush1.msra.mxu0 0.0
    %1947 = vmatprep.subr.mxu0 0.0
    %1948 = vmatpush1.msra.mxu0 0.0
    %1949 = vmatprep.subr.mxu0 0.0
    %1950 = vmatpush1.msra.mxu0 0.0
    %1951 = vmatprep.subr.mxu0 0.0
    %1952 = vmatpush1.msra.mxu0 0.0
    %1953 = vmatprep.subr.mxu0 0.0
    %1954 = vmatpush1.msra.mxu0 0.0
    %1955 = vmatprep.subr.mxu0 0.0
    %1956 = vmatpush1.msra.mxu0 %v1826
    %1957 = vmatprep.subr.mxu0 0.0
    %1958 = vmatpush2.msra.mxu0 0.0
    %1959 = vmatprep.subr.mxu0 0.0
    %1960 = vmatpush2.msra.mxu0 0.0
    %1961 = vmatprep.subr.mxu0 0.0
    %1962 = vmatpush2.msra.mxu0 0.0
    %1963 = vmatprep.subr.mxu0 0.0
    %1964 = vmatpush2.msra.mxu0 0.0
    %1965 = vmatprep.subr.mxu0 0.0
    %1966 = vmatpush2.msra.mxu0 0.0
    %1967 = vmatprep.subr.mxu0 0.0
    %1968 = vmatpush2.msra.mxu0 0.0
    %1969 = vmatprep.subr.mxu0 0.0
    %1970 = vmatpush2.msra.mxu0 0.0
    %1971 = vmatprep.subr.mxu0 0.0
    %1972 = vmatpush2.msra.mxu0 0.0
    %1973 = vmatprep.subr.mxu0 0.0
    %1974 = vmatpush2.msra.mxu0 0.0
    %1975 = vmatprep.subr.mxu0 0.0
    %1976 = vmatpush2.msra.mxu0 0.0
    %1977 = vmatprep.subr.mxu0 0.0
    %1978 = vmatpush2.msra.mxu0 0.0
    %1979 = vmatprep.subr.mxu0 0.0
    %1980 = vmatpush2.msra.mxu0 0.0
    %1981 = vmatprep.subr.mxu0 0.0
    %1982 = vmatpush2.msra.mxu0 0.0
    %1983 = vmatprep.subr.mxu0 0.0
    %1984 = vmatpush2.msra.mxu0 0.0
    %1985 = vmatprep.subr.mxu0 0.0
    %1986 = vmatpush2.msra.mxu0 0.0
    %1987 = vmatprep.subr.mxu0 0.0
    %1988 = vmatpush2.msra.mxu0 0.0
    %1989 = vmatprep.mubr.f32.mxu0 0.0
    %1990 = vmatmul.mubr.f32.gmra.mxu0 %v1923
    %v1991 = vpop.f32.mrf.mxu0
    %v1992 = vadd.f32 0.0, %v1991
    %v1993 = vpop.f32.mrf.mxu0
    %1994 = vdwg.mxu0
    %v1995 = vmax.f32 %v1992, 1e-30
    %v1996 = vlog2.pop %v1995
    %v1997 = vmul.f32 %v1996, 0.6931472
    %v1998 = vadd.f32 %v1917, %v1997
    %v1999 = vrot.slane %v1162, 4
    %v2001 = vadd.f32 %v1998, %v1999
    %v2002 = vsel %vm1180, %v2001, -inf
    %2003 = vmax.xlane.f32.xlu0 %v2002
    %v2004 = vpop.xlane.xlu0 %2003
    %v2005 = vsub.f32 %v2001, %v2004
    %v2006 = vmax.f32 %v2005, -80.0
    %v2007 = vmul.f32 %v2006, 1.442695
    %v2008 = vpow.pop %v2007
    %v2010 = vsel %vm1186, %v2008, 0
    %2012 = vmatprep.subr.mxu0 0.0
    %2013 = vmatpush1.msra.mxu0 0.0
    %2014 = vmatprep.subr.mxu0 0.0
    %2015 = vmatpush1.msra.mxu0 0.0
    %2016 = vmatprep.subr.mxu0 0.0
    %2017 = vmatpush1.msra.mxu0 0.0
    %2018 = vmatprep.subr.mxu0 0.0
    %2019 = vmatpush1.msra.mxu0 0.0
    %2020 = vmatprep.subr.mxu0 0.0
    %2021 = vmatpush1.msra.mxu0 0.0
    %2022 = vmatprep.subr.mxu0 0.0
    %2023 = vmatpush1.msra.mxu0 0.0
    %2024 = vmatprep.subr.mxu0 0.0
    %2025 = vmatpush1.msra.mxu0 0.0
    %2026 = vmatprep.subr.mxu0 0.0
    %2027 = vmatpush1.msra.mxu0 0.0
    %2028 = vmatprep.subr.mxu0 0.0
    %2029 = vmatpush1.msra.mxu0 0.0
    %2030 = vmatprep.subr.mxu0 0.0
    %2031 = vmatpush1.msra.mxu0 0.0
    %2032 = vmatprep.subr.mxu0 0.0
    %2033 = vmatpush1.msra.mxu0 0.0
    %2034 = vmatprep.subr.mxu0 0.0
    %2035 = vmatpush1.msra.mxu0 0.0
    %2036 = vmatprep.subr.mxu0 0.0
    %2037 = vmatpush1.msra.mxu0 0.0
    %2038 = vmatprep.subr.mxu0 0.0
    %2039 = vmatpush1.msra.mxu0 0.0
    %2040 = vmatprep.subr.mxu0 0.0
    %2041 = vmatpush1.msra.mxu0 0.0
    %2042 = vmatprep.subr.mxu0 0.0
    %2043 = vmatpush1.msra.mxu0 %v1826
    %2044 = vmatprep.subr.mxu0 0.0
    %2045 = vmatpush2.msra.mxu0 0.0
    %2046 = vmatprep.subr.mxu0 0.0
    %2047 = vmatpush2.msra.mxu0 0.0
    %2048 = vmatprep.subr.mxu0 0.0
    %2049 = vmatpush2.msra.mxu0 0.0
    %2050 = vmatprep.subr.mxu0 0.0
    %2051 = vmatpush2.msra.mxu0 0.0
    %2052 = vmatprep.subr.mxu0 0.0
    %2053 = vmatpush2.msra.mxu0 0.0
    %2054 = vmatprep.subr.mxu0 0.0
    %2055 = vmatpush2.msra.mxu0 0.0
    %2056 = vmatprep.subr.mxu0 0.0
    %2057 = vmatpush2.msra.mxu0 0.0
    %2058 = vmatprep.subr.mxu0 0.0
    %2059 = vmatpush2.msra.mxu0 0.0
    %2060 = vmatprep.subr.mxu0 0.0
    %2061 = vmatpush2.msra.mxu0 0.0
    %2062 = vmatprep.subr.mxu0 0.0
    %2063 = vmatpush2.msra.mxu0 0.0
    %2064 = vmatprep.subr.mxu0 0.0
    %2065 = vmatpush2.msra.mxu0 0.0
    %2066 = vmatprep.subr.mxu0 0.0
    %2067 = vmatpush2.msra.mxu0 0.0
    %2068 = vmatprep.subr.mxu0 0.0
    %2069 = vmatpush2.msra.mxu0 0.0
    %2070 = vmatprep.subr.mxu0 0.0
    %2071 = vmatpush2.msra.mxu0 0.0
    %2072 = vmatprep.subr.mxu0 0.0
    %2073 = vmatpush2.msra.mxu0 0.0
    %2074 = vmatprep.subr.mxu0 0.0
    %2075 = vmatpush2.msra.mxu0 0.0
    %2076 = vmatprep.mubr.f32.mxu0 0.0
    %2077 = vmatmul.mubr.f32.gmra.mxu0 %v2010
    %v2078 = vpop.f32.mrf.mxu0
    %v2079 = vadd.f32 0.0, %v2078
    %v2080 = vpop.f32.mrf.mxu0
    %2081 = vdwg.mxu0
    %v2082 = vmax.f32 %v2079, 1e-30
    %v2083 = vlog2.pop %v2082
    %v2084 = vmul.f32 %v2083, 0.6931472
    %v2085 = vadd.f32 %v2004, %v2084
    %v2086 = vrot.slane %v1162, 6
    %v2088 = vadd.f32 %v2085, %v2086
    %v2089 = vsel %vm1180, %v2088, -inf
    %2090 = vmax.xlane.f32.xlu0 %v2089
    %v2091 = vpop.xlane.xlu0 %2090
    %v2092 = vsub.f32 %v2088, %v2091
    %v2093 = vmax.f32 %v2092, -80.0
    %v2094 = vmul.f32 %v2093, 1.442695
    %v2095 = vpow.pop %v2094
    %v2097 = vsel %vm1186, %v2095, 0
    %2099 = vmatprep.subr.mxu0 0.0
    %2100 = vmatpush1.msra.mxu0 0.0
    %2101 = vmatprep.subr.mxu0 0.0
    %2102 = vmatpush1.msra.mxu0 0.0
    %2103 = vmatprep.subr.mxu0 0.0
    %2104 = vmatpush1.msra.mxu0 0.0
    %2105 = vmatprep.subr.mxu0 0.0
    %2106 = vmatpush1.msra.mxu0 0.0
    %2107 = vmatprep.subr.mxu0 0.0
    %2108 = vmatpush1.msra.mxu0 0.0
    %2109 = vmatprep.subr.mxu0 0.0
    %2110 = vmatpush1.msra.mxu0 0.0
    %2111 = vmatprep.subr.mxu0 0.0
    %2112 = vmatpush1.msra.mxu0 0.0
    %2113 = vmatprep.subr.mxu0 0.0
    %2114 = vmatpush1.msra.mxu0 0.0
    %2115 = vmatprep.subr.mxu0 0.0
    %2116 = vmatpush1.msra.mxu0 0.0
    %2117 = vmatprep.subr.mxu0 0.0
    %2118 = vmatpush1.msra.mxu0 0.0
    %2119 = vmatprep.subr.mxu0 0.0
    %2120 = vmatpush1.msra.mxu0 0.0
    %2121 = vmatprep.subr.mxu0 0.0
    %2122 = vmatpush1.msra.mxu0 0.0
    %2123 = vmatprep.subr.mxu0 0.0
    %2124 = vmatpush1.msra.mxu0 0.0
    %2125 = vmatprep.subr.mxu0 0.0
    %2126 = vmatpush1.msra.mxu0 0.0
    %2127 = vmatprep.subr.mxu0 0.0
    %2128 = vmatpush1.msra.mxu0 0.0
    %2129 = vmatprep.subr.mxu0 0.0
    %2130 = vmatpush1.msra.mxu0 %v1826
    %2131 = vmatprep.subr.mxu0 0.0
    %2132 = vmatpush2.msra.mxu0 0.0
    %2133 = vmatprep.subr.mxu0 0.0
    %2134 = vmatpush2.msra.mxu0 0.0
    %2135 = vmatprep.subr.mxu0 0.0
    %2136 = vmatpush2.msra.mxu0 0.0
    %2137 = vmatprep.subr.mxu0 0.0
    %2138 = vmatpush2.msra.mxu0 0.0
    %2139 = vmatprep.subr.mxu0 0.0
    %2140 = vmatpush2.msra.mxu0 0.0
    %2141 = vmatprep.subr.mxu0 0.0
    %2142 = vmatpush2.msra.mxu0 0.0
    %2143 = vmatprep.subr.mxu0 0.0
    %2144 = vmatpush2.msra.mxu0 0.0
    %2145 = vmatprep.subr.mxu0 0.0
    %2146 = vmatpush2.msra.mxu0 0.0
    %2147 = vmatprep.subr.mxu0 0.0
    %2148 = vmatpush2.msra.mxu0 0.0
    %2149 = vmatprep.subr.mxu0 0.0
    %2150 = vmatpush2.msra.mxu0 0.0
    %2151 = vmatprep.subr.mxu0 0.0
    %2152 = vmatpush2.msra.mxu0 0.0
    %2153 = vmatprep.subr.mxu0 0.0
    %2154 = vmatpush2.msra.mxu0 0.0
    %2155 = vmatprep.subr.mxu0 0.0
    %2156 = vmatpush2.msra.mxu0 0.0
    %2157 = vmatprep.subr.mxu0 0.0
    %2158 = vmatpush2.msra.mxu0 0.0
    %2159 = vmatprep.subr.mxu0 0.0
    %2160 = vmatpush2.msra.mxu0 0.0
    %2161 = vmatprep.subr.mxu0 0.0
    %2162 = vmatpush2.msra.mxu0 0.0
    %2163 = vmatprep.mubr.f32.mxu0 0.0
    %2164 = vmatmul.mubr.f32.gmra.mxu0 %v2097
    %v2165 = vpop.f32.mrf.mxu0
    %v2166 = vadd.f32 0.0, %v2165
    %v2167 = vpop.f32.mrf.mxu0
    %2168 = vdwg.mxu0
    %v2169 = vmax.f32 %v2166, 1e-30
    %v2170 = vlog2.pop %v2169
    %v2171 = vmul.f32 %v2170, 0.6931472
    %v2172 = vadd.f32 %v2091, %v2171
    %v2173 = vadd.f32 %v2172, %v1165
    %v2174 = vsel %vm1180, %v2173, -inf
    %2175 = vmax.xlane.f32.xlu0 %v2174
    %v2176 = vpop.xlane.xlu0 %2175
    %v2177 = vsub.f32 %v2173, %v2176
    %v2178 = vmax.f32 %v2177, -80.0
    %v2179 = vmul.f32 %v2178, 1.442695
    %v2180 = vpow.pop %v2179
    %v2182 = vsel %vm1186, %v2180, 0
    %2184 = vmatprep.subr.mxu0 0.0
    %2185 = vmatpush1.msra.mxu0 0.0
    %2186 = vmatprep.subr.mxu0 0.0
    %2187 = vmatpush1.msra.mxu0 0.0
    %2188 = vmatprep.subr.mxu0 0.0
    %2189 = vmatpush1.msra.mxu0 0.0
    %2190 = vmatprep.subr.mxu0 0.0
    %2191 = vmatpush1.msra.mxu0 0.0
    %2192 = vmatprep.subr.mxu0 0.0
    %2193 = vmatpush1.msra.mxu0 0.0
    %2194 = vmatprep.subr.mxu0 0.0
    %2195 = vmatpush1.msra.mxu0 0.0
    %2196 = vmatprep.subr.mxu0 0.0
    %2197 = vmatpush1.msra.mxu0 0.0
    %2198 = vmatprep.subr.mxu0 0.0
    %2199 = vmatpush1.msra.mxu0 0.0
    %2200 = vmatprep.subr.mxu0 0.0
    %2201 = vmatpush1.msra.mxu0 0.0
    %2202 = vmatprep.subr.mxu0 0.0
    %2203 = vmatpush1.msra.mxu0 0.0
    %2204 = vmatprep.subr.mxu0 0.0
    %2205 = vmatpush1.msra.mxu0 0.0
    %2206 = vmatprep.subr.mxu0 0.0
    %2207 = vmatpush1.msra.mxu0 0.0
    %2208 = vmatprep.subr.mxu0 0.0
    %2209 = vmatpush1.msra.mxu0 0.0
    %2210 = vmatprep.subr.mxu0 0.0
    %2211 = vmatpush1.msra.mxu0 0.0
    %2212 = vmatprep.subr.mxu0 0.0
    %2213 = vmatpush1.msra.mxu0 0.0
    %2214 = vmatprep.subr.mxu0 0.0
    %2215 = vmatpush1.msra.mxu0 %v1826
    %2216 = vmatprep.subr.mxu0 0.0
    %2217 = vmatpush2.msra.mxu0 0.0
    %2218 = vmatprep.subr.mxu0 0.0
    %2219 = vmatpush2.msra.mxu0 0.0
    %2220 = vmatprep.subr.mxu0 0.0
    %2221 = vmatpush2.msra.mxu0 0.0
    %2222 = vmatprep.subr.mxu0 0.0
    %2223 = vmatpush2.msra.mxu0 0.0
    %2224 = vmatprep.subr.mxu0 0.0
    %2225 = vmatpush2.msra.mxu0 0.0
    %2226 = vmatprep.subr.mxu0 0.0
    %2227 = vmatpush2.msra.mxu0 0.0
    %2228 = vmatprep.subr.mxu0 0.0
    %2229 = vmatpush2.msra.mxu0 0.0
    %2230 = vmatprep.subr.mxu0 0.0
    %2231 = vmatpush2.msra.mxu0 0.0
    %2232 = vmatprep.subr.mxu0 0.0
    %2233 = vmatpush2.msra.mxu0 0.0
    %2234 = vmatprep.subr.mxu0 0.0
    %2235 = vmatpush2.msra.mxu0 0.0
    %2236 = vmatprep.subr.mxu0 0.0
    %2237 = vmatpush2.msra.mxu0 0.0
    %2238 = vmatprep.subr.mxu0 0.0
    %2239 = vmatpush2.msra.mxu0 0.0
    %2240 = vmatprep.subr.mxu0 0.0
    %2241 = vmatpush2.msra.mxu0 0.0
    %2242 = vmatprep.subr.mxu0 0.0
    %2243 = vmatpush2.msra.mxu0 0.0
    %2244 = vmatprep.subr.mxu0 0.0
    %2245 = vmatpush2.msra.mxu0 0.0
    %2246 = vmatprep.subr.mxu0 0.0
    %2247 = vmatpush2.msra.mxu0 0.0
    %2248 = vmatprep.mubr.f32.mxu0 0.0
    %2249 = vmatmul.mubr.f32.gmra.mxu0 %v2182
    %v2250 = vpop.f32.mrf.mxu0
    %v2251 = vadd.f32 0.0, %v2250
    %v2252 = vpop.f32.mrf.mxu0
    %2253 = vdwg.mxu0
    %v2254 = vmax.f32 %v2251, 1e-30
    %v2255 = vlog2.pop %v2254
    %v2256 = vmul.f32 %v2255, 0.6931472
    %v2257 = vadd.f32 %v2176, %v2256
    %v2259 = vrot.slane %v1165, 2
    %v2261 = vadd.f32 %v2257, %v2259
    %v2262 = vsel %vm1180, %v2261, -inf
    %2263 = vmax.xlane.f32.xlu0 %v2262
    %v2264 = vpop.xlane.xlu0 %2263
    %v2265 = vsub.f32 %v2261, %v2264
    %v2266 = vmax.f32 %v2265, -80.0
    %v2267 = vmul.f32 %v2266, 1.442695
    %v2268 = vpow.pop %v2267
    %v2270 = vsel %vm1186, %v2268, 0
    %2272 = vmatprep.subr.mxu0 0.0
    %2273 = vmatpush1.msra.mxu0 0.0
    %2274 = vmatprep.subr.mxu0 0.0
    %2275 = vmatpush1.msra.mxu0 0.0
    %2276 = vmatprep.subr.mxu0 0.0
    %2277 = vmatpush1.msra.mxu0 0.0
    %2278 = vmatprep.subr.mxu0 0.0
    %2279 = vmatpush1.msra.mxu0 0.0
    %2280 = vmatprep.subr.mxu0 0.0
    %2281 = vmatpush1.msra.mxu0 0.0
    %2282 = vmatprep.subr.mxu0 0.0
    %2283 = vmatpush1.msra.mxu0 0.0
    %2284 = vmatprep.subr.mxu0 0.0
    %2285 = vmatpush1.msra.mxu0 0.0
    %2286 = vmatprep.subr.mxu0 0.0
    %2287 = vmatpush1.msra.mxu0 0.0
    %2288 = vmatprep.subr.mxu0 0.0
    %2289 = vmatpush1.msra.mxu0 0.0
    %2290 = vmatprep.subr.mxu0 0.0
    %2291 = vmatpush1.msra.mxu0 0.0
    %2292 = vmatprep.subr.mxu0 0.0
    %2293 = vmatpush1.msra.mxu0 0.0
    %2294 = vmatprep.subr.mxu0 0.0
    %2295 = vmatpush1.msra.mxu0 0.0
    %2296 = vmatprep.subr.mxu0 0.0
    %2297 = vmatpush1.msra.mxu0 0.0
    %2298 = vmatprep.subr.mxu0 0.0
    %2299 = vmatpush1.msra.mxu0 0.0
    %2300 = vmatprep.subr.mxu0 0.0
    %2301 = vmatpush1.msra.mxu0 0.0
    %2302 = vmatprep.subr.mxu0 0.0
    %2303 = vmatpush1.msra.mxu0 %v1826
    %2304 = vmatprep.subr.mxu0 0.0
    %2305 = vmatpush2.msra.mxu0 0.0
    %2306 = vmatprep.subr.mxu0 0.0
    %2307 = vmatpush2.msra.mxu0 0.0
    %2308 = vmatprep.subr.mxu0 0.0
    %2309 = vmatpush2.msra.mxu0 0.0
    %2310 = vmatprep.subr.mxu0 0.0
    %2311 = vmatpush2.msra.mxu0 0.0
    %2312 = vmatprep.subr.mxu0 0.0
    %2313 = vmatpush2.msra.mxu0 0.0
    %2314 = vmatprep.subr.mxu0 0.0
    %2315 = vmatpush2.msra.mxu0 0.0
    %2316 = vmatprep.subr.mxu0 0.0
    %2317 = vmatpush2.msra.mxu0 0.0
    %2318 = vmatprep.subr.mxu0 0.0
    %2319 = vmatpush2.msra.mxu0 0.0
    %2320 = vmatprep.subr.mxu0 0.0
    %2321 = vmatpush2.msra.mxu0 0.0
    %2322 = vmatprep.subr.mxu0 0.0
    %2323 = vmatpush2.msra.mxu0 0.0
    %2324 = vmatprep.subr.mxu0 0.0
    %2325 = vmatpush2.msra.mxu0 0.0
    %2326 = vmatprep.subr.mxu0 0.0
    %2327 = vmatpush2.msra.mxu0 0.0
    %2328 = vmatprep.subr.mxu0 0.0
    %2329 = vmatpush2.msra.mxu0 0.0
    %2330 = vmatprep.subr.mxu0 0.0
    %2331 = vmatpush2.msra.mxu0 0.0
    %2332 = vmatprep.subr.mxu0 0.0
    %2333 = vmatpush2.msra.mxu0 0.0
    %2334 = vmatprep.subr.mxu0 0.0
    %2335 = vmatpush2.msra.mxu0 0.0
    %2336 = vmatprep.mubr.f32.mxu0 0.0
    %2337 = vmatmul.mubr.f32.gmra.mxu0 %v2270
    %v2338 = vpop.f32.mrf.mxu0
    %v2339 = vadd.f32 0.0, %v2338
    %v2340 = vpop.f32.mrf.mxu0
    %2341 = vdwg.mxu0
    %v2342 = vmax.f32 %v2339, 1e-30
    %v2343 = vlog2.pop %v2342
    %v2344 = vmul.f32 %v2343, 0.6931472
    %v2345 = vadd.f32 %v2264, %v2344
    %v2346 = vrot.slane %v1165, 4
    %v2348 = vadd.f32 %v2345, %v2346
    %v2349 = vsel %vm1180, %v2348, -inf
    %2350 = vmax.xlane.f32.xlu0 %v2349
    %v2351 = vpop.xlane.xlu0 %2350
    %v2352 = vsub.f32 %v2348, %v2351
    %v2353 = vmax.f32 %v2352, -80.0
    %v2354 = vmul.f32 %v2353, 1.442695
    %v2355 = vpow.pop %v2354
    %v2357 = vsel %vm1186, %v2355, 0
    %2359 = vmatprep.subr.mxu0 0.0
    %2360 = vmatpush1.msra.mxu0 0.0
    %2361 = vmatprep.subr.mxu0 0.0
    %2362 = vmatpush1.msra.mxu0 0.0
    %2363 = vmatprep.subr.mxu0 0.0
    %2364 = vmatpush1.msra.mxu0 0.0
    %2365 = vmatprep.subr.mxu0 0.0
    %2366 = vmatpush1.msra.mxu0 0.0
    %2367 = vmatprep.subr.mxu0 0.0
    %2368 = vmatpush1.msra.mxu0 0.0
    %2369 = vmatprep.subr.mxu0 0.0
    %2370 = vmatpush1.msra.mxu0 0.0
    %2371 = vmatprep.subr.mxu0 0.0
    %2372 = vmatpush1.msra.mxu0 0.0
    %2373 = vmatprep.subr.mxu0 0.0
    %2374 = vmatpush1.msra.mxu0 0.0
    %2375 = vmatprep.subr.mxu0 0.0
    %2376 = vmatpush1.msra.mxu0 0.0
    %2377 = vmatprep.subr.mxu0 0.0
    %2378 = vmatpush1.msra.mxu0 0.0
    %2379 = vmatprep.subr.mxu0 0.0
    %2380 = vmatpush1.msra.mxu0 0.0
    %2381 = vmatprep.subr.mxu0 0.0
    %2382 = vmatpush1.msra.mxu0 0.0
    %2383 = vmatprep.subr.mxu0 0.0
    %2384 = vmatpush1.msra.mxu0 0.0
    %2385 = vmatprep.subr.mxu0 0.0
    %2386 = vmatpush1.msra.mxu0 0.0
    %2387 = vmatprep.subr.mxu0 0.0
    %2388 = vmatpush1.msra.mxu0 0.0
    %2389 = vmatprep.subr.mxu0 0.0
    %2390 = vmatpush1.msra.mxu0 %v1826
    %2391 = vmatprep.subr.mxu0 0.0
    %2392 = vmatpush2.msra.mxu0 0.0
    %2393 = vmatprep.subr.mxu0 0.0
    %2394 = vmatpush2.msra.mxu0 0.0
    %2395 = vmatprep.subr.mxu0 0.0
    %2396 = vmatpush2.msra.mxu0 0.0
    %2397 = vmatprep.subr.mxu0 0.0
    %2398 = vmatpush2.msra.mxu0 0.0
    %2399 = vmatprep.subr.mxu0 0.0
    %2400 = vmatpush2.msra.mxu0 0.0
    %2401 = vmatprep.subr.mxu0 0.0
    %2402 = vmatpush2.msra.mxu0 0.0
    %2403 = vmatprep.subr.mxu0 0.0
    %2404 = vmatpush2.msra.mxu0 0.0
    %2405 = vmatprep.subr.mxu0 0.0
    %2406 = vmatpush2.msra.mxu0 0.0
    %2407 = vmatprep.subr.mxu0 0.0
    %2408 = vmatpush2.msra.mxu0 0.0
    %2409 = vmatprep.subr.mxu0 0.0
    %2410 = vmatpush2.msra.mxu0 0.0
    %2411 = vmatprep.subr.mxu0 0.0
    %2412 = vmatpush2.msra.mxu0 0.0
    %2413 = vmatprep.subr.mxu0 0.0
    %2414 = vmatpush2.msra.mxu0 0.0
    %2415 = vmatprep.subr.mxu0 0.0
    %2416 = vmatpush2.msra.mxu0 0.0
    %2417 = vmatprep.subr.mxu0 0.0
    %2418 = vmatpush2.msra.mxu0 0.0
    %2419 = vmatprep.subr.mxu0 0.0
    %2420 = vmatpush2.msra.mxu0 0.0
    %2421 = vmatprep.subr.mxu0 0.0
    %2422 = vmatpush2.msra.mxu0 0.0
    %2423 = vmatprep.mubr.f32.mxu0 0.0
    %2424 = vmatmul.mubr.f32.gmra.mxu0 %v2357
    %v2425 = vpop.f32.mrf.mxu0
    %v2426 = vadd.f32 0.0, %v2425
    %v2427 = vpop.f32.mrf.mxu0
    %2428 = vdwg.mxu0
    %v2429 = vmax.f32 %v2426, 1e-30
    %v2430 = vlog2.pop %v2429
    %v2431 = vmul.f32 %v2430, 0.6931472
    %v2432 = vadd.f32 %v2351, %v2431
    %v2433 = vrot.slane %v1165, 6
    %v2435 = vadd.f32 %v2432, %v2433
    %v2436 = vadd.f32 %v2435, %v1818
    %v2437 = vsel %vm1180, %v2436, -inf
    %2438 = vmax.xlane.f32.xlu0 %v2437
    %v2439 = vpop.xlane.xlu0 %2438
    %v2440 = vsub.f32 %v2436, %v2439
    %v2441 = vmax.f32 %v2440, -80.0
    %v2442 = vmul.f32 %v2441, 1.442695
    %v2443 = vpow.pop %v2442
    %v2444 = vsel %vm1180, %v2443, 0.0
    %2445 = vadd.xlane.f32.xlu0 %v2444
    %v2446 = vpop.xlane.xlu0 %2445
    %v2447 = vlog2.pop %v2446
    %v2448 = vmul.f32 %v2447, 0.6931472
    %v2449 = vadd.f32 %v2439, %v2448
    %v2450 = vsub.f32 %v2449, %v1824
    %vm2451 = vcmask 1024
    %v2452 = vsel %vm2451, %v2450, 0.0
    %v2453 = vrot.slane %v2452, 4
    %v2454 = vadd.f32 %v2452, %v2453
    %v2455 = vrot.slane %v2454, 2
    %v2456 = vadd.f32 %v2454, %v2455
    %v2457 = vrot.slane %v2456, 1
    %v2458 = vadd.f32 %v2456, %v2457
    %v2459 = vmul.f32 %v2458, 0.5
    %vm2460 = vcmask 0
    %2461 = vst.msk [vmem:[#allocation2] sm:$0x1] %vm2460, %v2459
    %2463 = vset.pattern.permute.xlu0 0
    %2464 = vperm.xlu0 %2463, %v1178
    %v2465 = vpop.permute.xlu0 %2464
    %v2467 = vlaneseq
    %v2468 = vshrl.u32 %v2467, 7
    %v2469 = vsub.s32 0, %v2468
    %v2470 = vrot.slane %v1170, %v2469
    %v2471 = vadd.f32 %v2465, %v2470
    %2472 = vset.pattern.permute.xlu0 1
    %2473 = vperm.xlu0 %2472, %v1178
    %v2474 = vpop.permute.xlu0 %2473
    %v2476 = vlaneseq
    %v2477 = vshrl.u32 %v2476, 7
    %v2478 = vsub.s32 1, %v2477
    %v2479 = vrot.slane %v1170, %v2478
    %v2480 = vadd.f32 %v2474, %v2479
    %vm2481 = vcmp.gt.f32.partialorder %v2480, %v2471
    %v2482 = vsel %vm2481, %v2480, %v2471
    %v2483 = vsel %vm2481, 1, 0
    %2484 = vset.pattern.permute.xlu0 2
    %2485 = vperm.xlu0 %2484, %v1178
    %v2486 = vpop.permute.xlu0 %2485
    %v2488 = vlaneseq
    %v2489 = vshrl.u32 %v2488, 7
    %v2490 = vsub.s32 2, %v2489
    %v2491 = vrot.slane %v1170, %v2490
    %v2492 = vadd.f32 %v2486, %v2491
    %vm2493 = vcmp.gt.f32.partialorder %v2492, %v2482
    %v2494 = vsel %vm2493, %v2492, %v2482
    %v2495 = vsel %vm2493, 2, %v2483
    %2496 = vset.pattern.permute.xlu0 3
    %2497 = vperm.xlu0 %2496, %v1178
    %v2498 = vpop.permute.xlu0 %2497
    %v2500 = vlaneseq
    %v2501 = vshrl.u32 %v2500, 7
    %v2502 = vsub.s32 3, %v2501
    %v2503 = vrot.slane %v1170, %v2502
    %v2504 = vadd.f32 %v2498, %v2503
    %vm2505 = vcmp.gt.f32.partialorder %v2504, %v2494
    %v2506 = vsel %vm2505, %v2504, %v2494
    %v2507 = vsel %vm2505, 3, %v2495
    %2508 = vset.pattern.permute.xlu0 4
    %2509 = vperm.xlu0 %2508, %v1178
    %v2510 = vpop.permute.xlu0 %2509
    %v2512 = vlaneseq
    %v2513 = vshrl.u32 %v2512, 7
    %v2514 = vsub.s32 4, %v2513
    %v2515 = vrot.slane %v1170, %v2514
    %v2516 = vadd.f32 %v2510, %v2515
    %vm2517 = vcmp.gt.f32.partialorder %v2516, %v2506
    %v2518 = vsel %vm2517, %v2516, %v2506
    %v2519 = vsel %vm2517, 4, %v2507
    %2520 = vset.pattern.permute.xlu0 5
    %2521 = vperm.xlu0 %2520, %v1178
    %v2522 = vpop.permute.xlu0 %2521
    %v2524 = vlaneseq
    %v2525 = vshrl.u32 %v2524, 7
    %v2526 = vsub.s32 5, %v2525
    %v2527 = vrot.slane %v1170, %v2526
    %v2528 = vadd.f32 %v2522, %v2527
    %vm2529 = vcmp.gt.f32.partialorder %v2528, %v2518
    %v2530 = vsel %vm2529, %v2528, %v2518
    %v2531 = vsel %vm2529, 5, %v2519
    %2532 = vset.pattern.permute.xlu0 6
    %2533 = vperm.xlu0 %2532, %v1178
    %v2534 = vpop.permute.xlu0 %2533
    %v2536 = vlaneseq
    %v2537 = vshrl.u32 %v2536, 7
    %v2538 = vsub.s32 6, %v2537
    %v2539 = vrot.slane %v1170, %v2538
    %v2540 = vadd.f32 %v2534, %v2539
    %vm2541 = vcmp.gt.f32.partialorder %v2540, %v2530
    %v2542 = vsel %vm2541, %v2540, %v2530
    %v2543 = vsel %vm2541, 6, %v2531
    %2544 = vset.pattern.permute.xlu0 7
    %2545 = vperm.xlu0 %2544, %v1178
    %v2546 = vpop.permute.xlu0 %2545
    %v2548 = vlaneseq
    %v2549 = vshrl.u32 %v2548, 7
    %v2550 = vsub.s32 7, %v2549
    %v2551 = vrot.slane %v1170, %v2550
    %v2552 = vadd.f32 %v2546, %v2551
    %vm2553 = vcmp.gt.f32.partialorder %v2552, %v2542
    %v2554 = vsel %vm2553, %v2552, %v2542
    %v2555 = vsel %vm2553, 7, %v2543
    %v2556 = vadd.f32 %v2554, %v1912
    %2558 = vset.pattern.permute.xlu0 0
    %2559 = vperm.xlu0 %2558, %v2556
    %v2560 = vpop.permute.xlu0 %2559
    %v2562 = vadd.f32 %v2560, %v2470
    %2563 = vset.pattern.permute.xlu0 1
    %2564 = vperm.xlu0 %2563, %v2556
    %v2565 = vpop.permute.xlu0 %2564
    %v2567 = vadd.f32 %v2565, %v2479
    %vm2568 = vcmp.gt.f32.partialorder %v2567, %v2562
    %v2569 = vsel %vm2568, %v2567, %v2562
    %v2570 = vsel %vm2568, 1, 0
    %2571 = vset.pattern.permute.xlu0 2
    %2572 = vperm.xlu0 %2571, %v2556
    %v2573 = vpop.permute.xlu0 %2572
    %v2575 = vadd.f32 %v2573, %v2491
    %vm2576 = vcmp.gt.f32.partialorder %v2575, %v2569
    %v2577 = vsel %vm2576, %v2575, %v2569
    %v2578 = vsel %vm2576, 2, %v2570
    %2579 = vset.pattern.permute.xlu0 3
    %2580 = vperm.xlu0 %2579, %v2556
    %v2581 = vpop.permute.xlu0 %2580
    %v2583 = vadd.f32 %v2581, %v2503
    %vm2584 = vcmp.gt.f32.partialorder %v2583, %v2577
    %v2585 = vsel %vm2584, %v2583, %v2577
    %v2586 = vsel %vm2584, 3, %v2578
    %2587 = vset.pattern.permute.xlu0 4
    %2588 = vperm.xlu0 %2587, %v2556
    %v2589 = vpop.permute.xlu0 %2588
    %v2591 = vadd.f32 %v2589, %v2515
    %vm2592 = vcmp.gt.f32.partialorder %v2591, %v2585
    %v2593 = vsel %vm2592, %v2591, %v2585
    %v2594 = vsel %vm2592, 4, %v2586
    %2595 = vset.pattern.permute.xlu0 5
    %2596 = vperm.xlu0 %2595, %v2556
    %v2597 = vpop.permute.xlu0 %2596
    %v2599 = vadd.f32 %v2597, %v2527
    %vm2600 = vcmp.gt.f32.partialorder %v2599, %v2593
    %v2601 = vsel %vm2600, %v2599, %v2593
    %v2602 = vsel %vm2600, 5, %v2594
    %2603 = vset.pattern.permute.xlu0 6
    %2604 = vperm.xlu0 %2603, %v2556
    %v2605 = vpop.permute.xlu0 %2604
    %v2607 = vadd.f32 %v2605, %v2539
    %vm2608 = vcmp.gt.f32.partialorder %v2607, %v2601
    %v2609 = vsel %vm2608, %v2607, %v2601
    %v2610 = vsel %vm2608, 6, %v2602
    %2611 = vset.pattern.permute.xlu0 7
    %2612 = vperm.xlu0 %2611, %v2556
    %v2613 = vpop.permute.xlu0 %2612
    %v2615 = vadd.f32 %v2613, %v2551
    %vm2616 = vcmp.gt.f32.partialorder %v2615, %v2609
    %v2617 = vsel %vm2616, %v2615, %v2609
    %v2618 = vsel %vm2616, 7, %v2610
    %v2619 = vadd.f32 %v2617, %v1999
    %2621 = vset.pattern.permute.xlu0 0
    %2622 = vperm.xlu0 %2621, %v2619
    %v2623 = vpop.permute.xlu0 %2622
    %v2625 = vadd.f32 %v2623, %v2470
    %2626 = vset.pattern.permute.xlu0 1
    %2627 = vperm.xlu0 %2626, %v2619
    %v2628 = vpop.permute.xlu0 %2627
    %v2630 = vadd.f32 %v2628, %v2479
    %vm2631 = vcmp.gt.f32.partialorder %v2630, %v2625
    %v2632 = vsel %vm2631, %v2630, %v2625
    %v2633 = vsel %vm2631, 1, 0
    %2634 = vset.pattern.permute.xlu0 2
    %2635 = vperm.xlu0 %2634, %v2619
    %v2636 = vpop.permute.xlu0 %2635
    %v2638 = vadd.f32 %v2636, %v2491
    %vm2639 = vcmp.gt.f32.partialorder %v2638, %v2632
    %v2640 = vsel %vm2639, %v2638, %v2632
    %v2641 = vsel %vm2639, 2, %v2633
    %2642 = vset.pattern.permute.xlu0 3
    %2643 = vperm.xlu0 %2642, %v2619
    %v2644 = vpop.permute.xlu0 %2643
    %v2646 = vadd.f32 %v2644, %v2503
    %vm2647 = vcmp.gt.f32.partialorder %v2646, %v2640
    %v2648 = vsel %vm2647, %v2646, %v2640
    %v2649 = vsel %vm2647, 3, %v2641
    %2650 = vset.pattern.permute.xlu0 4
    %2651 = vperm.xlu0 %2650, %v2619
    %v2652 = vpop.permute.xlu0 %2651
    %v2654 = vadd.f32 %v2652, %v2515
    %vm2655 = vcmp.gt.f32.partialorder %v2654, %v2648
    %v2656 = vsel %vm2655, %v2654, %v2648
    %v2657 = vsel %vm2655, 4, %v2649
    %2658 = vset.pattern.permute.xlu0 5
    %2659 = vperm.xlu0 %2658, %v2619
    %v2660 = vpop.permute.xlu0 %2659
    %v2662 = vadd.f32 %v2660, %v2527
    %vm2663 = vcmp.gt.f32.partialorder %v2662, %v2656
    %v2664 = vsel %vm2663, %v2662, %v2656
    %v2665 = vsel %vm2663, 5, %v2657
    %2666 = vset.pattern.permute.xlu0 6
    %2667 = vperm.xlu0 %2666, %v2619
    %v2668 = vpop.permute.xlu0 %2667
    %v2670 = vadd.f32 %v2668, %v2539
    %vm2671 = vcmp.gt.f32.partialorder %v2670, %v2664
    %v2672 = vsel %vm2671, %v2670, %v2664
    %v2673 = vsel %vm2671, 6, %v2665
    %2674 = vset.pattern.permute.xlu0 7
    %2675 = vperm.xlu0 %2674, %v2619
    %v2676 = vpop.permute.xlu0 %2675
    %v2678 = vadd.f32 %v2676, %v2551
    %vm2679 = vcmp.gt.f32.partialorder %v2678, %v2672
    %v2680 = vsel %vm2679, %v2678, %v2672
    %v2681 = vsel %vm2679, 7, %v2673
    %v2682 = vadd.f32 %v2680, %v2086
    %2684 = vset.pattern.permute.xlu0 0
    %2685 = vperm.xlu0 %2684, %v2682
    %v2686 = vpop.permute.xlu0 %2685
    %v2688 = vadd.f32 %v2686, %v2470
    %2689 = vset.pattern.permute.xlu0 1
    %2690 = vperm.xlu0 %2689, %v2682
    %v2691 = vpop.permute.xlu0 %2690
    %v2693 = vadd.f32 %v2691, %v2479
    %vm2694 = vcmp.gt.f32.partialorder %v2693, %v2688
    %v2695 = vsel %vm2694, %v2693, %v2688
    %v2696 = vsel %vm2694, 1, 0
    %2697 = vset.pattern.permute.xlu0 2
    %2698 = vperm.xlu0 %2697, %v2682
    %v2699 = vpop.permute.xlu0 %2698
    %v2701 = vadd.f32 %v2699, %v2491
    %vm2702 = vcmp.gt.f32.partialorder %v2701, %v2695
    %v2703 = vsel %vm2702, %v2701, %v2695
    %v2704 = vsel %vm2702, 2, %v2696
    %2705 = vset.pattern.permute.xlu0 3
    %2706 = vperm.xlu0 %2705, %v2682
    %v2707 = vpop.permute.xlu0 %2706
    %v2709 = vadd.f32 %v2707, %v2503
    %vm2710 = vcmp.gt.f32.partialorder %v2709, %v2703
    %v2711 = vsel %vm2710, %v2709, %v2703
    %v2712 = vsel %vm2710, 3, %v2704
    %2713 = vset.pattern.permute.xlu0 4
    %2714 = vperm.xlu0 %2713, %v2682
    %v2715 = vpop.permute.xlu0 %2714
    %v2717 = vadd.f32 %v2715, %v2515
    %vm2718 = vcmp.gt.f32.partialorder %v2717, %v2711
    %v2719 = vsel %vm2718, %v2717, %v2711
    %v2720 = vsel %vm2718, 4, %v2712
    %2721 = vset.pattern.permute.xlu0 5
    %2722 = vperm.xlu0 %2721, %v2682
    %v2723 = vpop.permute.xlu0 %2722
    %v2725 = vadd.f32 %v2723, %v2527
    %vm2726 = vcmp.gt.f32.partialorder %v2725, %v2719
    %v2727 = vsel %vm2726, %v2725, %v2719
    %v2728 = vsel %vm2726, 5, %v2720
    %2729 = vset.pattern.permute.xlu0 6
    %2730 = vperm.xlu0 %2729, %v2682
    %v2731 = vpop.permute.xlu0 %2730
    %v2733 = vadd.f32 %v2731, %v2539
    %vm2734 = vcmp.gt.f32.partialorder %v2733, %v2727
    %v2735 = vsel %vm2734, %v2733, %v2727
    %v2736 = vsel %vm2734, 6, %v2728
    %2737 = vset.pattern.permute.xlu0 7
    %2738 = vperm.xlu0 %2737, %v2682
    %v2739 = vpop.permute.xlu0 %2738
    %v2741 = vadd.f32 %v2739, %v2551
    %vm2742 = vcmp.gt.f32.partialorder %v2741, %v2735
    %v2743 = vsel %vm2742, %v2741, %v2735
    %v2744 = vsel %vm2742, 7, %v2736
    %v2745 = vadd.f32 %v2743, %v1165
    %2747 = vset.pattern.permute.xlu0 0
    %2748 = vperm.xlu0 %2747, %v2745
    %v2749 = vpop.permute.xlu0 %2748
    %v2751 = vadd.f32 %v2749, %v2470
    %2752 = vset.pattern.permute.xlu0 1
    %2753 = vperm.xlu0 %2752, %v2745
    %v2754 = vpop.permute.xlu0 %2753
    %v2756 = vadd.f32 %v2754, %v2479
    %vm2757 = vcmp.gt.f32.partialorder %v2756, %v2751
    %v2758 = vsel %vm2757, %v2756, %v2751
    %v2759 = vsel %vm2757, 1, 0
    %2760 = vset.pattern.permute.xlu0 2
    %2761 = vperm.xlu0 %2760, %v2745
    %v2762 = vpop.permute.xlu0 %2761
    %v2764 = vadd.f32 %v2762, %v2491
    %vm2765 = vcmp.gt.f32.partialorder %v2764, %v2758
    %v2766 = vsel %vm2765, %v2764, %v2758
    %v2767 = vsel %vm2765, 2, %v2759
    %2768 = vset.pattern.permute.xlu0 3
    %2769 = vperm.xlu0 %2768, %v2745
    %v2770 = vpop.permute.xlu0 %2769
    %v2772 = vadd.f32 %v2770, %v2503
    %vm2773 = vcmp.gt.f32.partialorder %v2772, %v2766
    %v2774 = vsel %vm2773, %v2772, %v2766
    %v2775 = vsel %vm2773, 3, %v2767
    %2776 = vset.pattern.permute.xlu0 4
    %2777 = vperm.xlu0 %2776, %v2745
    %v2778 = vpop.permute.xlu0 %2777
    %v2780 = vadd.f32 %v2778, %v2515
    %vm2781 = vcmp.gt.f32.partialorder %v2780, %v2774
    %v2782 = vsel %vm2781, %v2780, %v2774
    %v2783 = vsel %vm2781, 4, %v2775
    %2784 = vset.pattern.permute.xlu0 5
    %2785 = vperm.xlu0 %2784, %v2745
    %v2786 = vpop.permute.xlu0 %2785
    %v2788 = vadd.f32 %v2786, %v2527
    %vm2789 = vcmp.gt.f32.partialorder %v2788, %v2782
    %v2790 = vsel %vm2789, %v2788, %v2782
    %v2791 = vsel %vm2789, 5, %v2783
    %2792 = vset.pattern.permute.xlu0 6
    %2793 = vperm.xlu0 %2792, %v2745
    %v2794 = vpop.permute.xlu0 %2793
    %v2796 = vadd.f32 %v2794, %v2539
    %vm2797 = vcmp.gt.f32.partialorder %v2796, %v2790
    %v2798 = vsel %vm2797, %v2796, %v2790
    %v2799 = vsel %vm2797, 6, %v2791
    %2800 = vset.pattern.permute.xlu0 7
    %2801 = vperm.xlu0 %2800, %v2745
    %v2802 = vpop.permute.xlu0 %2801
    %v2804 = vadd.f32 %v2802, %v2551
    %vm2805 = vcmp.gt.f32.partialorder %v2804, %v2798
    %v2806 = vsel %vm2805, %v2804, %v2798
    %v2807 = vsel %vm2805, 7, %v2799
    %v2808 = vadd.f32 %v2806, %v2259
    %2810 = vset.pattern.permute.xlu0 0
    %2811 = vperm.xlu0 %2810, %v2808
    %v2812 = vpop.permute.xlu0 %2811
    %v2814 = vadd.f32 %v2812, %v2470
    %2815 = vset.pattern.permute.xlu0 1
    %2816 = vperm.xlu0 %2815, %v2808
    %v2817 = vpop.permute.xlu0 %2816
    %v2819 = vadd.f32 %v2817, %v2479
    %vm2820 = vcmp.gt.f32.partialorder %v2819, %v2814
    %v2821 = vsel %vm2820, %v2819, %v2814
    %v2822 = vsel %vm2820, 1, 0
    %2823 = vset.pattern.permute.xlu0 2
    %2824 = vperm.xlu0 %2823, %v2808
    %v2825 = vpop.permute.xlu0 %2824
    %v2827 = vadd.f32 %v2825, %v2491
    %vm2828 = vcmp.gt.f32.partialorder %v2827, %v2821
    %v2829 = vsel %vm2828, %v2827, %v2821
    %v2830 = vsel %vm2828, 2, %v2822
    %2831 = vset.pattern.permute.xlu0 3
    %2832 = vperm.xlu0 %2831, %v2808
    %v2833 = vpop.permute.xlu0 %2832
    %v2835 = vadd.f32 %v2833, %v2503
    %vm2836 = vcmp.gt.f32.partialorder %v2835, %v2829
    %v2837 = vsel %vm2836, %v2835, %v2829
    %v2838 = vsel %vm2836, 3, %v2830
    %2839 = vset.pattern.permute.xlu0 4
    %2840 = vperm.xlu0 %2839, %v2808
    %v2841 = vpop.permute.xlu0 %2840
    %v2843 = vadd.f32 %v2841, %v2515
    %vm2844 = vcmp.gt.f32.partialorder %v2843, %v2837
    %v2845 = vsel %vm2844, %v2843, %v2837
    %v2846 = vsel %vm2844, 4, %v2838
    %2847 = vset.pattern.permute.xlu0 5
    %2848 = vperm.xlu0 %2847, %v2808
    %v2849 = vpop.permute.xlu0 %2848
    %v2851 = vadd.f32 %v2849, %v2527
    %vm2852 = vcmp.gt.f32.partialorder %v2851, %v2845
    %v2853 = vsel %vm2852, %v2851, %v2845
    %v2854 = vsel %vm2852, 5, %v2846
    %2855 = vset.pattern.permute.xlu0 6
    %2856 = vperm.xlu0 %2855, %v2808
    %v2857 = vpop.permute.xlu0 %2856
    %v2859 = vadd.f32 %v2857, %v2539
    %vm2860 = vcmp.gt.f32.partialorder %v2859, %v2853
    %v2861 = vsel %vm2860, %v2859, %v2853
    %v2862 = vsel %vm2860, 6, %v2854
    %2863 = vset.pattern.permute.xlu0 7
    %2864 = vperm.xlu0 %2863, %v2808
    %v2865 = vpop.permute.xlu0 %2864
    %v2867 = vadd.f32 %v2865, %v2551
    %vm2868 = vcmp.gt.f32.partialorder %v2867, %v2861
    %v2869 = vsel %vm2868, %v2867, %v2861
    %v2870 = vsel %vm2868, 7, %v2862
    %v2871 = vadd.f32 %v2869, %v2346
    %2873 = vset.pattern.permute.xlu0 0
    %2874 = vperm.xlu0 %2873, %v2871
    %v2875 = vpop.permute.xlu0 %2874
    %v2877 = vadd.f32 %v2875, %v2470
    %2878 = vset.pattern.permute.xlu0 1
    %2879 = vperm.xlu0 %2878, %v2871
    %v2880 = vpop.permute.xlu0 %2879
    %v2882 = vadd.f32 %v2880, %v2479
    %vm2883 = vcmp.gt.f32.partialorder %v2882, %v2877
    %v2884 = vsel %vm2883, %v2882, %v2877
    %v2885 = vsel %vm2883, 1, 0
    %2886 = vset.pattern.permute.xlu0 2
    %2887 = vperm.xlu0 %2886, %v2871
    %v2888 = vpop.permute.xlu0 %2887
    %v2890 = vadd.f32 %v2888, %v2491
    %vm2891 = vcmp.gt.f32.partialorder %v2890, %v2884
    %v2892 = vsel %vm2891, %v2890, %v2884
    %v2893 = vsel %vm2891, 2, %v2885
    %2894 = vset.pattern.permute.xlu0 3
    %2895 = vperm.xlu0 %2894, %v2871
    %v2896 = vpop.permute.xlu0 %2895
    %v2898 = vadd.f32 %v2896, %v2503
    %vm2899 = vcmp.gt.f32.partialorder %v2898, %v2892
    %v2900 = vsel %vm2899, %v2898, %v2892
    %v2901 = vsel %vm2899, 3, %v2893
    %2902 = vset.pattern.permute.xlu0 4
    %2903 = vperm.xlu0 %2902, %v2871
    %v2904 = vpop.permute.xlu0 %2903
    %v2906 = vadd.f32 %v2904, %v2515
    %vm2907 = vcmp.gt.f32.partialorder %v2906, %v2900
    %v2908 = vsel %vm2907, %v2906, %v2900
    %v2909 = vsel %vm2907, 4, %v2901
    %2910 = vset.pattern.permute.xlu0 5
    %2911 = vperm.xlu0 %2910, %v2871
    %v2912 = vpop.permute.xlu0 %2911
    %v2914 = vadd.f32 %v2912, %v2527
    %vm2915 = vcmp.gt.f32.partialorder %v2914, %v2908
    %v2916 = vsel %vm2915, %v2914, %v2908
    %v2917 = vsel %vm2915, 5, %v2909
    %2918 = vset.pattern.permute.xlu0 6
    %2919 = vperm.xlu0 %2918, %v2871
    %v2920 = vpop.permute.xlu0 %2919
    %v2922 = vadd.f32 %v2920, %v2539
    %vm2923 = vcmp.gt.f32.partialorder %v2922, %v2916
    %v2924 = vsel %vm2923, %v2922, %v2916
    %v2925 = vsel %vm2923, 6, %v2917
    %2926 = vset.pattern.permute.xlu0 7
    %2927 = vperm.xlu0 %2926, %v2871
    %v2928 = vpop.permute.xlu0 %2927
    %v2930 = vadd.f32 %v2928, %v2551
    %vm2931 = vcmp.gt.f32.partialorder %v2930, %v2924
    %v2932 = vsel %vm2931, %v2930, %v2924
    %v2933 = vsel %vm2931, 7, %v2925
    %v2934 = vadd.f32 %v2932, %v2433
    %v2935 = vadd.f32 %v2934, %v1818
    %2937 = vrot.lane.b32.xlu0 %v2935, 1
    %v2938 = vpop.permute.xlu0 %2937
    %vm2940 = vcmp.gt.f32.partialorder %v2935, %v2938
    %v2941 = vsel %vm2940, %v2935, %v2938
    %v2942 = vsel %vm2940, 1, 0
    %2944 = vrot.lane.b32.xlu0 %v2941, 1
    %v2945 = vpop.permute.xlu0 %2944
    %vm2947 = vcmp.gt.f32.partialorder %v2935, %v2945
    %v2948 = vsel %vm2947, %v2935, %v2945
    %2949 = vrot.lane.b32.xlu0 %v2942, 1
    %v2950 = vpop.permute.xlu0 %2949
    %v2951 = vsel %vm2947, 2, %v2950
    %2953 = vrot.lane.b32.xlu0 %v2948, 1
    %v2954 = vpop.permute.xlu0 %2953
    %vm2956 = vcmp.gt.f32.partialorder %v2935, %v2954
    %v2957 = vsel %vm2956, %v2935, %v2954
    %2958 = vrot.lane.b32.xlu0 %v2951, 1
    %v2959 = vpop.permute.xlu0 %2958
    %v2960 = vsel %vm2956, 3, %v2959
    %2962 = vrot.lane.b32.xlu0 %v2957, 1
    %v2963 = vpop.permute.xlu0 %2962
    %vm2965 = vcmp.gt.f32.partialorder %v2935, %v2963
    %v2966 = vsel %vm2965, %v2935, %v2963
    %2967 = vrot.lane.b32.xlu0 %v2960, 1
    %v2968 = vpop.permute.xlu0 %2967
    %v2969 = vsel %vm2965, 4, %v2968
    %2971 = vrot.lane.b32.xlu0 %v2966, 1
    %v2972 = vpop.permute.xlu0 %2971
    %vm2974 = vcmp.gt.f32.partialorder %v2935, %v2972
    %v2975 = vsel %vm2974, %v2935, %v2972
    %2976 = vrot.lane.b32.xlu0 %v2969, 1
    %v2977 = vpop.permute.xlu0 %2976
    %v2978 = vsel %vm2974, 5, %v2977
    %2980 = vrot.lane.b32.xlu0 %v2975, 1
    %v2981 = vpop.permute.xlu0 %2980
    %vm2983 = vcmp.gt.f32.partialorder %v2935, %v2981
    %v2984 = vsel %vm2983, %v2935, %v2981
    %2985 = vrot.lane.b32.xlu0 %v2978, 1
    %v2986 = vpop.permute.xlu0 %2985
    %v2987 = vsel %vm2983, 6, %v2986
    %2989 = vrot.lane.b32.xlu0 %v2984, 1
    %v2990 = vpop.permute.xlu0 %2989
    %vm2992 = vcmp.gt.f32.partialorder %v2935, %v2990
    %2993 = vrot.lane.b32.xlu0 %v2987, 1
    %v2994 = vpop.permute.xlu0 %2993
    %v2995 = vsel %vm2992, 7, %v2994
    %v2996 = vlaneseq
    %v2997 = vand.u32 %v2996, 127
    %2998 = vset.pattern.permute.xlu0 7
    %2999 = vperm.xlu0 %2998, %v2995
    %v3000 = vpop.permute.xlu0 %2999
    %vm3001 = vcmp.eq.s32.totalorder %v2997, %v3000
    %v3002 = vsel %vm3001, %v2933, 0
    %v3003 = vsel %vm1180, %v3002, 0
    %v3004 = vand.u32 %v3003, 65535
    %v3005 = vshrl.u32 %v3003, 16
    %v3006 = vcvt.s32.f32 %v3004
    %v3007 = vcvt.s32.f32 %v3005
    %3008 = vadd.xlane.f32.xlu0 %v3006
    %v3009 = vpop.xlane.xlu0 %3008
    %3010 = vadd.xlane.f32.xlu0 %v3007
    %v3011 = vpop.xlane.xlu0 %3010
    %v3012 = vcvt.f32.s32 %v3009
    %v3013 = vcvt.f32.s32 %v3011
    %v3014 = vshll.u32 %v3013, 16
    %v3015 = vadd.s32 %v3014, %v3012
    %vm3016 = vcmp.eq.s32.totalorder %v2997, %v3015
    %v3017 = vsel %vm3016, %v2870, 0
    %v3018 = vsel %vm1180, %v3017, 0
    %v3019 = vand.u32 %v3018, 65535
    %v3020 = vshrl.u32 %v3018, 16
    %v3021 = vcvt.s32.f32 %v3019
    %v3022 = vcvt.s32.f32 %v3020
    %3023 = vadd.xlane.f32.xlu0 %v3021
    %v3024 = vpop.xlane.xlu0 %3023
    %3025 = vadd.xlane.f32.xlu0 %v3022
    %v3026 = vpop.xlane.xlu0 %3025
    %v3027 = vcvt.f32.s32 %v3024
    %v3028 = vcvt.f32.s32 %v3026
    %v3029 = vshll.u32 %v3028, 16
    %v3030 = vadd.s32 %v3029, %v3027
    %vm3031 = vcmp.eq.s32.totalorder %v2997, %v3030
    %v3032 = vsel %vm3031, %v2807, 0
    %v3033 = vsel %vm1180, %v3032, 0
    %v3034 = vand.u32 %v3033, 65535
    %v3035 = vshrl.u32 %v3033, 16
    %v3036 = vcvt.s32.f32 %v3034
    %v3037 = vcvt.s32.f32 %v3035
    %3038 = vadd.xlane.f32.xlu0 %v3036
    %v3039 = vpop.xlane.xlu0 %3038
    %3040 = vadd.xlane.f32.xlu0 %v3037
    %v3041 = vpop.xlane.xlu0 %3040
    %v3042 = vcvt.f32.s32 %v3039
    %v3043 = vcvt.f32.s32 %v3041
    %v3044 = vshll.u32 %v3043, 16
    %v3045 = vadd.s32 %v3044, %v3042
    %vm3046 = vcmp.eq.s32.totalorder %v2997, %v3045
    %v3047 = vsel %vm3046, %v2744, 0
    %v3048 = vsel %vm1180, %v3047, 0
    %v3049 = vand.u32 %v3048, 65535
    %v3050 = vshrl.u32 %v3048, 16
    %v3051 = vcvt.s32.f32 %v3049
    %v3052 = vcvt.s32.f32 %v3050
    %3053 = vadd.xlane.f32.xlu0 %v3051
    %v3054 = vpop.xlane.xlu0 %3053
    %3055 = vadd.xlane.f32.xlu0 %v3052
    %v3056 = vpop.xlane.xlu0 %3055
    %v3057 = vcvt.f32.s32 %v3054
    %v3058 = vcvt.f32.s32 %v3056
    %v3059 = vshll.u32 %v3058, 16
    %v3060 = vadd.s32 %v3059, %v3057
    %vm3061 = vcmp.eq.s32.totalorder %v2997, %v3060
    %v3062 = vsel %vm3061, %v2681, 0
    %v3063 = vsel %vm1180, %v3062, 0
    %v3064 = vand.u32 %v3063, 65535
    %v3065 = vshrl.u32 %v3063, 16
    %v3066 = vcvt.s32.f32 %v3064
    %v3067 = vcvt.s32.f32 %v3065
    %3068 = vadd.xlane.f32.xlu0 %v3066
    %v3069 = vpop.xlane.xlu0 %3068
    %3070 = vadd.xlane.f32.xlu0 %v3067
    %v3071 = vpop.xlane.xlu0 %3070
    %v3072 = vcvt.f32.s32 %v3069
    %v3073 = vcvt.f32.s32 %v3071
    %v3074 = vshll.u32 %v3073, 16
    %v3075 = vadd.s32 %v3074, %v3072
    %vm3076 = vcmp.eq.s32.totalorder %v2997, %v3075
    %v3077 = vsel %vm3076, %v2618, 0
    %v3078 = vsel %vm1180, %v3077, 0
    %v3079 = vand.u32 %v3078, 65535
    %v3080 = vshrl.u32 %v3078, 16
    %v3081 = vcvt.s32.f32 %v3079
    %v3082 = vcvt.s32.f32 %v3080
    %3083 = vadd.xlane.f32.xlu0 %v3081
    %v3084 = vpop.xlane.xlu0 %3083
    %3085 = vadd.xlane.f32.xlu0 %v3082
    %v3086 = vpop.xlane.xlu0 %3085
    %v3087 = vcvt.f32.s32 %v3084
    %v3088 = vcvt.f32.s32 %v3086
    %v3089 = vshll.u32 %v3088, 16
    %v3090 = vadd.s32 %v3089, %v3087
    %vm3091 = vcmp.eq.s32.totalorder %v2997, %v3090
    %v3092 = vsel %vm3091, %v2555, 0
    %v3093 = vsel %vm1180, %v3092, 0
    %v3094 = vand.u32 %v3093, 65535
    %v3095 = vshrl.u32 %v3093, 16
    %v3096 = vcvt.s32.f32 %v3094
    %v3097 = vcvt.s32.f32 %v3095
    %3098 = vadd.xlane.f32.xlu0 %v3096
    %v3099 = vpop.xlane.xlu0 %3098
    %3100 = vadd.xlane.f32.xlu0 %v3097
    %v3101 = vpop.xlane.xlu0 %3100
    %v3102 = vcvt.f32.s32 %v3099
    %v3103 = vcvt.f32.s32 %v3101
    %v3104 = vshll.u32 %v3103, 16
    %v3105 = vadd.s32 %v3104, %v3102
    %vm3106 = vcmask 7168
    %v3107 = vsel %vm3106, %v3105, %v3090
    %vm3108 = vcmask 15360
    %v3109 = vsel %vm3108, %v3107, %v3075
    %vm3110 = vcmask 23552
    %v3111 = vsel %vm3110, %v3109, %v3060
    %vm3112 = vcmask 31744
    %v3113 = vsel %vm3112, %v3111, %v3045
    %vm3114 = vcmask 39936
    %v3115 = vsel %vm3114, %v3113, %v3030
    %vm3116 = vcmask 48128
    %v3117 = vsel %vm3116, %v3115, %v3015
    %vm3118 = vcmask 56320
    %v3119 = vsel %vm3118, %v3117, %v2995
    %3120 = vst.msk [vmem:[%s14] sm:$0x3] %vm1180, %v3119
    // Predicated region
    $region54: #{lstm_crf_forward.1} parent=1 // pred_check
      _
    $region55: #{lstm_crf_forward.1} parent=1 // pred_check_branch
      %3122 = sbr.rel (0) target = $region57
    $region56: #{lstm_crf_forward.1} parent=1 // pred_region
      %s3124 = ssub.s32 16, 16
      %3125 = vsyncadd [#allocation3], %s3124
      %s3127 = sshll.u32 [#allocation2], 4
      %s3128 = int_to_ptr.vmem [resolvable:$true] %s3127
      %3130 = dma.vmem_to_hbm [thread:$0]  %s3128, 16, %s13, [#allocation3]
    $region57: #{lstm_crf_forward.1} parent=1 // pred_fallthru
      _
    // Predicated region
    $region58: #{lstm_crf_forward.1} parent=1 // pred_check
      _
    $region59: #{lstm_crf_forward.1} parent=1 // pred_check_branch
      %3132 = sbr.rel (0) target = $region61
    $region60: #{lstm_crf_forward.1} parent=1 // pred_region
      _
    $region61: #{lstm_crf_forward.1} parent=1 // pred_fallthru
      _
    // Predicated region
    $region62: #{lstm_crf_forward.1} parent=1 // pred_check
      _
    $region63: #{lstm_crf_forward.1} parent=1 // pred_check_branch
      %3134 = sbr.rel (0) target = $region65
    $region64: #{lstm_crf_forward.1} parent=1 // pred_region
      %3135 = dma.done [#allocation3], 16
    $region65: #{lstm_crf_forward.1} parent=1 // pred_fallthru
      _
    // Predicated region
    $region66: #{lstm_crf_forward.1} parent=1 // pred_check
      _
    $region67: #{lstm_crf_forward.1} parent=1 // pred_check_branch
      %3137 = sbr.rel (0) target = $region69
    $region68: #{lstm_crf_forward.1} parent=1 // pred_region
      _
    $region69: #{lstm_crf_forward.1} parent=1 // pred_fallthru
      _
    %3138 = vsyncpa [#allocation3], 1

</llo_original>
